<compile_context>
chip_gen: v7x
topology: tpu7x:2x2x1
jax: 0.10.0
libtpu: 0.0.40
codegen_flags: <defaults>
</compile_context>

<pallas_src>
import functools
import math

import jax
import jax.numpy as jnp
from jax.experimental import pallas as pl
from jax.experimental.pallas import tpu as pltpu  # noqa: F401  (TPU backend)

D_MODEL = 128
D_FF = 512
N_HEADS = 4
HEAD_DIM = D_MODEL // N_HEADS
N_LAYERS = 2
EPS = 1e-5

# Per-layer parameter order as seen by the kernel (QKV already fused).
_PARAM_ORDER_K = ["wqkv", "bqkv", "wo", "bo",
                  "g1", "be1", "w1", "b1", "w2", "b2", "g2", "be2"]
_N_PARAMS_K = len(_PARAM_ORDER_K)


def _layer_norm(z, g, b):
    m = jnp.mean(z, axis=-1, keepdims=True)
    v = jnp.mean((z - m) ** 2, axis=-1, keepdims=True)
    return (z - m) * jax.lax.rsqrt(v + EPS) * g + b


def _softmax_rows(s):
    """f32 row softmax; denominator via approx reciprocal (EUP slot)."""
    m = jnp.max(s, axis=-1, keepdims=True)
    p = jnp.exp(s - m)
    return p * pl.reciprocal(jnp.sum(p, axis=-1, keepdims=True), approx=True)


def _bf16(x):
    return x.astype(jnp.bfloat16)


# ----------------------------- fused Pallas kernel ---------------------------


def _fused_encoder_kernel(B, L, x_ref, *refs):
    """Whole Encoder forward in a single invocation (grid=()).

    refs layout: [N_LAYERS * 12 layer-param refs, gamma, beta, out, attn_out].
    Activations stay in VMEM for the whole forward; matmul operands are bf16
    (f32 accumulation); all vector math (softmax / LayerNorm) stays in f32.
    """
    n_layer_refs = N_LAYERS * _N_PARAMS_K
    gamma_ref, beta_ref, out_ref, attn_ref = refs[n_layer_refs:]

    scale = 1.0 / math.sqrt(HEAD_DIM)
    x = x_ref[...]                                   # (B*L, D) f32 slab
    attn_slabs = []

    for li in range(N_LAYERS):                       # static layer loop
        p = dict(zip(_PARAM_ORDER_K,
                     refs[li * _N_PARAMS_K:(li + 1) * _N_PARAMS_K]))

        # Fused QKV on the flattened (B*L, D) slab: one (16,128)@(128,384)
        # matmul per layer instead of three (16,128)@(128,128) ones.
        xb = _bf16(x)
        qkv = jnp.dot(xb, p["wqkv"][...],
                      preferred_element_type=jnp.float32) + p["bqkv"][...]
        q = qkv[:, 0 * D_MODEL:1 * D_MODEL]
        k = qkv[:, 1 * D_MODEL:2 * D_MODEL]
        v = qkv[:, 2 * D_MODEL:3 * D_MODEL]

        new_x_rows = []
        layer_attn = []
        for b in range(B):                           # static, B = 2
            rows = slice(b * L, (b + 1) * L)
            acc = jnp.zeros((L, D_MODEL), jnp.float32)
            for h in range(N_HEADS):                 # static, 4 heads
                cols = slice(h * HEAD_DIM, (h + 1) * HEAD_DIM)
                qh = _bf16(q[rows, cols])
                kh = _bf16(k[rows, cols])
                vh = _bf16(v[rows, cols])
                # Scores: contract head_dim of K via dimension_numbers
                # (no explicit kh.T / XLU transpose).
                s = jax.lax.dot_general(
                    qh, kh, (((1,), (1,)), ((), ())),
                    preferred_element_type=jnp.float32) * scale       # (L, L)
                a = _softmax_rows(s)                                   # f32
                layer_attn.append(a)
                o_h = jnp.dot(_bf16(a), vh,
                              preferred_element_type=jnp.float32)      # (L, hd)
                # Fold the head-concat into the output projection:
                # accumulate o_h @ wo[h] instead of concatenating heads.
                acc = acc + jnp.dot(_bf16(o_h), p["wo"][h],
                                    preferred_element_type=jnp.float32)
            new_x_rows.append(acc)

        new_x = jnp.concatenate(new_x_rows, axis=0) + p["bo"][...]     # (B*L, D)
        # Lane-packed attention maps for this layer: (L, B*H*L).
        attn_slabs.append(jnp.concatenate(layer_attn, axis=-1))

        # Residual + LN1, FFN (Conv1d k=1 == dense) on the slab, residual + LN2.
        x1 = _layer_norm(x + new_x, p["g1"][...], p["be1"][...])
        y = jnp.dot(_bf16(x1), p["w1"][...],
                    preferred_element_type=jnp.float32) + p["b1"][...]
        y = jnp.maximum(y, 0.0)
        y = jnp.dot(_bf16(y), p["w2"][...],
                    preferred_element_type=jnp.float32) + p["b2"][...]
        x = _layer_norm(x1 + y, p["g2"][...], p["be2"][...])

    # torch.cat(x, dim=1): (B, L, D) unbound over batch, concatenated along
    # dim 1 -> (L, B*D).  On the (B*L, D) slab this is a pure lane concat of
    # the per-batch row blocks, done entirely in VMEM.
    out_cat = jnp.concatenate([x[b * L:(b + 1) * L, :] for b in range(B)],
                              axis=-1)                                  # (L, B*D)
    out_ref[...] = _layer_norm(out_cat, gamma_ref[...], beta_ref[...])

    # Single lane-dense (L, N_LAYERS*B*H*L) = (8, 128) store for all attn maps.
    attn_ref[...] = jnp.concatenate(attn_slabs, axis=-1)


# --------------------------------- wrapper -----------------------------------


def encoder_forward(x, layer_params, norm_params):
    """Matches Encoder.forward: loop layers, collect attns, cat, final norm."""
    B, L, D = x.shape
    assert D == D_MODEL and len(layer_params) == N_LAYERS

    args = [x.reshape(B * L, D)]
    for p in layer_params:
        # Fuse Q/K/V weights / biases along lanes so the kernel does one
        # projection matmul per layer.
        wqkv = jnp.concatenate([p["wq"], p["wk"], p["wv"]], axis=1)   # (D, 3D) bf16
        bqkv = jnp.concatenate([p["bq"], p["bk"], p["bv"]], axis=1)   # (1, 3D) f32
        wo = p["wo"].reshape(N_HEADS, HEAD_DIM, D)   # pre-split per head
        per_layer = {
            "wqkv": wqkv, "bqkv": bqkv, "wo": wo, "bo": p["bo"],
            "g1": p["g1"], "be1": p["be1"], "w1": p["w1"], "b1": p["b1"],
            "w2": p["w2"], "b2": p["b2"], "g2": p["g2"], "be2": p["be2"],
        }
        for name in _PARAM_ORDER_K:
            args.append(per_layer[name])
    args.append(norm_params["gamma"].reshape(1, B * D).astype(jnp.float32))
    args.append(norm_params["beta"].reshape(1, B * D).astype(jnp.float32))

    out_shape = (
        jax.ShapeDtypeStruct((L, B * D), jnp.float32),
        jax.ShapeDtypeStruct((L, N_LAYERS * B * N_HEADS * L), jnp.float32),
    )
    out, attn_flat = pl.pallas_call(
        functools.partial(_fused_encoder_kernel, B, L),
        out_shape=out_shape,
    )(*args)

    # Un-pack the lane-dense attention slab back to a list of (B, H, L, L).
    attn5 = attn_flat.reshape(L, N_LAYERS, B, N_HEADS, L).transpose(1, 2, 3, 0, 4)
    attns = [attn5[i] for i in range(N_LAYERS)]
    return out, attns


# -------------------------- parameter construction ---------------------------


def init_layer_params(key, D=D_MODEL, dff=D_FF):
    ks = jax.random.split(key, 10)

    def w(k, shape, scale=0.05):
        return (scale * jax.random.normal(k, shape)).astype(jnp.float32)

    # Matmul weights are stored in bf16 (halves weight DMA bytes, MXU-native
    # on v6e/v7x); biases and LayerNorm params stay f32.
    return {
        "wq": w(ks[0], (D, D)).astype(jnp.bfloat16), "bq": w(ks[1], (1, D), 0.01),
        "wk": w(ks[2], (D, D)).astype(jnp.bfloat16), "bk": w(ks[3], (1, D), 0.01),
        "wv": w(ks[4], (D, D)).astype(jnp.bfloat16), "bv": w(ks[5], (1, D), 0.01),
        "wo": w(ks[6], (D, D)).astype(jnp.bfloat16), "bo": jnp.zeros((1, D), jnp.float32),
        "g1": jnp.ones((1, D), jnp.float32), "be1": jnp.zeros((1, D), jnp.float32),
        "w1": w(ks[7], (D, dff)).astype(jnp.bfloat16), "b1": w(ks[8], (1, dff), 0.01),
        "w2": w(ks[9], (dff, D)).astype(jnp.bfloat16), "b2": jnp.zeros((1, D), jnp.float32),
        "g2": jnp.ones((1, D), jnp.float32), "be2": jnp.zeros((1, D), jnp.float32),
    }


# ------------------------------ pure-JAX reference ----------------------------


def _ref_layer(x, p):
    B, L, D = x.shape
    f = lambda a: a.astype(jnp.float32)
    q = x @ f(p["wq"]) + p["bq"][0]
    k = x @ f(p["wk"]) + p["bk"][0]
    v = x @ f(p["wv"]) + p["bv"][0]
    qh = q.reshape(B, L, N_HEADS, HEAD_DIM)
    kh = k.reshape(B, L, N_HEADS, HEAD_DIM)
    vh = v.reshape(B, L, N_HEADS, HEAD_DIM)
    s = jnp.einsum("blhe,bshe->bhls", qh, kh) / math.sqrt(HEAD_DIM)
    a = jax.nn.softmax(s, axis=-1)
    o = jnp.einsum("bhls,bshe->blhe", a, vh).reshape(B, L, D)
    new_x = o @ f(p["wo"]) + p["bo"][0]
    x1 = _layer_norm(x + new_x, p["g1"][0], p["be1"][0])
    y = jnp.maximum(x1 @ f(p["w1"]) + p["b1"][0], 0.0)
    y = y @ f(p["w2"]) + p["b2"][0]
    return _layer_norm(x1 + y, p["g2"][0], p["be2"][0]), a


def _ref_encoder(x, layer_params, norm_params):
    attns = []
    for p in layer_params:
        x, a = _ref_layer(x, p)
        attns.append(a)
    B, L, D = x.shape
    x_cat = jnp.transpose(x, (1, 0, 2)).reshape(L, B * D)
    return _layer_norm(x_cat, norm_params["gamma"], norm_params["beta"]), attns


# ----------------------------------- main -------------------------------------

if __name__ == "__main__":
    B, L = 2, 8
    key = jax.random.PRNGKey(0)
    k_x, k_l1, k_l2 = jax.random.split(key, 3)

    x = jax.random.normal(k_x, (B, L, D_MODEL), jnp.float32)
    layer_params = [init_layer_params(k_l1), init_layer_params(k_l2)]
    norm_params = {"gamma": jnp.ones((B * D_MODEL,), jnp.float32),
                   "beta": jnp.zeros((B * D_MODEL,), jnp.float32)}

    # TODO(synk): dropout / attn_mask / tau / delta are identity or None in the
    # evaluated Encoder configuration and are not modeled.
    out, attns = encoder_forward(x, layer_params, norm_params)
    out = jax.block_until_ready(out)
    attns = [jax.block_until_ready(a) for a in attns]

    # Fidelity check against a pure-JAX f32 reference (same bf16 weights;
    # tolerance covers bf16 matmul operands + approx-reciprocal softmax).
    ref_out, ref_attns = _ref_encoder(x, layer_params, norm_params)
    assert out.shape == (L, B * D_MODEL)
    assert all(a.shape == (B, N_HEADS, L, L) for a in attns)
    assert jnp.allclose(out, ref_out, rtol=2e-2, atol=2e-2)
    assert all(jnp.allclose(a, r, rtol=2e-2, atol=2e-2)
               for a, r in zip(attns, ref_attns))

    print("KERNEL_OK")
</pallas_src>

<mosaic_0001>
module attributes {stable_mosaic.version = 11 : i64} {
  func.func @_fused_encoder_kernel(%arg0: memref<16x128xf32, #tpu.memory_space<vmem>>, %arg1: memref<128x384xbf16, #tpu.memory_space<vmem>>, %arg2: memref<1x384xf32, #tpu.memory_space<vmem>>, %arg3: memref<4x32x128xbf16, #tpu.memory_space<vmem>>, %arg4: memref<1x128xf32, #tpu.memory_space<vmem>>, %arg5: memref<1x128xf32, #tpu.memory_space<vmem>>, %arg6: memref<1x128xf32, #tpu.memory_space<vmem>>, %arg7: memref<128x512xbf16, #tpu.memory_space<vmem>>, %arg8: memref<1x512xf32, #tpu.memory_space<vmem>>, %arg9: memref<512x128xbf16, #tpu.memory_space<vmem>>, %arg10: memref<1x128xf32, #tpu.memory_space<vmem>>, %arg11: memref<1x128xf32, #tpu.memory_space<vmem>>, %arg12: memref<1x128xf32, #tpu.memory_space<vmem>>, %arg13: memref<128x384xbf16, #tpu.memory_space<vmem>>, %arg14: memref<1x384xf32, #tpu.memory_space<vmem>>, %arg15: memref<4x32x128xbf16, #tpu.memory_space<vmem>>, %arg16: memref<1x128xf32, #tpu.memory_space<vmem>>, %arg17: memref<1x128xf32, #tpu.memory_space<vmem>>, %arg18: memref<1x128xf32, #tpu.memory_space<vmem>>, %arg19: memref<128x512xbf16, #tpu.memory_space<vmem>>, %arg20: memref<1x512xf32, #tpu.memory_space<vmem>>, %arg21: memref<512x128xbf16, #tpu.memory_space<vmem>>, %arg22: memref<1x128xf32, #tpu.memory_space<vmem>>, %arg23: memref<1x128xf32, #tpu.memory_space<vmem>>, %arg24: memref<1x128xf32, #tpu.memory_space<vmem>>, %arg25: memref<1x256xf32, #tpu.memory_space<vmem>>, %arg26: memref<1x256xf32, #tpu.memory_space<vmem>>, %arg27: memref<8x256xf32, #tpu.memory_space<vmem>>, %arg28: memref<8x128xf32, #tpu.memory_space<vmem>>) attributes {dimension_semantics = [], scalar_prefetch = 0 : i64, scratch_operands = 0 : i64, tpu.core_type = #tpu.core_type<tc>} {
    %c0 = arith.constant 0 : index
    %c0_0 = arith.constant 0 : index
    %0 = vector.load %arg0[%c0, %c0_0] : memref<16x128xf32, #tpu.memory_space<vmem>>, vector<16x128xf32>
    %1 = arith.truncf %0 : vector<16x128xf32> to vector<16x128xbf16>
    %c0_1 = arith.constant 0 : index
    %c0_2 = arith.constant 0 : index
    %2 = vector.load %arg1[%c0_1, %c0_2] : memref<128x384xbf16, #tpu.memory_space<vmem>>, vector<128x384xbf16>
    %cst = arith.constant dense<0.000000e+00> : vector<16x384xf32>
    %3 = tpu.matmul %1, %2, %cst {dimension_numbers = #tpu.dot_dimension_numbers<[1], [0], [0], [1], [0, 0, 1, 1], [], []>} : vector<16x128xbf16>, vector<128x384xbf16>, vector<16x384xf32> -> vector<16x384xf32>
    %c0_3 = arith.constant 0 : index
    %c0_4 = arith.constant 0 : index
    %4 = vector.load %arg2[%c0_3, %c0_4] : memref<1x384xf32, #tpu.memory_space<vmem>>, vector<1x384xf32>
    %5 = vector.broadcast %4 : vector<1x384xf32> to vector<16x384xf32>
    %6 = arith.addf %3, %5 : vector<16x384xf32>
    %7 = vector.extract_strided_slice %6 {offsets = [0, 0], sizes = [16, 128], strides = [1, 1]} : vector<16x384xf32> to vector<16x128xf32>
    %8 = vector.extract_strided_slice %6 {offsets = [0, 128], sizes = [16, 128], strides = [1, 1]} : vector<16x384xf32> to vector<16x128xf32>
    %9 = vector.extract_strided_slice %6 {offsets = [0, 256], sizes = [16, 128], strides = [1, 1]} : vector<16x384xf32> to vector<16x128xf32>
    %cst_5 = arith.constant 0.000000e+00 : f32
    %10 = vector.broadcast %cst_5 : f32 to vector<8x128xf32>
    %11 = vector.extract_strided_slice %7 {offsets = [0, 0], sizes = [8, 32], strides = [1, 1]} : vector<16x128xf32> to vector<8x32xf32>
    %12 = arith.truncf %11 : vector<8x32xf32> to vector<8x32xbf16>
    %13 = vector.extract_strided_slice %8 {offsets = [0, 0], sizes = [8, 32], strides = [1, 1]} : vector<16x128xf32> to vector<8x32xf32>
    %14 = arith.truncf %13 : vector<8x32xf32> to vector<8x32xbf16>
    %15 = vector.extract_strided_slice %9 {offsets = [0, 0], sizes = [8, 32], strides = [1, 1]} : vector<16x128xf32> to vector<8x32xf32>
    %16 = arith.truncf %15 : vector<8x32xf32> to vector<8x32xbf16>
    %cst_6 = arith.constant dense<0.000000e+00> : vector<8x8xf32>
    %17 = tpu.matmul %12, %14, %cst_6 {dimension_numbers = #tpu.dot_dimension_numbers<[1], [1], [0], [0], [0, 0, 1, 0], [], []>} : vector<8x32xbf16>, vector<8x32xbf16>, vector<8x8xf32> -> vector<8x8xf32>
    %cst_7 = arith.constant 0.176776692 : f32
    %18 = vector.broadcast %cst_7 : f32 to vector<8x8xf32>
    %19 = arith.mulf %17, %18 : vector<8x8xf32>
    %cst_8 = arith.constant dense<0xFF800000> : vector<8xf32>
    %20 = vector.multi_reduction <maximumf>, %19, %cst_8 [1] : vector<8x8xf32> to vector<8xf32>
    %21 = vector.shape_cast %20 : vector<8xf32> to vector<8x1xf32>
    %22 = vector.broadcast %21 : vector<8x1xf32> to vector<8x8xf32>
    %23 = arith.subf %19, %22 : vector<8x8xf32>
    %24 = math.exp %23 : vector<8x8xf32>
    %cst_9 = arith.constant dense<0.000000e+00> : vector<8xf32>
    %25 = vector.multi_reduction <add>, %24, %cst_9 [1] : vector<8x8xf32> to vector<8xf32>
    %26 = vector.shape_cast %25 : vector<8xf32> to vector<8x1xf32>
    %27 = tpu.reciprocal %26 {approx = true} : vector<8x1xf32> -> vector<8x1xf32>
    %28 = vector.broadcast %27 : vector<8x1xf32> to vector<8x8xf32>
    %29 = arith.mulf %24, %28 : vector<8x8xf32>
    %30 = arith.truncf %29 : vector<8x8xf32> to vector<8x8xbf16>
    %cst_10 = arith.constant dense<0.000000e+00> : vector<8x32xf32>
    %31 = tpu.matmul %30, %16, %cst_10 {dimension_numbers = #tpu.dot_dimension_numbers<[1], [0], [0], [1], [0, 0, 1, 1], [], []>} : vector<8x8xbf16>, vector<8x32xbf16>, vector<8x32xf32> -> vector<8x32xf32>
    %32 = arith.truncf %31 : vector<8x32xf32> to vector<8x32xbf16>
    %c0_11 = arith.constant 0 : index
    %c0_12 = arith.constant 0 : index
    %c0_13 = arith.constant 0 : index
    %33 = vector.load %arg3[%c0_11, %c0_12, %c0_13] : memref<4x32x128xbf16, #tpu.memory_space<vmem>>, vector<1x32x128xbf16>
    %34 = vector.shape_cast %33 : vector<1x32x128xbf16> to vector<32x128xbf16>
    %cst_14 = arith.constant dense<0.000000e+00> : vector<8x128xf32>
    %35 = tpu.matmul %32, %34, %cst_14 {dimension_numbers = #tpu.dot_dimension_numbers<[1], [0], [0], [1], [0, 0, 1, 1], [], []>} : vector<8x32xbf16>, vector<32x128xbf16>, vector<8x128xf32> -> vector<8x128xf32>
    %36 = arith.addf %10, %35 : vector<8x128xf32>
    %37 = vector.extract_strided_slice %7 {offsets = [0, 32], sizes = [8, 32], strides = [1, 1]} : vector<16x128xf32> to vector<8x32xf32>
    %38 = arith.truncf %37 : vector<8x32xf32> to vector<8x32xbf16>
    %39 = vector.extract_strided_slice %8 {offsets = [0, 32], sizes = [8, 32], strides = [1, 1]} : vector<16x128xf32> to vector<8x32xf32>
    %40 = arith.truncf %39 : vector<8x32xf32> to vector<8x32xbf16>
    %41 = vector.extract_strided_slice %9 {offsets = [0, 32], sizes = [8, 32], strides = [1, 1]} : vector<16x128xf32> to vector<8x32xf32>
    %42 = arith.truncf %41 : vector<8x32xf32> to vector<8x32xbf16>
    %cst_15 = arith.constant dense<0.000000e+00> : vector<8x8xf32>
    %43 = tpu.matmul %38, %40, %cst_15 {dimension_numbers = #tpu.dot_dimension_numbers<[1], [1], [0], [0], [0, 0, 1, 0], [], []>} : vector<8x32xbf16>, vector<8x32xbf16>, vector<8x8xf32> -> vector<8x8xf32>
    %cst_16 = arith.constant 0.176776692 : f32
    %44 = vector.broadcast %cst_16 : f32 to vector<8x8xf32>
    %45 = arith.mulf %43, %44 : vector<8x8xf32>
    %cst_17 = arith.constant dense<0xFF800000> : vector<8xf32>
    %46 = vector.multi_reduction <maximumf>, %45, %cst_17 [1] : vector<8x8xf32> to vector<8xf32>
    %47 = vector.shape_cast %46 : vector<8xf32> to vector<8x1xf32>
    %48 = vector.broadcast %47 : vector<8x1xf32> to vector<8x8xf32>
    %49 = arith.subf %45, %48 : vector<8x8xf32>
    %50 = math.exp %49 : vector<8x8xf32>
    %cst_18 = arith.constant dense<0.000000e+00> : vector<8xf32>
    %51 = vector.multi_reduction <add>, %50, %cst_18 [1] : vector<8x8xf32> to vector<8xf32>
    %52 = vector.shape_cast %51 : vector<8xf32> to vector<8x1xf32>
    %53 = tpu.reciprocal %52 {approx = true} : vector<8x1xf32> -> vector<8x1xf32>
    %54 = vector.broadcast %53 : vector<8x1xf32> to vector<8x8xf32>
    %55 = arith.mulf %50, %54 : vector<8x8xf32>
    %56 = arith.truncf %55 : vector<8x8xf32> to vector<8x8xbf16>
    %cst_19 = arith.constant dense<0.000000e+00> : vector<8x32xf32>
    %57 = tpu.matmul %56, %42, %cst_19 {dimension_numbers = #tpu.dot_dimension_numbers<[1], [0], [0], [1], [0, 0, 1, 1], [], []>} : vector<8x8xbf16>, vector<8x32xbf16>, vector<8x32xf32> -> vector<8x32xf32>
    %58 = arith.truncf %57 : vector<8x32xf32> to vector<8x32xbf16>
    %c1 = arith.constant 1 : index
    %c0_20 = arith.constant 0 : index
    %c0_21 = arith.constant 0 : index
    %59 = vector.load %arg3[%c1, %c0_20, %c0_21] : memref<4x32x128xbf16, #tpu.memory_space<vmem>>, vector<1x32x128xbf16>
    %60 = vector.shape_cast %59 : vector<1x32x128xbf16> to vector<32x128xbf16>
    %cst_22 = arith.constant dense<0.000000e+00> : vector<8x128xf32>
    %61 = tpu.matmul %58, %60, %cst_22 {dimension_numbers = #tpu.dot_dimension_numbers<[1], [0], [0], [1], [0, 0, 1, 1], [], []>} : vector<8x32xbf16>, vector<32x128xbf16>, vector<8x128xf32> -> vector<8x128xf32>
    %62 = arith.addf %36, %61 : vector<8x128xf32>
    %63 = vector.extract_strided_slice %7 {offsets = [0, 64], sizes = [8, 32], strides = [1, 1]} : vector<16x128xf32> to vector<8x32xf32>
    %64 = arith.truncf %63 : vector<8x32xf32> to vector<8x32xbf16>
    %65 = vector.extract_strided_slice %8 {offsets = [0, 64], sizes = [8, 32], strides = [1, 1]} : vector<16x128xf32> to vector<8x32xf32>
    %66 = arith.truncf %65 : vector<8x32xf32> to vector<8x32xbf16>
    %67 = vector.extract_strided_slice %9 {offsets = [0, 64], sizes = [8, 32], strides = [1, 1]} : vector<16x128xf32> to vector<8x32xf32>
    %68 = arith.truncf %67 : vector<8x32xf32> to vector<8x32xbf16>
    %cst_23 = arith.constant dense<0.000000e+00> : vector<8x8xf32>
    %69 = tpu.matmul %64, %66, %cst_23 {dimension_numbers = #tpu.dot_dimension_numbers<[1], [1], [0], [0], [0, 0, 1, 0], [], []>} : vector<8x32xbf16>, vector<8x32xbf16>, vector<8x8xf32> -> vector<8x8xf32>
    %cst_24 = arith.constant 0.176776692 : f32
    %70 = vector.broadcast %cst_24 : f32 to vector<8x8xf32>
    %71 = arith.mulf %69, %70 : vector<8x8xf32>
    %cst_25 = arith.constant dense<0xFF800000> : vector<8xf32>
    %72 = vector.multi_reduction <maximumf>, %71, %cst_25 [1] : vector<8x8xf32> to vector<8xf32>
    %73 = vector.shape_cast %72 : vector<8xf32> to vector<8x1xf32>
    %74 = vector.broadcast %73 : vector<8x1xf32> to vector<8x8xf32>
    %75 = arith.subf %71, %74 : vector<8x8xf32>
    %76 = math.exp %75 : vector<8x8xf32>
    %cst_26 = arith.constant dense<0.000000e+00> : vector<8xf32>
    %77 = vector.multi_reduction <add>, %76, %cst_26 [1] : vector<8x8xf32> to vector<8xf32>
    %78 = vector.shape_cast %77 : vector<8xf32> to vector<8x1xf32>
    %79 = tpu.reciprocal %78 {approx = true} : vector<8x1xf32> -> vector<8x1xf32>
    %80 = vector.broadcast %79 : vector<8x1xf32> to vector<8x8xf32>
    %81 = arith.mulf %76, %80 : vector<8x8xf32>
    %82 = arith.truncf %81 : vector<8x8xf32> to vector<8x8xbf16>
    %cst_27 = arith.constant dense<0.000000e+00> : vector<8x32xf32>
    %83 = tpu.matmul %82, %68, %cst_27 {dimension_numbers = #tpu.dot_dimension_numbers<[1], [0], [0], [1], [0, 0, 1, 1], [], []>} : vector<8x8xbf16>, vector<8x32xbf16>, vector<8x32xf32> -> vector<8x32xf32>
    %84 = arith.truncf %83 : vector<8x32xf32> to vector<8x32xbf16>
    %c2 = arith.constant 2 : index
    %c0_28 = arith.constant 0 : index
    %c0_29 = arith.constant 0 : index
    %85 = vector.load %arg3[%c2, %c0_28, %c0_29] : memref<4x32x128xbf16, #tpu.memory_space<vmem>>, vector<1x32x128xbf16>
    %86 = vector.shape_cast %85 : vector<1x32x128xbf16> to vector<32x128xbf16>
    %cst_30 = arith.constant dense<0.000000e+00> : vector<8x128xf32>
    %87 = tpu.matmul %84, %86, %cst_30 {dimension_numbers = #tpu.dot_dimension_numbers<[1], [0], [0], [1], [0, 0, 1, 1], [], []>} : vector<8x32xbf16>, vector<32x128xbf16>, vector<8x128xf32> -> vector<8x128xf32>
    %88 = arith.addf %62, %87 : vector<8x128xf32>
    %89 = vector.extract_strided_slice %7 {offsets = [0, 96], sizes = [8, 32], strides = [1, 1]} : vector<16x128xf32> to vector<8x32xf32>
    %90 = arith.truncf %89 : vector<8x32xf32> to vector<8x32xbf16>
    %91 = vector.extract_strided_slice %8 {offsets = [0, 96], sizes = [8, 32], strides = [1, 1]} : vector<16x128xf32> to vector<8x32xf32>
    %92 = arith.truncf %91 : vector<8x32xf32> to vector<8x32xbf16>
    %93 = vector.extract_strided_slice %9 {offsets = [0, 96], sizes = [8, 32], strides = [1, 1]} : vector<16x128xf32> to vector<8x32xf32>
    %94 = arith.truncf %93 : vector<8x32xf32> to vector<8x32xbf16>
    %cst_31 = arith.constant dense<0.000000e+00> : vector<8x8xf32>
    %95 = tpu.matmul %90, %92, %cst_31 {dimension_numbers = #tpu.dot_dimension_numbers<[1], [1], [0], [0], [0, 0, 1, 0], [], []>} : vector<8x32xbf16>, vector<8x32xbf16>, vector<8x8xf32> -> vector<8x8xf32>
    %cst_32 = arith.constant 0.176776692 : f32
    %96 = vector.broadcast %cst_32 : f32 to vector<8x8xf32>
    %97 = arith.mulf %95, %96 : vector<8x8xf32>
    %cst_33 = arith.constant dense<0xFF800000> : vector<8xf32>
    %98 = vector.multi_reduction <maximumf>, %97, %cst_33 [1] : vector<8x8xf32> to vector<8xf32>
    %99 = vector.shape_cast %98 : vector<8xf32> to vector<8x1xf32>
    %100 = vector.broadcast %99 : vector<8x1xf32> to vector<8x8xf32>
    %101 = arith.subf %97, %100 : vector<8x8xf32>
    %102 = math.exp %101 : vector<8x8xf32>
    %cst_34 = arith.constant dense<0.000000e+00> : vector<8xf32>
    %103 = vector.multi_reduction <add>, %102, %cst_34 [1] : vector<8x8xf32> to vector<8xf32>
    %104 = vector.shape_cast %103 : vector<8xf32> to vector<8x1xf32>
    %105 = tpu.reciprocal %104 {approx = true} : vector<8x1xf32> -> vector<8x1xf32>
    %106 = vector.broadcast %105 : vector<8x1xf32> to vector<8x8xf32>
    %107 = arith.mulf %102, %106 : vector<8x8xf32>
    %108 = arith.truncf %107 : vector<8x8xf32> to vector<8x8xbf16>
    %cst_35 = arith.constant dense<0.000000e+00> : vector<8x32xf32>
    %109 = tpu.matmul %108, %94, %cst_35 {dimension_numbers = #tpu.dot_dimension_numbers<[1], [0], [0], [1], [0, 0, 1, 1], [], []>} : vector<8x8xbf16>, vector<8x32xbf16>, vector<8x32xf32> -> vector<8x32xf32>
    %110 = arith.truncf %109 : vector<8x32xf32> to vector<8x32xbf16>
    %c3 = arith.constant 3 : index
    %c0_36 = arith.constant 0 : index
    %c0_37 = arith.constant 0 : index
    %111 = vector.load %arg3[%c3, %c0_36, %c0_37] : memref<4x32x128xbf16, #tpu.memory_space<vmem>>, vector<1x32x128xbf16>
    %112 = vector.shape_cast %111 : vector<1x32x128xbf16> to vector<32x128xbf16>
    %cst_38 = arith.constant dense<0.000000e+00> : vector<8x128xf32>
    %113 = tpu.matmul %110, %112, %cst_38 {dimension_numbers = #tpu.dot_dimension_numbers<[1], [0], [0], [1], [0, 0, 1, 1], [], []>} : vector<8x32xbf16>, vector<32x128xbf16>, vector<8x128xf32> -> vector<8x128xf32>
    %114 = arith.addf %88, %113 : vector<8x128xf32>
    %cst_39 = arith.constant 0.000000e+00 : f32
    %115 = vector.broadcast %cst_39 : f32 to vector<8x128xf32>
    %116 = vector.extract_strided_slice %7 {offsets = [8, 0], sizes = [8, 32], strides = [1, 1]} : vector<16x128xf32> to vector<8x32xf32>
    %117 = arith.truncf %116 : vector<8x32xf32> to vector<8x32xbf16>
    %118 = vector.extract_strided_slice %8 {offsets = [8, 0], sizes = [8, 32], strides = [1, 1]} : vector<16x128xf32> to vector<8x32xf32>
    %119 = arith.truncf %118 : vector<8x32xf32> to vector<8x32xbf16>
    %120 = vector.extract_strided_slice %9 {offsets = [8, 0], sizes = [8, 32], strides = [1, 1]} : vector<16x128xf32> to vector<8x32xf32>
    %121 = arith.truncf %120 : vector<8x32xf32> to vector<8x32xbf16>
    %cst_40 = arith.constant dense<0.000000e+00> : vector<8x8xf32>
    %122 = tpu.matmul %117, %119, %cst_40 {dimension_numbers = #tpu.dot_dimension_numbers<[1], [1], [0], [0], [0, 0, 1, 0], [], []>} : vector<8x32xbf16>, vector<8x32xbf16>, vector<8x8xf32> -> vector<8x8xf32>
    %cst_41 = arith.constant 0.176776692 : f32
    %123 = vector.broadcast %cst_41 : f32 to vector<8x8xf32>
    %124 = arith.mulf %122, %123 : vector<8x8xf32>
    %cst_42 = arith.constant dense<0xFF800000> : vector<8xf32>
    %125 = vector.multi_reduction <maximumf>, %124, %cst_42 [1] : vector<8x8xf32> to vector<8xf32>
    %126 = vector.shape_cast %125 : vector<8xf32> to vector<8x1xf32>
    %127 = vector.broadcast %126 : vector<8x1xf32> to vector<8x8xf32>
    %128 = arith.subf %124, %127 : vector<8x8xf32>
    %129 = math.exp %128 : vector<8x8xf32>
    %cst_43 = arith.constant dense<0.000000e+00> : vector<8xf32>
    %130 = vector.multi_reduction <add>, %129, %cst_43 [1] : vector<8x8xf32> to vector<8xf32>
    %131 = vector.shape_cast %130 : vector<8xf32> to vector<8x1xf32>
    %132 = tpu.reciprocal %131 {approx = true} : vector<8x1xf32> -> vector<8x1xf32>
    %133 = vector.broadcast %132 : vector<8x1xf32> to vector<8x8xf32>
    %134 = arith.mulf %129, %133 : vector<8x8xf32>
    %135 = arith.truncf %134 : vector<8x8xf32> to vector<8x8xbf16>
    %cst_44 = arith.constant dense<0.000000e+00> : vector<8x32xf32>
    %136 = tpu.matmul %135, %121, %cst_44 {dimension_numbers = #tpu.dot_dimension_numbers<[1], [0], [0], [1], [0, 0, 1, 1], [], []>} : vector<8x8xbf16>, vector<8x32xbf16>, vector<8x32xf32> -> vector<8x32xf32>
    %137 = arith.truncf %136 : vector<8x32xf32> to vector<8x32xbf16>
    %c0_45 = arith.constant 0 : index
    %c0_46 = arith.constant 0 : index
    %c0_47 = arith.constant 0 : index
    %138 = vector.load %arg3[%c0_45, %c0_46, %c0_47] : memref<4x32x128xbf16, #tpu.memory_space<vmem>>, vector<1x32x128xbf16>
    %139 = vector.shape_cast %138 : vector<1x32x128xbf16> to vector<32x128xbf16>
    %cst_48 = arith.constant dense<0.000000e+00> : vector<8x128xf32>
    %140 = tpu.matmul %137, %139, %cst_48 {dimension_numbers = #tpu.dot_dimension_numbers<[1], [0], [0], [1], [0, 0, 1, 1], [], []>} : vector<8x32xbf16>, vector<32x128xbf16>, vector<8x128xf32> -> vector<8x128xf32>
    %141 = arith.addf %115, %140 : vector<8x128xf32>
    %142 = vector.extract_strided_slice %7 {offsets = [8, 32], sizes = [8, 32], strides = [1, 1]} : vector<16x128xf32> to vector<8x32xf32>
    %143 = arith.truncf %142 : vector<8x32xf32> to vector<8x32xbf16>
    %144 = vector.extract_strided_slice %8 {offsets = [8, 32], sizes = [8, 32], strides = [1, 1]} : vector<16x128xf32> to vector<8x32xf32>
    %145 = arith.truncf %144 : vector<8x32xf32> to vector<8x32xbf16>
    %146 = vector.extract_strided_slice %9 {offsets = [8, 32], sizes = [8, 32], strides = [1, 1]} : vector<16x128xf32> to vector<8x32xf32>
    %147 = arith.truncf %146 : vector<8x32xf32> to vector<8x32xbf16>
    %cst_49 = arith.constant dense<0.000000e+00> : vector<8x8xf32>
    %148 = tpu.matmul %143, %145, %cst_49 {dimension_numbers = #tpu.dot_dimension_numbers<[1], [1], [0], [0], [0, 0, 1, 0], [], []>} : vector<8x32xbf16>, vector<8x32xbf16>, vector<8x8xf32> -> vector<8x8xf32>
    %cst_50 = arith.constant 0.176776692 : f32
    %149 = vector.broadcast %cst_50 : f32 to vector<8x8xf32>
    %150 = arith.mulf %148, %149 : vector<8x8xf32>
    %cst_51 = arith.constant dense<0xFF800000> : vector<8xf32>
    %151 = vector.multi_reduction <maximumf>, %150, %cst_51 [1] : vector<8x8xf32> to vector<8xf32>
    %152 = vector.shape_cast %151 : vector<8xf32> to vector<8x1xf32>
    %153 = vector.broadcast %152 : vector<8x1xf32> to vector<8x8xf32>
    %154 = arith.subf %150, %153 : vector<8x8xf32>
    %155 = math.exp %154 : vector<8x8xf32>
    %cst_52 = arith.constant dense<0.000000e+00> : vector<8xf32>
    %156 = vector.multi_reduction <add>, %155, %cst_52 [1] : vector<8x8xf32> to vector<8xf32>
    %157 = vector.shape_cast %156 : vector<8xf32> to vector<8x1xf32>
    %158 = tpu.reciprocal %157 {approx = true} : vector<8x1xf32> -> vector<8x1xf32>
    %159 = vector.broadcast %158 : vector<8x1xf32> to vector<8x8xf32>
    %160 = arith.mulf %155, %159 : vector<8x8xf32>
    %161 = arith.truncf %160 : vector<8x8xf32> to vector<8x8xbf16>
    %cst_53 = arith.constant dense<0.000000e+00> : vector<8x32xf32>
    %162 = tpu.matmul %161, %147, %cst_53 {dimension_numbers = #tpu.dot_dimension_numbers<[1], [0], [0], [1], [0, 0, 1, 1], [], []>} : vector<8x8xbf16>, vector<8x32xbf16>, vector<8x32xf32> -> vector<8x32xf32>
    %163 = arith.truncf %162 : vector<8x32xf32> to vector<8x32xbf16>
    %c1_54 = arith.constant 1 : index
    %c0_55 = arith.constant 0 : index
    %c0_56 = arith.constant 0 : index
    %164 = vector.load %arg3[%c1_54, %c0_55, %c0_56] : memref<4x32x128xbf16, #tpu.memory_space<vmem>>, vector<1x32x128xbf16>
    %165 = vector.shape_cast %164 : vector<1x32x128xbf16> to vector<32x128xbf16>
    %cst_57 = arith.constant dense<0.000000e+00> : vector<8x128xf32>
    %166 = tpu.matmul %163, %165, %cst_57 {dimension_numbers = #tpu.dot_dimension_numbers<[1], [0], [0], [1], [0, 0, 1, 1], [], []>} : vector<8x32xbf16>, vector<32x128xbf16>, vector<8x128xf32> -> vector<8x128xf32>
    %167 = arith.addf %141, %166 : vector<8x128xf32>
    %168 = vector.extract_strided_slice %7 {offsets = [8, 64], sizes = [8, 32], strides = [1, 1]} : vector<16x128xf32> to vector<8x32xf32>
    %169 = arith.truncf %168 : vector<8x32xf32> to vector<8x32xbf16>
    %170 = vector.extract_strided_slice %8 {offsets = [8, 64], sizes = [8, 32], strides = [1, 1]} : vector<16x128xf32> to vector<8x32xf32>
    %171 = arith.truncf %170 : vector<8x32xf32> to vector<8x32xbf16>
    %172 = vector.extract_strided_slice %9 {offsets = [8, 64], sizes = [8, 32], strides = [1, 1]} : vector<16x128xf32> to vector<8x32xf32>
    %173 = arith.truncf %172 : vector<8x32xf32> to vector<8x32xbf16>
    %cst_58 = arith.constant dense<0.000000e+00> : vector<8x8xf32>
    %174 = tpu.matmul %169, %171, %cst_58 {dimension_numbers = #tpu.dot_dimension_numbers<[1], [1], [0], [0], [0, 0, 1, 0], [], []>} : vector<8x32xbf16>, vector<8x32xbf16>, vector<8x8xf32> -> vector<8x8xf32>
    %cst_59 = arith.constant 0.176776692 : f32
    %175 = vector.broadcast %cst_59 : f32 to vector<8x8xf32>
    %176 = arith.mulf %174, %175 : vector<8x8xf32>
    %cst_60 = arith.constant dense<0xFF800000> : vector<8xf32>
    %177 = vector.multi_reduction <maximumf>, %176, %cst_60 [1] : vector<8x8xf32> to vector<8xf32>
    %178 = vector.shape_cast %177 : vector<8xf32> to vector<8x1xf32>
    %179 = vector.broadcast %178 : vector<8x1xf32> to vector<8x8xf32>
    %180 = arith.subf %176, %179 : vector<8x8xf32>
    %181 = math.exp %180 : vector<8x8xf32>
    %cst_61 = arith.constant dense<0.000000e+00> : vector<8xf32>
    %182 = vector.multi_reduction <add>, %181, %cst_61 [1] : vector<8x8xf32> to vector<8xf32>
    %183 = vector.shape_cast %182 : vector<8xf32> to vector<8x1xf32>
    %184 = tpu.reciprocal %183 {approx = true} : vector<8x1xf32> -> vector<8x1xf32>
    %185 = vector.broadcast %184 : vector<8x1xf32> to vector<8x8xf32>
    %186 = arith.mulf %181, %185 : vector<8x8xf32>
    %187 = arith.truncf %186 : vector<8x8xf32> to vector<8x8xbf16>
    %cst_62 = arith.constant dense<0.000000e+00> : vector<8x32xf32>
    %188 = tpu.matmul %187, %173, %cst_62 {dimension_numbers = #tpu.dot_dimension_numbers<[1], [0], [0], [1], [0, 0, 1, 1], [], []>} : vector<8x8xbf16>, vector<8x32xbf16>, vector<8x32xf32> -> vector<8x32xf32>
    %189 = arith.truncf %188 : vector<8x32xf32> to vector<8x32xbf16>
    %c2_63 = arith.constant 2 : index
    %c0_64 = arith.constant 0 : index
    %c0_65 = arith.constant 0 : index
    %190 = vector.load %arg3[%c2_63, %c0_64, %c0_65] : memref<4x32x128xbf16, #tpu.memory_space<vmem>>, vector<1x32x128xbf16>
    %191 = vector.shape_cast %190 : vector<1x32x128xbf16> to vector<32x128xbf16>
    %cst_66 = arith.constant dense<0.000000e+00> : vector<8x128xf32>
    %192 = tpu.matmul %189, %191, %cst_66 {dimension_numbers = #tpu.dot_dimension_numbers<[1], [0], [0], [1], [0, 0, 1, 1], [], []>} : vector<8x32xbf16>, vector<32x128xbf16>, vector<8x128xf32> -> vector<8x128xf32>
    %193 = arith.addf %167, %192 : vector<8x128xf32>
    %194 = vector.extract_strided_slice %7 {offsets = [8, 96], sizes = [8, 32], strides = [1, 1]} : vector<16x128xf32> to vector<8x32xf32>
    %195 = arith.truncf %194 : vector<8x32xf32> to vector<8x32xbf16>
    %196 = vector.extract_strided_slice %8 {offsets = [8, 96], sizes = [8, 32], strides = [1, 1]} : vector<16x128xf32> to vector<8x32xf32>
    %197 = arith.truncf %196 : vector<8x32xf32> to vector<8x32xbf16>
    %198 = vector.extract_strided_slice %9 {offsets = [8, 96], sizes = [8, 32], strides = [1, 1]} : vector<16x128xf32> to vector<8x32xf32>
    %199 = arith.truncf %198 : vector<8x32xf32> to vector<8x32xbf16>
    %cst_67 = arith.constant dense<0.000000e+00> : vector<8x8xf32>
    %200 = tpu.matmul %195, %197, %cst_67 {dimension_numbers = #tpu.dot_dimension_numbers<[1], [1], [0], [0], [0, 0, 1, 0], [], []>} : vector<8x32xbf16>, vector<8x32xbf16>, vector<8x8xf32> -> vector<8x8xf32>
    %cst_68 = arith.constant 0.176776692 : f32
    %201 = vector.broadcast %cst_68 : f32 to vector<8x8xf32>
    %202 = arith.mulf %200, %201 : vector<8x8xf32>
    %cst_69 = arith.constant dense<0xFF800000> : vector<8xf32>
    %203 = vector.multi_reduction <maximumf>, %202, %cst_69 [1] : vector<8x8xf32> to vector<8xf32>
    %204 = vector.shape_cast %203 : vector<8xf32> to vector<8x1xf32>
    %205 = vector.broadcast %204 : vector<8x1xf32> to vector<8x8xf32>
    %206 = arith.subf %202, %205 : vector<8x8xf32>
    %207 = math.exp %206 : vector<8x8xf32>
    %cst_70 = arith.constant dense<0.000000e+00> : vector<8xf32>
    %208 = vector.multi_reduction <add>, %207, %cst_70 [1] : vector<8x8xf32> to vector<8xf32>
    %209 = vector.shape_cast %208 : vector<8xf32> to vector<8x1xf32>
    %210 = tpu.reciprocal %209 {approx = true} : vector<8x1xf32> -> vector<8x1xf32>
    %211 = vector.broadcast %210 : vector<8x1xf32> to vector<8x8xf32>
    %212 = arith.mulf %207, %211 : vector<8x8xf32>
    %213 = arith.truncf %212 : vector<8x8xf32> to vector<8x8xbf16>
    %cst_71 = arith.constant dense<0.000000e+00> : vector<8x32xf32>
    %214 = tpu.matmul %213, %199, %cst_71 {dimension_numbers = #tpu.dot_dimension_numbers<[1], [0], [0], [1], [0, 0, 1, 1], [], []>} : vector<8x8xbf16>, vector<8x32xbf16>, vector<8x32xf32> -> vector<8x32xf32>
    %215 = arith.truncf %214 : vector<8x32xf32> to vector<8x32xbf16>
    %c3_72 = arith.constant 3 : index
    %c0_73 = arith.constant 0 : index
    %c0_74 = arith.constant 0 : index
    %216 = vector.load %arg3[%c3_72, %c0_73, %c0_74] : memref<4x32x128xbf16, #tpu.memory_space<vmem>>, vector<1x32x128xbf16>
    %217 = vector.shape_cast %216 : vector<1x32x128xbf16> to vector<32x128xbf16>
    %cst_75 = arith.constant dense<0.000000e+00> : vector<8x128xf32>
    %218 = tpu.matmul %215, %217, %cst_75 {dimension_numbers = #tpu.dot_dimension_numbers<[1], [0], [0], [1], [0, 0, 1, 1], [], []>} : vector<8x32xbf16>, vector<32x128xbf16>, vector<8x128xf32> -> vector<8x128xf32>
    %219 = arith.addf %193, %218 : vector<8x128xf32>
    %220 = tpu.concatenate %114, %219 in 0 : vector<8x128xf32>, vector<8x128xf32> -> vector<16x128xf32>
    %c0_76 = arith.constant 0 : index
    %c0_77 = arith.constant 0 : index
    %221 = vector.load %arg4[%c0_76, %c0_77] : memref<1x128xf32, #tpu.memory_space<vmem>>, vector<1x128xf32>
    %222 = vector.broadcast %221 : vector<1x128xf32> to vector<16x128xf32>
    %223 = arith.addf %220, %222 : vector<16x128xf32>
    %224 = tpu.concatenate %29, %55, %81, %107, %134, %160, %186, %212 in 1 : vector<8x8xf32>, vector<8x8xf32>, vector<8x8xf32>, vector<8x8xf32>, vector<8x8xf32>, vector<8x8xf32>, vector<8x8xf32>, vector<8x8xf32> -> vector<8x64xf32>
    %225 = arith.addf %0, %223 : vector<16x128xf32>
    %c0_78 = arith.constant 0 : index
    %c0_79 = arith.constant 0 : index
    %226 = vector.load %arg5[%c0_78, %c0_79] : memref<1x128xf32, #tpu.memory_space<vmem>>, vector<1x128xf32>
    %c0_80 = arith.constant 0 : index
    %c0_81 = arith.constant 0 : index
    %227 = vector.load %arg6[%c0_80, %c0_81] : memref<1x128xf32, #tpu.memory_space<vmem>>, vector<1x128xf32>
    %cst_82 = arith.constant dense<0.000000e+00> : vector<16xf32>
    %228 = vector.multi_reduction <add>, %225, %cst_82 [1] : vector<16x128xf32> to vector<16xf32>
    %229 = vector.shape_cast %228 : vector<16xf32> to vector<16x1xf32>
    %cst_83 = arith.constant 1.280000e+02 : f32
    %230 = vector.broadcast %cst_83 : f32 to vector<16x1xf32>
    %231 = arith.divf %229, %230 : vector<16x1xf32>
    %232 = vector.broadcast %231 : vector<16x1xf32> to vector<16x128xf32>
    %233 = arith.subf %225, %232 : vector<16x128xf32>
    %234 = arith.mulf %233, %233 : vector<16x128xf32>
    %cst_84 = arith.constant dense<0.000000e+00> : vector<16xf32>
    %235 = vector.multi_reduction <add>, %234, %cst_84 [1] : vector<16x128xf32> to vector<16xf32>
    %236 = vector.shape_cast %235 : vector<16xf32> to vector<16x1xf32>
    %cst_85 = arith.constant 1.280000e+02 : f32
    %237 = vector.broadcast %cst_85 : f32 to vector<16x1xf32>
    %238 = arith.divf %236, %237 : vector<16x1xf32>
    %239 = vector.broadcast %231 : vector<16x1xf32> to vector<16x128xf32>
    %240 = arith.subf %225, %239 : vector<16x128xf32>
    %cst_86 = arith.constant 9.99999974E-6 : f32
    %241 = vector.broadcast %cst_86 : f32 to vector<16x1xf32>
    %242 = arith.addf %238, %241 : vector<16x1xf32>
    %243 = math.rsqrt %242 : vector<16x1xf32>
    %244 = vector.broadcast %243 : vector<16x1xf32> to vector<16x128xf32>
    %245 = arith.mulf %240, %244 : vector<16x128xf32>
    %246 = vector.broadcast %226 : vector<1x128xf32> to vector<16x128xf32>
    %247 = arith.mulf %245, %246 : vector<16x128xf32>
    %248 = vector.broadcast %227 : vector<1x128xf32> to vector<16x128xf32>
    %249 = arith.addf %247, %248 : vector<16x128xf32>
    %250 = arith.truncf %249 : vector<16x128xf32> to vector<16x128xbf16>
    %c0_87 = arith.constant 0 : index
    %c0_88 = arith.constant 0 : index
    %251 = vector.load %arg7[%c0_87, %c0_88] : memref<128x512xbf16, #tpu.memory_space<vmem>>, vector<128x512xbf16>
    %cst_89 = arith.constant dense<0.000000e+00> : vector<16x512xf32>
    %252 = tpu.matmul %250, %251, %cst_89 {dimension_numbers = #tpu.dot_dimension_numbers<[1], [0], [0], [1], [0, 0, 1, 1], [], []>} : vector<16x128xbf16>, vector<128x512xbf16>, vector<16x512xf32> -> vector<16x512xf32>
    %c0_90 = arith.constant 0 : index
    %c0_91 = arith.constant 0 : index
    %253 = vector.load %arg8[%c0_90, %c0_91] : memref<1x512xf32, #tpu.memory_space<vmem>>, vector<1x512xf32>
    %254 = vector.broadcast %253 : vector<1x512xf32> to vector<16x512xf32>
    %255 = arith.addf %252, %254 : vector<16x512xf32>
    %cst_92 = arith.constant 0.000000e+00 : f32
    %256 = vector.broadcast %cst_92 : f32 to vector<16x512xf32>
    %257 = arith.maximumf %255, %256 : vector<16x512xf32>
    %258 = arith.truncf %257 : vector<16x512xf32> to vector<16x512xbf16>
    %c0_93 = arith.constant 0 : index
    %c0_94 = arith.constant 0 : index
    %259 = vector.load %arg9[%c0_93, %c0_94] : memref<512x128xbf16, #tpu.memory_space<vmem>>, vector<512x128xbf16>
    %cst_95 = arith.constant dense<0.000000e+00> : vector<16x128xf32>
    %260 = tpu.matmul %258, %259, %cst_95 {dimension_numbers = #tpu.dot_dimension_numbers<[1], [0], [0], [1], [0, 0, 1, 1], [], []>} : vector<16x512xbf16>, vector<512x128xbf16>, vector<16x128xf32> -> vector<16x128xf32>
    %c0_96 = arith.constant 0 : index
    %c0_97 = arith.constant 0 : index
    %261 = vector.load %arg10[%c0_96, %c0_97] : memref<1x128xf32, #tpu.memory_space<vmem>>, vector<1x128xf32>
    %262 = vector.broadcast %261 : vector<1x128xf32> to vector<16x128xf32>
    %263 = arith.addf %260, %262 : vector<16x128xf32>
    %264 = arith.addf %249, %263 : vector<16x128xf32>
    %c0_98 = arith.constant 0 : index
    %c0_99 = arith.constant 0 : index
    %265 = vector.load %arg11[%c0_98, %c0_99] : memref<1x128xf32, #tpu.memory_space<vmem>>, vector<1x128xf32>
    %c0_100 = arith.constant 0 : index
    %c0_101 = arith.constant 0 : index
    %266 = vector.load %arg12[%c0_100, %c0_101] : memref<1x128xf32, #tpu.memory_space<vmem>>, vector<1x128xf32>
    %cst_102 = arith.constant dense<0.000000e+00> : vector<16xf32>
    %267 = vector.multi_reduction <add>, %264, %cst_102 [1] : vector<16x128xf32> to vector<16xf32>
    %268 = vector.shape_cast %267 : vector<16xf32> to vector<16x1xf32>
    %cst_103 = arith.constant 1.280000e+02 : f32
    %269 = vector.broadcast %cst_103 : f32 to vector<16x1xf32>
    %270 = arith.divf %268, %269 : vector<16x1xf32>
    %271 = vector.broadcast %270 : vector<16x1xf32> to vector<16x128xf32>
    %272 = arith.subf %264, %271 : vector<16x128xf32>
    %273 = arith.mulf %272, %272 : vector<16x128xf32>
    %cst_104 = arith.constant dense<0.000000e+00> : vector<16xf32>
    %274 = vector.multi_reduction <add>, %273, %cst_104 [1] : vector<16x128xf32> to vector<16xf32>
    %275 = vector.shape_cast %274 : vector<16xf32> to vector<16x1xf32>
    %cst_105 = arith.constant 1.280000e+02 : f32
    %276 = vector.broadcast %cst_105 : f32 to vector<16x1xf32>
    %277 = arith.divf %275, %276 : vector<16x1xf32>
    %278 = vector.broadcast %270 : vector<16x1xf32> to vector<16x128xf32>
    %279 = arith.subf %264, %278 : vector<16x128xf32>
    %cst_106 = arith.constant 9.99999974E-6 : f32
    %280 = vector.broadcast %cst_106 : f32 to vector<16x1xf32>
    %281 = arith.addf %277, %280 : vector<16x1xf32>
    %282 = math.rsqrt %281 : vector<16x1xf32>
    %283 = vector.broadcast %282 : vector<16x1xf32> to vector<16x128xf32>
    %284 = arith.mulf %279, %283 : vector<16x128xf32>
    %285 = vector.broadcast %265 : vector<1x128xf32> to vector<16x128xf32>
    %286 = arith.mulf %284, %285 : vector<16x128xf32>
    %287 = vector.broadcast %266 : vector<1x128xf32> to vector<16x128xf32>
    %288 = arith.addf %286, %287 : vector<16x128xf32>
    %289 = arith.truncf %288 : vector<16x128xf32> to vector<16x128xbf16>
    %c0_107 = arith.constant 0 : index
    %c0_108 = arith.constant 0 : index
    %290 = vector.load %arg13[%c0_107, %c0_108] : memref<128x384xbf16, #tpu.memory_space<vmem>>, vector<128x384xbf16>
    %cst_109 = arith.constant dense<0.000000e+00> : vector<16x384xf32>
    %291 = tpu.matmul %289, %290, %cst_109 {dimension_numbers = #tpu.dot_dimension_numbers<[1], [0], [0], [1], [0, 0, 1, 1], [], []>} : vector<16x128xbf16>, vector<128x384xbf16>, vector<16x384xf32> -> vector<16x384xf32>
    %c0_110 = arith.constant 0 : index
    %c0_111 = arith.constant 0 : index
    %292 = vector.load %arg14[%c0_110, %c0_111] : memref<1x384xf32, #tpu.memory_space<vmem>>, vector<1x384xf32>
    %293 = vector.broadcast %292 : vector<1x384xf32> to vector<16x384xf32>
    %294 = arith.addf %291, %293 : vector<16x384xf32>
    %295 = vector.extract_strided_slice %294 {offsets = [0, 0], sizes = [16, 128], strides = [1, 1]} : vector<16x384xf32> to vector<16x128xf32>
    %296 = vector.extract_strided_slice %294 {offsets = [0, 128], sizes = [16, 128], strides = [1, 1]} : vector<16x384xf32> to vector<16x128xf32>
    %297 = vector.extract_strided_slice %294 {offsets = [0, 256], sizes = [16, 128], strides = [1, 1]} : vector<16x384xf32> to vector<16x128xf32>
    %cst_112 = arith.constant 0.000000e+00 : f32
    %298 = vector.broadcast %cst_112 : f32 to vector<8x128xf32>
    %299 = vector.extract_strided_slice %295 {offsets = [0, 0], sizes = [8, 32], strides = [1, 1]} : vector<16x128xf32> to vector<8x32xf32>
    %300 = arith.truncf %299 : vector<8x32xf32> to vector<8x32xbf16>
    %301 = vector.extract_strided_slice %296 {offsets = [0, 0], sizes = [8, 32], strides = [1, 1]} : vector<16x128xf32> to vector<8x32xf32>
    %302 = arith.truncf %301 : vector<8x32xf32> to vector<8x32xbf16>
    %303 = vector.extract_strided_slice %297 {offsets = [0, 0], sizes = [8, 32], strides = [1, 1]} : vector<16x128xf32> to vector<8x32xf32>
    %304 = arith.truncf %303 : vector<8x32xf32> to vector<8x32xbf16>
    %cst_113 = arith.constant dense<0.000000e+00> : vector<8x8xf32>
    %305 = tpu.matmul %300, %302, %cst_113 {dimension_numbers = #tpu.dot_dimension_numbers<[1], [1], [0], [0], [0, 0, 1, 0], [], []>} : vector<8x32xbf16>, vector<8x32xbf16>, vector<8x8xf32> -> vector<8x8xf32>
    %cst_114 = arith.constant 0.176776692 : f32
    %306 = vector.broadcast %cst_114 : f32 to vector<8x8xf32>
    %307 = arith.mulf %305, %306 : vector<8x8xf32>
    %cst_115 = arith.constant dense<0xFF800000> : vector<8xf32>
    %308 = vector.multi_reduction <maximumf>, %307, %cst_115 [1] : vector<8x8xf32> to vector<8xf32>
    %309 = vector.shape_cast %308 : vector<8xf32> to vector<8x1xf32>
    %310 = vector.broadcast %309 : vector<8x1xf32> to vector<8x8xf32>
    %311 = arith.subf %307, %310 : vector<8x8xf32>
    %312 = math.exp %311 : vector<8x8xf32>
    %cst_116 = arith.constant dense<0.000000e+00> : vector<8xf32>
    %313 = vector.multi_reduction <add>, %312, %cst_116 [1] : vector<8x8xf32> to vector<8xf32>
    %314 = vector.shape_cast %313 : vector<8xf32> to vector<8x1xf32>
    %315 = tpu.reciprocal %314 {approx = true} : vector<8x1xf32> -> vector<8x1xf32>
    %316 = vector.broadcast %315 : vector<8x1xf32> to vector<8x8xf32>
    %317 = arith.mulf %312, %316 : vector<8x8xf32>
    %318 = arith.truncf %317 : vector<8x8xf32> to vector<8x8xbf16>
    %cst_117 = arith.constant dense<0.000000e+00> : vector<8x32xf32>
    %319 = tpu.matmul %318, %304, %cst_117 {dimension_numbers = #tpu.dot_dimension_numbers<[1], [0], [0], [1], [0, 0, 1, 1], [], []>} : vector<8x8xbf16>, vector<8x32xbf16>, vector<8x32xf32> -> vector<8x32xf32>
    %320 = arith.truncf %319 : vector<8x32xf32> to vector<8x32xbf16>
    %c0_118 = arith.constant 0 : index
    %c0_119 = arith.constant 0 : index
    %c0_120 = arith.constant 0 : index
    %321 = vector.load %arg15[%c0_118, %c0_119, %c0_120] : memref<4x32x128xbf16, #tpu.memory_space<vmem>>, vector<1x32x128xbf16>
    %322 = vector.shape_cast %321 : vector<1x32x128xbf16> to vector<32x128xbf16>
    %cst_121 = arith.constant dense<0.000000e+00> : vector<8x128xf32>
    %323 = tpu.matmul %320, %322, %cst_121 {dimension_numbers = #tpu.dot_dimension_numbers<[1], [0], [0], [1], [0, 0, 1, 1], [], []>} : vector<8x32xbf16>, vector<32x128xbf16>, vector<8x128xf32> -> vector<8x128xf32>
    %324 = arith.addf %298, %323 : vector<8x128xf32>
    %325 = vector.extract_strided_slice %295 {offsets = [0, 32], sizes = [8, 32], strides = [1, 1]} : vector<16x128xf32> to vector<8x32xf32>
    %326 = arith.truncf %325 : vector<8x32xf32> to vector<8x32xbf16>
    %327 = vector.extract_strided_slice %296 {offsets = [0, 32], sizes = [8, 32], strides = [1, 1]} : vector<16x128xf32> to vector<8x32xf32>
    %328 = arith.truncf %327 : vector<8x32xf32> to vector<8x32xbf16>
    %329 = vector.extract_strided_slice %297 {offsets = [0, 32], sizes = [8, 32], strides = [1, 1]} : vector<16x128xf32> to vector<8x32xf32>
    %330 = arith.truncf %329 : vector<8x32xf32> to vector<8x32xbf16>
    %cst_122 = arith.constant dense<0.000000e+00> : vector<8x8xf32>
    %331 = tpu.matmul %326, %328, %cst_122 {dimension_numbers = #tpu.dot_dimension_numbers<[1], [1], [0], [0], [0, 0, 1, 0], [], []>} : vector<8x32xbf16>, vector<8x32xbf16>, vector<8x8xf32> -> vector<8x8xf32>
    %cst_123 = arith.constant 0.176776692 : f32
    %332 = vector.broadcast %cst_123 : f32 to vector<8x8xf32>
    %333 = arith.mulf %331, %332 : vector<8x8xf32>
    %cst_124 = arith.constant dense<0xFF800000> : vector<8xf32>
    %334 = vector.multi_reduction <maximumf>, %333, %cst_124 [1] : vector<8x8xf32> to vector<8xf32>
    %335 = vector.shape_cast %334 : vector<8xf32> to vector<8x1xf32>
    %336 = vector.broadcast %335 : vector<8x1xf32> to vector<8x8xf32>
    %337 = arith.subf %333, %336 : vector<8x8xf32>
    %338 = math.exp %337 : vector<8x8xf32>
    %cst_125 = arith.constant dense<0.000000e+00> : vector<8xf32>
    %339 = vector.multi_reduction <add>, %338, %cst_125 [1] : vector<8x8xf32> to vector<8xf32>
    %340 = vector.shape_cast %339 : vector<8xf32> to vector<8x1xf32>
    %341 = tpu.reciprocal %340 {approx = true} : vector<8x1xf32> -> vector<8x1xf32>
    %342 = vector.broadcast %341 : vector<8x1xf32> to vector<8x8xf32>
    %343 = arith.mulf %338, %342 : vector<8x8xf32>
    %344 = arith.truncf %343 : vector<8x8xf32> to vector<8x8xbf16>
    %cst_126 = arith.constant dense<0.000000e+00> : vector<8x32xf32>
    %345 = tpu.matmul %344, %330, %cst_126 {dimension_numbers = #tpu.dot_dimension_numbers<[1], [0], [0], [1], [0, 0, 1, 1], [], []>} : vector<8x8xbf16>, vector<8x32xbf16>, vector<8x32xf32> -> vector<8x32xf32>
    %346 = arith.truncf %345 : vector<8x32xf32> to vector<8x32xbf16>
    %c1_127 = arith.constant 1 : index
    %c0_128 = arith.constant 0 : index
    %c0_129 = arith.constant 0 : index
    %347 = vector.load %arg15[%c1_127, %c0_128, %c0_129] : memref<4x32x128xbf16, #tpu.memory_space<vmem>>, vector<1x32x128xbf16>
    %348 = vector.shape_cast %347 : vector<1x32x128xbf16> to vector<32x128xbf16>
    %cst_130 = arith.constant dense<0.000000e+00> : vector<8x128xf32>
    %349 = tpu.matmul %346, %348, %cst_130 {dimension_numbers = #tpu.dot_dimension_numbers<[1], [0], [0], [1], [0, 0, 1, 1], [], []>} : vector<8x32xbf16>, vector<32x128xbf16>, vector<8x128xf32> -> vector<8x128xf32>
    %350 = arith.addf %324, %349 : vector<8x128xf32>
    %351 = vector.extract_strided_slice %295 {offsets = [0, 64], sizes = [8, 32], strides = [1, 1]} : vector<16x128xf32> to vector<8x32xf32>
    %352 = arith.truncf %351 : vector<8x32xf32> to vector<8x32xbf16>
    %353 = vector.extract_strided_slice %296 {offsets = [0, 64], sizes = [8, 32], strides = [1, 1]} : vector<16x128xf32> to vector<8x32xf32>
    %354 = arith.truncf %353 : vector<8x32xf32> to vector<8x32xbf16>
    %355 = vector.extract_strided_slice %297 {offsets = [0, 64], sizes = [8, 32], strides = [1, 1]} : vector<16x128xf32> to vector<8x32xf32>
    %356 = arith.truncf %355 : vector<8x32xf32> to vector<8x32xbf16>
    %cst_131 = arith.constant dense<0.000000e+00> : vector<8x8xf32>
    %357 = tpu.matmul %352, %354, %cst_131 {dimension_numbers = #tpu.dot_dimension_numbers<[1], [1], [0], [0], [0, 0, 1, 0], [], []>} : vector<8x32xbf16>, vector<8x32xbf16>, vector<8x8xf32> -> vector<8x8xf32>
    %cst_132 = arith.constant 0.176776692 : f32
    %358 = vector.broadcast %cst_132 : f32 to vector<8x8xf32>
    %359 = arith.mulf %357, %358 : vector<8x8xf32>
    %cst_133 = arith.constant dense<0xFF800000> : vector<8xf32>
    %360 = vector.multi_reduction <maximumf>, %359, %cst_133 [1] : vector<8x8xf32> to vector<8xf32>
    %361 = vector.shape_cast %360 : vector<8xf32> to vector<8x1xf32>
    %362 = vector.broadcast %361 : vector<8x1xf32> to vector<8x8xf32>
    %363 = arith.subf %359, %362 : vector<8x8xf32>
    %364 = math.exp %363 : vector<8x8xf32>
    %cst_134 = arith.constant dense<0.000000e+00> : vector<8xf32>
    %365 = vector.multi_reduction <add>, %364, %cst_134 [1] : vector<8x8xf32> to vector<8xf32>
    %366 = vector.shape_cast %365 : vector<8xf32> to vector<8x1xf32>
    %367 = tpu.reciprocal %366 {approx = true} : vector<8x1xf32> -> vector<8x1xf32>
    %368 = vector.broadcast %367 : vector<8x1xf32> to vector<8x8xf32>
    %369 = arith.mulf %364, %368 : vector<8x8xf32>
    %370 = arith.truncf %369 : vector<8x8xf32> to vector<8x8xbf16>
    %cst_135 = arith.constant dense<0.000000e+00> : vector<8x32xf32>
    %371 = tpu.matmul %370, %356, %cst_135 {dimension_numbers = #tpu.dot_dimension_numbers<[1], [0], [0], [1], [0, 0, 1, 1], [], []>} : vector<8x8xbf16>, vector<8x32xbf16>, vector<8x32xf32> -> vector<8x32xf32>
    %372 = arith.truncf %371 : vector<8x32xf32> to vector<8x32xbf16>
    %c2_136 = arith.constant 2 : index
    %c0_137 = arith.constant 0 : index
    %c0_138 = arith.constant 0 : index
    %373 = vector.load %arg15[%c2_136, %c0_137, %c0_138] : memref<4x32x128xbf16, #tpu.memory_space<vmem>>, vector<1x32x128xbf16>
    %374 = vector.shape_cast %373 : vector<1x32x128xbf16> to vector<32x128xbf16>
    %cst_139 = arith.constant dense<0.000000e+00> : vector<8x128xf32>
    %375 = tpu.matmul %372, %374, %cst_139 {dimension_numbers = #tpu.dot_dimension_numbers<[1], [0], [0], [1], [0, 0, 1, 1], [], []>} : vector<8x32xbf16>, vector<32x128xbf16>, vector<8x128xf32> -> vector<8x128xf32>
    %376 = arith.addf %350, %375 : vector<8x128xf32>
    %377 = vector.extract_strided_slice %295 {offsets = [0, 96], sizes = [8, 32], strides = [1, 1]} : vector<16x128xf32> to vector<8x32xf32>
    %378 = arith.truncf %377 : vector<8x32xf32> to vector<8x32xbf16>
    %379 = vector.extract_strided_slice %296 {offsets = [0, 96], sizes = [8, 32], strides = [1, 1]} : vector<16x128xf32> to vector<8x32xf32>
    %380 = arith.truncf %379 : vector<8x32xf32> to vector<8x32xbf16>
    %381 = vector.extract_strided_slice %297 {offsets = [0, 96], sizes = [8, 32], strides = [1, 1]} : vector<16x128xf32> to vector<8x32xf32>
    %382 = arith.truncf %381 : vector<8x32xf32> to vector<8x32xbf16>
    %cst_140 = arith.constant dense<0.000000e+00> : vector<8x8xf32>
    %383 = tpu.matmul %378, %380, %cst_140 {dimension_numbers = #tpu.dot_dimension_numbers<[1], [1], [0], [0], [0, 0, 1, 0], [], []>} : vector<8x32xbf16>, vector<8x32xbf16>, vector<8x8xf32> -> vector<8x8xf32>
    %cst_141 = arith.constant 0.176776692 : f32
    %384 = vector.broadcast %cst_141 : f32 to vector<8x8xf32>
    %385 = arith.mulf %383, %384 : vector<8x8xf32>
    %cst_142 = arith.constant dense<0xFF800000> : vector<8xf32>
    %386 = vector.multi_reduction <maximumf>, %385, %cst_142 [1] : vector<8x8xf32> to vector<8xf32>
    %387 = vector.shape_cast %386 : vector<8xf32> to vector<8x1xf32>
    %388 = vector.broadcast %387 : vector<8x1xf32> to vector<8x8xf32>
    %389 = arith.subf %385, %388 : vector<8x8xf32>
    %390 = math.exp %389 : vector<8x8xf32>
    %cst_143 = arith.constant dense<0.000000e+00> : vector<8xf32>
    %391 = vector.multi_reduction <add>, %390, %cst_143 [1] : vector<8x8xf32> to vector<8xf32>
    %392 = vector.shape_cast %391 : vector<8xf32> to vector<8x1xf32>
    %393 = tpu.reciprocal %392 {approx = true} : vector<8x1xf32> -> vector<8x1xf32>
    %394 = vector.broadcast %393 : vector<8x1xf32> to vector<8x8xf32>
    %395 = arith.mulf %390, %394 : vector<8x8xf32>
    %396 = arith.truncf %395 : vector<8x8xf32> to vector<8x8xbf16>
    %cst_144 = arith.constant dense<0.000000e+00> : vector<8x32xf32>
    %397 = tpu.matmul %396, %382, %cst_144 {dimension_numbers = #tpu.dot_dimension_numbers<[1], [0], [0], [1], [0, 0, 1, 1], [], []>} : vector<8x8xbf16>, vector<8x32xbf16>, vector<8x32xf32> -> vector<8x32xf32>
    %398 = arith.truncf %397 : vector<8x32xf32> to vector<8x32xbf16>
    %c3_145 = arith.constant 3 : index
    %c0_146 = arith.constant 0 : index
    %c0_147 = arith.constant 0 : index
    %399 = vector.load %arg15[%c3_145, %c0_146, %c0_147] : memref<4x32x128xbf16, #tpu.memory_space<vmem>>, vector<1x32x128xbf16>
    %400 = vector.shape_cast %399 : vector<1x32x128xbf16> to vector<32x128xbf16>
    %cst_148 = arith.constant dense<0.000000e+00> : vector<8x128xf32>
    %401 = tpu.matmul %398, %400, %cst_148 {dimension_numbers = #tpu.dot_dimension_numbers<[1], [0], [0], [1], [0, 0, 1, 1], [], []>} : vector<8x32xbf16>, vector<32x128xbf16>, vector<8x128xf32> -> vector<8x128xf32>
    %402 = arith.addf %376, %401 : vector<8x128xf32>
    %cst_149 = arith.constant 0.000000e+00 : f32
    %403 = vector.broadcast %cst_149 : f32 to vector<8x128xf32>
    %404 = vector.extract_strided_slice %295 {offsets = [8, 0], sizes = [8, 32], strides = [1, 1]} : vector<16x128xf32> to vector<8x32xf32>
    %405 = arith.truncf %404 : vector<8x32xf32> to vector<8x32xbf16>
    %406 = vector.extract_strided_slice %296 {offsets = [8, 0], sizes = [8, 32], strides = [1, 1]} : vector<16x128xf32> to vector<8x32xf32>
    %407 = arith.truncf %406 : vector<8x32xf32> to vector<8x32xbf16>
    %408 = vector.extract_strided_slice %297 {offsets = [8, 0], sizes = [8, 32], strides = [1, 1]} : vector<16x128xf32> to vector<8x32xf32>
    %409 = arith.truncf %408 : vector<8x32xf32> to vector<8x32xbf16>
    %cst_150 = arith.constant dense<0.000000e+00> : vector<8x8xf32>
    %410 = tpu.matmul %405, %407, %cst_150 {dimension_numbers = #tpu.dot_dimension_numbers<[1], [1], [0], [0], [0, 0, 1, 0], [], []>} : vector<8x32xbf16>, vector<8x32xbf16>, vector<8x8xf32> -> vector<8x8xf32>
    %cst_151 = arith.constant 0.176776692 : f32
    %411 = vector.broadcast %cst_151 : f32 to vector<8x8xf32>
    %412 = arith.mulf %410, %411 : vector<8x8xf32>
    %cst_152 = arith.constant dense<0xFF800000> : vector<8xf32>
    %413 = vector.multi_reduction <maximumf>, %412, %cst_152 [1] : vector<8x8xf32> to vector<8xf32>
    %414 = vector.shape_cast %413 : vector<8xf32> to vector<8x1xf32>
    %415 = vector.broadcast %414 : vector<8x1xf32> to vector<8x8xf32>
    %416 = arith.subf %412, %415 : vector<8x8xf32>
    %417 = math.exp %416 : vector<8x8xf32>
    %cst_153 = arith.constant dense<0.000000e+00> : vector<8xf32>
    %418 = vector.multi_reduction <add>, %417, %cst_153 [1] : vector<8x8xf32> to vector<8xf32>
    %419 = vector.shape_cast %418 : vector<8xf32> to vector<8x1xf32>
    %420 = tpu.reciprocal %419 {approx = true} : vector<8x1xf32> -> vector<8x1xf32>
    %421 = vector.broadcast %420 : vector<8x1xf32> to vector<8x8xf32>
    %422 = arith.mulf %417, %421 : vector<8x8xf32>
    %423 = arith.truncf %422 : vector<8x8xf32> to vector<8x8xbf16>
    %cst_154 = arith.constant dense<0.000000e+00> : vector<8x32xf32>
    %424 = tpu.matmul %423, %409, %cst_154 {dimension_numbers = #tpu.dot_dimension_numbers<[1], [0], [0], [1], [0, 0, 1, 1], [], []>} : vector<8x8xbf16>, vector<8x32xbf16>, vector<8x32xf32> -> vector<8x32xf32>
    %425 = arith.truncf %424 : vector<8x32xf32> to vector<8x32xbf16>
    %c0_155 = arith.constant 0 : index
    %c0_156 = arith.constant 0 : index
    %c0_157 = arith.constant 0 : index
    %426 = vector.load %arg15[%c0_155, %c0_156, %c0_157] : memref<4x32x128xbf16, #tpu.memory_space<vmem>>, vector<1x32x128xbf16>
    %427 = vector.shape_cast %426 : vector<1x32x128xbf16> to vector<32x128xbf16>
    %cst_158 = arith.constant dense<0.000000e+00> : vector<8x128xf32>
    %428 = tpu.matmul %425, %427, %cst_158 {dimension_numbers = #tpu.dot_dimension_numbers<[1], [0], [0], [1], [0, 0, 1, 1], [], []>} : vector<8x32xbf16>, vector<32x128xbf16>, vector<8x128xf32> -> vector<8x128xf32>
    %429 = arith.addf %403, %428 : vector<8x128xf32>
    %430 = vector.extract_strided_slice %295 {offsets = [8, 32], sizes = [8, 32], strides = [1, 1]} : vector<16x128xf32> to vector<8x32xf32>
    %431 = arith.truncf %430 : vector<8x32xf32> to vector<8x32xbf16>
    %432 = vector.extract_strided_slice %296 {offsets = [8, 32], sizes = [8, 32], strides = [1, 1]} : vector<16x128xf32> to vector<8x32xf32>
    %433 = arith.truncf %432 : vector<8x32xf32> to vector<8x32xbf16>
    %434 = vector.extract_strided_slice %297 {offsets = [8, 32], sizes = [8, 32], strides = [1, 1]} : vector<16x128xf32> to vector<8x32xf32>
    %435 = arith.truncf %434 : vector<8x32xf32> to vector<8x32xbf16>
    %cst_159 = arith.constant dense<0.000000e+00> : vector<8x8xf32>
    %436 = tpu.matmul %431, %433, %cst_159 {dimension_numbers = #tpu.dot_dimension_numbers<[1], [1], [0], [0], [0, 0, 1, 0], [], []>} : vector<8x32xbf16>, vector<8x32xbf16>, vector<8x8xf32> -> vector<8x8xf32>
    %cst_160 = arith.constant 0.176776692 : f32
    %437 = vector.broadcast %cst_160 : f32 to vector<8x8xf32>
    %438 = arith.mulf %436, %437 : vector<8x8xf32>
    %cst_161 = arith.constant dense<0xFF800000> : vector<8xf32>
    %439 = vector.multi_reduction <maximumf>, %438, %cst_161 [1] : vector<8x8xf32> to vector<8xf32>
    %440 = vector.shape_cast %439 : vector<8xf32> to vector<8x1xf32>
    %441 = vector.broadcast %440 : vector<8x1xf32> to vector<8x8xf32>
    %442 = arith.subf %438, %441 : vector<8x8xf32>
    %443 = math.exp %442 : vector<8x8xf32>
    %cst_162 = arith.constant dense<0.000000e+00> : vector<8xf32>
    %444 = vector.multi_reduction <add>, %443, %cst_162 [1] : vector<8x8xf32> to vector<8xf32>
    %445 = vector.shape_cast %444 : vector<8xf32> to vector<8x1xf32>
    %446 = tpu.reciprocal %445 {approx = true} : vector<8x1xf32> -> vector<8x1xf32>
    %447 = vector.broadcast %446 : vector<8x1xf32> to vector<8x8xf32>
    %448 = arith.mulf %443, %447 : vector<8x8xf32>
    %449 = arith.truncf %448 : vector<8x8xf32> to vector<8x8xbf16>
    %cst_163 = arith.constant dense<0.000000e+00> : vector<8x32xf32>
    %450 = tpu.matmul %449, %435, %cst_163 {dimension_numbers = #tpu.dot_dimension_numbers<[1], [0], [0], [1], [0, 0, 1, 1], [], []>} : vector<8x8xbf16>, vector<8x32xbf16>, vector<8x32xf32> -> vector<8x32xf32>
    %451 = arith.truncf %450 : vector<8x32xf32> to vector<8x32xbf16>
    %c1_164 = arith.constant 1 : index
    %c0_165 = arith.constant 0 : index
    %c0_166 = arith.constant 0 : index
    %452 = vector.load %arg15[%c1_164, %c0_165, %c0_166] : memref<4x32x128xbf16, #tpu.memory_space<vmem>>, vector<1x32x128xbf16>
    %453 = vector.shape_cast %452 : vector<1x32x128xbf16> to vector<32x128xbf16>
    %cst_167 = arith.constant dense<0.000000e+00> : vector<8x128xf32>
    %454 = tpu.matmul %451, %453, %cst_167 {dimension_numbers = #tpu.dot_dimension_numbers<[1], [0], [0], [1], [0, 0, 1, 1], [], []>} : vector<8x32xbf16>, vector<32x128xbf16>, vector<8x128xf32> -> vector<8x128xf32>
    %455 = arith.addf %429, %454 : vector<8x128xf32>
    %456 = vector.extract_strided_slice %295 {offsets = [8, 64], sizes = [8, 32], strides = [1, 1]} : vector<16x128xf32> to vector<8x32xf32>
    %457 = arith.truncf %456 : vector<8x32xf32> to vector<8x32xbf16>
    %458 = vector.extract_strided_slice %296 {offsets = [8, 64], sizes = [8, 32], strides = [1, 1]} : vector<16x128xf32> to vector<8x32xf32>
    %459 = arith.truncf %458 : vector<8x32xf32> to vector<8x32xbf16>
    %460 = vector.extract_strided_slice %297 {offsets = [8, 64], sizes = [8, 32], strides = [1, 1]} : vector<16x128xf32> to vector<8x32xf32>
    %461 = arith.truncf %460 : vector<8x32xf32> to vector<8x32xbf16>
    %cst_168 = arith.constant dense<0.000000e+00> : vector<8x8xf32>
    %462 = tpu.matmul %457, %459, %cst_168 {dimension_numbers = #tpu.dot_dimension_numbers<[1], [1], [0], [0], [0, 0, 1, 0], [], []>} : vector<8x32xbf16>, vector<8x32xbf16>, vector<8x8xf32> -> vector<8x8xf32>
    %cst_169 = arith.constant 0.176776692 : f32
    %463 = vector.broadcast %cst_169 : f32 to vector<8x8xf32>
    %464 = arith.mulf %462, %463 : vector<8x8xf32>
    %cst_170 = arith.constant dense<0xFF800000> : vector<8xf32>
    %465 = vector.multi_reduction <maximumf>, %464, %cst_170 [1] : vector<8x8xf32> to vector<8xf32>
    %466 = vector.shape_cast %465 : vector<8xf32> to vector<8x1xf32>
    %467 = vector.broadcast %466 : vector<8x1xf32> to vector<8x8xf32>
    %468 = arith.subf %464, %467 : vector<8x8xf32>
    %469 = math.exp %468 : vector<8x8xf32>
    %cst_171 = arith.constant dense<0.000000e+00> : vector<8xf32>
    %470 = vector.multi_reduction <add>, %469, %cst_171 [1] : vector<8x8xf32> to vector<8xf32>
    %471 = vector.shape_cast %470 : vector<8xf32> to vector<8x1xf32>
    %472 = tpu.reciprocal %471 {approx = true} : vector<8x1xf32> -> vector<8x1xf32>
    %473 = vector.broadcast %472 : vector<8x1xf32> to vector<8x8xf32>
    %474 = arith.mulf %469, %473 : vector<8x8xf32>
    %475 = arith.truncf %474 : vector<8x8xf32> to vector<8x8xbf16>
    %cst_172 = arith.constant dense<0.000000e+00> : vector<8x32xf32>
    %476 = tpu.matmul %475, %461, %cst_172 {dimension_numbers = #tpu.dot_dimension_numbers<[1], [0], [0], [1], [0, 0, 1, 1], [], []>} : vector<8x8xbf16>, vector<8x32xbf16>, vector<8x32xf32> -> vector<8x32xf32>
    %477 = arith.truncf %476 : vector<8x32xf32> to vector<8x32xbf16>
    %c2_173 = arith.constant 2 : index
    %c0_174 = arith.constant 0 : index
    %c0_175 = arith.constant 0 : index
    %478 = vector.load %arg15[%c2_173, %c0_174, %c0_175] : memref<4x32x128xbf16, #tpu.memory_space<vmem>>, vector<1x32x128xbf16>
    %479 = vector.shape_cast %478 : vector<1x32x128xbf16> to vector<32x128xbf16>
    %cst_176 = arith.constant dense<0.000000e+00> : vector<8x128xf32>
    %480 = tpu.matmul %477, %479, %cst_176 {dimension_numbers = #tpu.dot_dimension_numbers<[1], [0], [0], [1], [0, 0, 1, 1], [], []>} : vector<8x32xbf16>, vector<32x128xbf16>, vector<8x128xf32> -> vector<8x128xf32>
    %481 = arith.addf %455, %480 : vector<8x128xf32>
    %482 = vector.extract_strided_slice %295 {offsets = [8, 96], sizes = [8, 32], strides = [1, 1]} : vector<16x128xf32> to vector<8x32xf32>
    %483 = arith.truncf %482 : vector<8x32xf32> to vector<8x32xbf16>
    %484 = vector.extract_strided_slice %296 {offsets = [8, 96], sizes = [8, 32], strides = [1, 1]} : vector<16x128xf32> to vector<8x32xf32>
    %485 = arith.truncf %484 : vector<8x32xf32> to vector<8x32xbf16>
    %486 = vector.extract_strided_slice %297 {offsets = [8, 96], sizes = [8, 32], strides = [1, 1]} : vector<16x128xf32> to vector<8x32xf32>
    %487 = arith.truncf %486 : vector<8x32xf32> to vector<8x32xbf16>
    %cst_177 = arith.constant dense<0.000000e+00> : vector<8x8xf32>
    %488 = tpu.matmul %483, %485, %cst_177 {dimension_numbers = #tpu.dot_dimension_numbers<[1], [1], [0], [0], [0, 0, 1, 0], [], []>} : vector<8x32xbf16>, vector<8x32xbf16>, vector<8x8xf32> -> vector<8x8xf32>
    %cst_178 = arith.constant 0.176776692 : f32
    %489 = vector.broadcast %cst_178 : f32 to vector<8x8xf32>
    %490 = arith.mulf %488, %489 : vector<8x8xf32>
    %cst_179 = arith.constant dense<0xFF800000> : vector<8xf32>
    %491 = vector.multi_reduction <maximumf>, %490, %cst_179 [1] : vector<8x8xf32> to vector<8xf32>
    %492 = vector.shape_cast %491 : vector<8xf32> to vector<8x1xf32>
    %493 = vector.broadcast %492 : vector<8x1xf32> to vector<8x8xf32>
    %494 = arith.subf %490, %493 : vector<8x8xf32>
    %495 = math.exp %494 : vector<8x8xf32>
    %cst_180 = arith.constant dense<0.000000e+00> : vector<8xf32>
    %496 = vector.multi_reduction <add>, %495, %cst_180 [1] : vector<8x8xf32> to vector<8xf32>
    %497 = vector.shape_cast %496 : vector<8xf32> to vector<8x1xf32>
    %498 = tpu.reciprocal %497 {approx = true} : vector<8x1xf32> -> vector<8x1xf32>
    %499 = vector.broadcast %498 : vector<8x1xf32> to vector<8x8xf32>
    %500 = arith.mulf %495, %499 : vector<8x8xf32>
    %501 = arith.truncf %500 : vector<8x8xf32> to vector<8x8xbf16>
    %cst_181 = arith.constant dense<0.000000e+00> : vector<8x32xf32>
    %502 = tpu.matmul %501, %487, %cst_181 {dimension_numbers = #tpu.dot_dimension_numbers<[1], [0], [0], [1], [0, 0, 1, 1], [], []>} : vector<8x8xbf16>, vector<8x32xbf16>, vector<8x32xf32> -> vector<8x32xf32>
    %503 = arith.truncf %502 : vector<8x32xf32> to vector<8x32xbf16>
    %c3_182 = arith.constant 3 : index
    %c0_183 = arith.constant 0 : index
    %c0_184 = arith.constant 0 : index
    %504 = vector.load %arg15[%c3_182, %c0_183, %c0_184] : memref<4x32x128xbf16, #tpu.memory_space<vmem>>, vector<1x32x128xbf16>
    %505 = vector.shape_cast %504 : vector<1x32x128xbf16> to vector<32x128xbf16>
    %cst_185 = arith.constant dense<0.000000e+00> : vector<8x128xf32>
    %506 = tpu.matmul %503, %505, %cst_185 {dimension_numbers = #tpu.dot_dimension_numbers<[1], [0], [0], [1], [0, 0, 1, 1], [], []>} : vector<8x32xbf16>, vector<32x128xbf16>, vector<8x128xf32> -> vector<8x128xf32>
    %507 = arith.addf %481, %506 : vector<8x128xf32>
    %508 = tpu.concatenate %402, %507 in 0 : vector<8x128xf32>, vector<8x128xf32> -> vector<16x128xf32>
    %c0_186 = arith.constant 0 : index
    %c0_187 = arith.constant 0 : index
    %509 = vector.load %arg16[%c0_186, %c0_187] : memref<1x128xf32, #tpu.memory_space<vmem>>, vector<1x128xf32>
    %510 = vector.broadcast %509 : vector<1x128xf32> to vector<16x128xf32>
    %511 = arith.addf %508, %510 : vector<16x128xf32>
    %512 = tpu.concatenate %317, %343, %369, %395, %422, %448, %474, %500 in 1 : vector<8x8xf32>, vector<8x8xf32>, vector<8x8xf32>, vector<8x8xf32>, vector<8x8xf32>, vector<8x8xf32>, vector<8x8xf32>, vector<8x8xf32> -> vector<8x64xf32>
    %513 = arith.addf %288, %511 : vector<16x128xf32>
    %c0_188 = arith.constant 0 : index
    %c0_189 = arith.constant 0 : index
    %514 = vector.load %arg17[%c0_188, %c0_189] : memref<1x128xf32, #tpu.memory_space<vmem>>, vector<1x128xf32>
    %c0_190 = arith.constant 0 : index
    %c0_191 = arith.constant 0 : index
    %515 = vector.load %arg18[%c0_190, %c0_191] : memref<1x128xf32, #tpu.memory_space<vmem>>, vector<1x128xf32>
    %cst_192 = arith.constant dense<0.000000e+00> : vector<16xf32>
    %516 = vector.multi_reduction <add>, %513, %cst_192 [1] : vector<16x128xf32> to vector<16xf32>
    %517 = vector.shape_cast %516 : vector<16xf32> to vector<16x1xf32>
    %cst_193 = arith.constant 1.280000e+02 : f32
    %518 = vector.broadcast %cst_193 : f32 to vector<16x1xf32>
    %519 = arith.divf %517, %518 : vector<16x1xf32>
    %520 = vector.broadcast %519 : vector<16x1xf32> to vector<16x128xf32>
    %521 = arith.subf %513, %520 : vector<16x128xf32>
    %522 = arith.mulf %521, %521 : vector<16x128xf32>
    %cst_194 = arith.constant dense<0.000000e+00> : vector<16xf32>
    %523 = vector.multi_reduction <add>, %522, %cst_194 [1] : vector<16x128xf32> to vector<16xf32>
    %524 = vector.shape_cast %523 : vector<16xf32> to vector<16x1xf32>
    %cst_195 = arith.constant 1.280000e+02 : f32
    %525 = vector.broadcast %cst_195 : f32 to vector<16x1xf32>
    %526 = arith.divf %524, %525 : vector<16x1xf32>
    %527 = vector.broadcast %519 : vector<16x1xf32> to vector<16x128xf32>
    %528 = arith.subf %513, %527 : vector<16x128xf32>
    %cst_196 = arith.constant 9.99999974E-6 : f32
    %529 = vector.broadcast %cst_196 : f32 to vector<16x1xf32>
    %530 = arith.addf %526, %529 : vector<16x1xf32>
    %531 = math.rsqrt %530 : vector<16x1xf32>
    %532 = vector.broadcast %531 : vector<16x1xf32> to vector<16x128xf32>
    %533 = arith.mulf %528, %532 : vector<16x128xf32>
    %534 = vector.broadcast %514 : vector<1x128xf32> to vector<16x128xf32>
    %535 = arith.mulf %533, %534 : vector<16x128xf32>
    %536 = vector.broadcast %515 : vector<1x128xf32> to vector<16x128xf32>
    %537 = arith.addf %535, %536 : vector<16x128xf32>
    %538 = arith.truncf %537 : vector<16x128xf32> to vector<16x128xbf16>
    %c0_197 = arith.constant 0 : index
    %c0_198 = arith.constant 0 : index
    %539 = vector.load %arg19[%c0_197, %c0_198] : memref<128x512xbf16, #tpu.memory_space<vmem>>, vector<128x512xbf16>
    %cst_199 = arith.constant dense<0.000000e+00> : vector<16x512xf32>
    %540 = tpu.matmul %538, %539, %cst_199 {dimension_numbers = #tpu.dot_dimension_numbers<[1], [0], [0], [1], [0, 0, 1, 1], [], []>} : vector<16x128xbf16>, vector<128x512xbf16>, vector<16x512xf32> -> vector<16x512xf32>
    %c0_200 = arith.constant 0 : index
    %c0_201 = arith.constant 0 : index
    %541 = vector.load %arg20[%c0_200, %c0_201] : memref<1x512xf32, #tpu.memory_space<vmem>>, vector<1x512xf32>
    %542 = vector.broadcast %541 : vector<1x512xf32> to vector<16x512xf32>
    %543 = arith.addf %540, %542 : vector<16x512xf32>
    %cst_202 = arith.constant 0.000000e+00 : f32
    %544 = vector.broadcast %cst_202 : f32 to vector<16x512xf32>
    %545 = arith.maximumf %543, %544 : vector<16x512xf32>
    %546 = arith.truncf %545 : vector<16x512xf32> to vector<16x512xbf16>
    %c0_203 = arith.constant 0 : index
    %c0_204 = arith.constant 0 : index
    %547 = vector.load %arg21[%c0_203, %c0_204] : memref<512x128xbf16, #tpu.memory_space<vmem>>, vector<512x128xbf16>
    %cst_205 = arith.constant dense<0.000000e+00> : vector<16x128xf32>
    %548 = tpu.matmul %546, %547, %cst_205 {dimension_numbers = #tpu.dot_dimension_numbers<[1], [0], [0], [1], [0, 0, 1, 1], [], []>} : vector<16x512xbf16>, vector<512x128xbf16>, vector<16x128xf32> -> vector<16x128xf32>
    %c0_206 = arith.constant 0 : index
    %c0_207 = arith.constant 0 : index
    %549 = vector.load %arg22[%c0_206, %c0_207] : memref<1x128xf32, #tpu.memory_space<vmem>>, vector<1x128xf32>
    %550 = vector.broadcast %549 : vector<1x128xf32> to vector<16x128xf32>
    %551 = arith.addf %548, %550 : vector<16x128xf32>
    %552 = arith.addf %537, %551 : vector<16x128xf32>
    %c0_208 = arith.constant 0 : index
    %c0_209 = arith.constant 0 : index
    %553 = vector.load %arg23[%c0_208, %c0_209] : memref<1x128xf32, #tpu.memory_space<vmem>>, vector<1x128xf32>
    %c0_210 = arith.constant 0 : index
    %c0_211 = arith.constant 0 : index
    %554 = vector.load %arg24[%c0_210, %c0_211] : memref<1x128xf32, #tpu.memory_space<vmem>>, vector<1x128xf32>
    %cst_212 = arith.constant dense<0.000000e+00> : vector<16xf32>
    %555 = vector.multi_reduction <add>, %552, %cst_212 [1] : vector<16x128xf32> to vector<16xf32>
    %556 = vector.shape_cast %555 : vector<16xf32> to vector<16x1xf32>
    %cst_213 = arith.constant 1.280000e+02 : f32
    %557 = vector.broadcast %cst_213 : f32 to vector<16x1xf32>
    %558 = arith.divf %556, %557 : vector<16x1xf32>
    %559 = vector.broadcast %558 : vector<16x1xf32> to vector<16x128xf32>
    %560 = arith.subf %552, %559 : vector<16x128xf32>
    %561 = arith.mulf %560, %560 : vector<16x128xf32>
    %cst_214 = arith.constant dense<0.000000e+00> : vector<16xf32>
    %562 = vector.multi_reduction <add>, %561, %cst_214 [1] : vector<16x128xf32> to vector<16xf32>
    %563 = vector.shape_cast %562 : vector<16xf32> to vector<16x1xf32>
    %cst_215 = arith.constant 1.280000e+02 : f32
    %564 = vector.broadcast %cst_215 : f32 to vector<16x1xf32>
    %565 = arith.divf %563, %564 : vector<16x1xf32>
    %566 = vector.broadcast %558 : vector<16x1xf32> to vector<16x128xf32>
    %567 = arith.subf %552, %566 : vector<16x128xf32>
    %cst_216 = arith.constant 9.99999974E-6 : f32
    %568 = vector.broadcast %cst_216 : f32 to vector<16x1xf32>
    %569 = arith.addf %565, %568 : vector<16x1xf32>
    %570 = math.rsqrt %569 : vector<16x1xf32>
    %571 = vector.broadcast %570 : vector<16x1xf32> to vector<16x128xf32>
    %572 = arith.mulf %567, %571 : vector<16x128xf32>
    %573 = vector.broadcast %553 : vector<1x128xf32> to vector<16x128xf32>
    %574 = arith.mulf %572, %573 : vector<16x128xf32>
    %575 = vector.broadcast %554 : vector<1x128xf32> to vector<16x128xf32>
    %576 = arith.addf %574, %575 : vector<16x128xf32>
    %577 = vector.extract_strided_slice %576 {offsets = [0, 0], sizes = [8, 128], strides = [1, 1]} : vector<16x128xf32> to vector<8x128xf32>
    %578 = vector.extract_strided_slice %576 {offsets = [8, 0], sizes = [8, 128], strides = [1, 1]} : vector<16x128xf32> to vector<8x128xf32>
    %579 = tpu.concatenate %577, %578 in 1 : vector<8x128xf32>, vector<8x128xf32> -> vector<8x256xf32>
    %c0_217 = arith.constant 0 : index
    %c0_218 = arith.constant 0 : index
    %580 = vector.load %arg25[%c0_217, %c0_218] : memref<1x256xf32, #tpu.memory_space<vmem>>, vector<1x256xf32>
    %c0_219 = arith.constant 0 : index
    %c0_220 = arith.constant 0 : index
    %581 = vector.load %arg26[%c0_219, %c0_220] : memref<1x256xf32, #tpu.memory_space<vmem>>, vector<1x256xf32>
    %cst_221 = arith.constant dense<0.000000e+00> : vector<8xf32>
    %582 = vector.multi_reduction <add>, %579, %cst_221 [1] : vector<8x256xf32> to vector<8xf32>
    %583 = vector.shape_cast %582 : vector<8xf32> to vector<8x1xf32>
    %cst_222 = arith.constant 2.560000e+02 : f32
    %584 = vector.broadcast %cst_222 : f32 to vector<8x1xf32>
    %585 = arith.divf %583, %584 : vector<8x1xf32>
    %586 = vector.broadcast %585 : vector<8x1xf32> to vector<8x256xf32>
    %587 = arith.subf %579, %586 : vector<8x256xf32>
    %588 = arith.mulf %587, %587 : vector<8x256xf32>
    %cst_223 = arith.constant dense<0.000000e+00> : vector<8xf32>
    %589 = vector.multi_reduction <add>, %588, %cst_223 [1] : vector<8x256xf32> to vector<8xf32>
    %590 = vector.shape_cast %589 : vector<8xf32> to vector<8x1xf32>
    %cst_224 = arith.constant 2.560000e+02 : f32
    %591 = vector.broadcast %cst_224 : f32 to vector<8x1xf32>
    %592 = arith.divf %590, %591 : vector<8x1xf32>
    %593 = vector.broadcast %585 : vector<8x1xf32> to vector<8x256xf32>
    %594 = arith.subf %579, %593 : vector<8x256xf32>
    %cst_225 = arith.constant 9.99999974E-6 : f32
    %595 = vector.broadcast %cst_225 : f32 to vector<8x1xf32>
    %596 = arith.addf %592, %595 : vector<8x1xf32>
    %597 = math.rsqrt %596 : vector<8x1xf32>
    %598 = vector.broadcast %597 : vector<8x1xf32> to vector<8x256xf32>
    %599 = arith.mulf %594, %598 : vector<8x256xf32>
    %600 = vector.broadcast %580 : vector<1x256xf32> to vector<8x256xf32>
    %601 = arith.mulf %599, %600 : vector<8x256xf32>
    %602 = vector.broadcast %581 : vector<1x256xf32> to vector<8x256xf32>
    %603 = arith.addf %601, %602 : vector<8x256xf32>
    %c0_226 = arith.constant 0 : index
    %c0_227 = arith.constant 0 : index
    %604 = vector.load %arg27[%c0_226, %c0_227] : memref<8x256xf32, #tpu.memory_space<vmem>>, vector<8x256xf32>
    tpu.vector_store %arg27[%c0_226, %c0_227], %603 {strides = array<i32>} : memref<8x256xf32, #tpu.memory_space<vmem>>, vector<8x256xf32>,
    %605 = tpu.concatenate %224, %512 in 1 : vector<8x64xf32>, vector<8x64xf32> -> vector<8x128xf32>
    %c0_228 = arith.constant 0 : index
    %c0_229 = arith.constant 0 : index
    %606 = vector.load %arg28[%c0_228, %c0_229] : memref<8x128xf32, #tpu.memory_space<vmem>>, vector<8x128xf32>
    tpu.vector_store %arg28[%c0_228, %c0_229], %605 {strides = array<i32>} : memref<8x128xf32, #tpu.memory_space<vmem>>, vector<8x128xf32>,
    return
  }
}

</mosaic_0001>

<llo_original>
// kernel: tpu_custom_call.1
$region0: #{tpu_custom_call.1}
  #allocation0 [shape = 'u32[]', space=smem, size = 0x4, offset = 0x4, fixed_abs, tag = 'smem constant byte address 0x4 - core index']
  #allocation1 [shape = 'u32[144,128]{1,0:T(1,128)}', space=vmem, size = 0x12000, scoped, tag = 'internal scratch']
  %s0 = inlined_call_operand.hbm [shape: f32[16,128], index: 0, kind: input, shape index: {}]
  %s1 = inlined_call_operand.hbm [shape: bf16[128,384], index: 1, kind: input, shape index: {}]
  %s2 = inlined_call_operand.vmem [shape: f32[1,384], index: 2, kind: input, shape index: {}]
  %s3 = inlined_call_operand.hbm [shape: bf16[4,32,128], index: 3, kind: input, shape index: {}]
  %s4 = inlined_call_operand.hbm [shape: f32[1,128], index: 4, kind: input, shape index: {}]
  %s5 = inlined_call_operand.hbm [shape: f32[1,128], index: 5, kind: input, shape index: {}]
  %s6 = inlined_call_operand.vmem [shape: f32[1,128], index: 6, kind: input, shape index: {}]
  %s7 = inlined_call_operand.hbm [shape: bf16[128,512], index: 7, kind: input, shape index: {}]
  %s8 = inlined_call_operand.vmem [shape: f32[1,512], index: 8, kind: input, shape index: {}]
  %s9 = inlined_call_operand.hbm [shape: bf16[512,128], index: 9, kind: input, shape index: {}]
  %s10 = inlined_call_operand.vmem [shape: f32[1,128], index: 10, kind: input, shape index: {}]
  %s11 = inlined_call_operand.vmem [shape: f32[1,128], index: 11, kind: input, shape index: {}]
  %s12 = inlined_call_operand.vmem [shape: f32[1,128], index: 12, kind: input, shape index: {}]
  %s13 = inlined_call_operand.hbm [shape: bf16[128,384], index: 13, kind: input, shape index: {}]
  %s14 = inlined_call_operand.vmem [shape: f32[1,384], index: 14, kind: input, shape index: {}]
  %s15 = inlined_call_operand.hbm [shape: bf16[4,32,128], index: 15, kind: input, shape index: {}]
  %s16 = inlined_call_operand.vmem [shape: f32[1,128], index: 16, kind: input, shape index: {}]
  %s17 = inlined_call_operand.vmem [shape: f32[1,128], index: 17, kind: input, shape index: {}]
  %s18 = inlined_call_operand.vmem [shape: f32[1,128], index: 18, kind: input, shape index: {}]
  %s19 = inlined_call_operand.hbm [shape: bf16[128,512], index: 19, kind: input, shape index: {}]
  %s20 = inlined_call_operand.vmem [shape: f32[1,512], index: 20, kind: input, shape index: {}]
  %s21 = inlined_call_operand.hbm [shape: bf16[512,128], index: 21, kind: input, shape index: {}]
  %s22 = inlined_call_operand.vmem [shape: f32[1,128], index: 22, kind: input, shape index: {}]
  %s23 = inlined_call_operand.vmem [shape: f32[1,128], index: 23, kind: input, shape index: {}]
  %s24 = inlined_call_operand.vmem [shape: f32[1,128], index: 24, kind: input, shape index: {}]
  %s25 = inlined_call_operand.vmem [shape: f32[1,256], index: 25, kind: input, shape index: {}]
  %s26 = inlined_call_operand.vmem [shape: f32[1,256], index: 26, kind: input, shape index: {}]
  %s27 = inlined_call_operand.hbm [shape: f32[8,256], index: 27, kind: output, shape index: {0}]
  %s28 = inlined_call_operand.hbm [shape: f32[8,128], index: 28, kind: output, shape index: {1}]
  %29 = xla_tuple %s27, %s28
  %s30 = sld [smem:[#allocation0]]
  $region170: #{tpu_custom_call.1} parent=0
    _
  %s32 = ssub.s32 1, %s30
  %s33 = scalar_select 0, %s32, %s30
  $region1: #{tpu_custom_call.1} parent=0
    #allocation2 [shape = 'u8[8192]{0}', space=vmem, size = 0x2000, scoped, tag = 'input window, operand 0, single buffered']
    #allocation3 [shape = 's32[1]{0}', space=sflag, size = 0x4, scoped, tag = 'scoped memory for tpu_custom_call.1']
    #allocation4 [shape = 's32[1]{0}', space=sflag, size = 0x4, scoped, tag = 'scoped memory for tpu_custom_call.1']
    #allocation5 [shape = 'u8[98304]{0}', space=vmem, size = 0x18000, scoped, tag = 'input window, operand 1, single buffered']
    #allocation6 [shape = 's32[1]{0}', space=sflag, size = 0x4, scoped, tag = 'scoped memory for tpu_custom_call.1']
    #allocation7 [shape = 'u8[32768]{0}', space=vmem, size = 0x8000, scoped, tag = 'input window, operand 3, single buffered']
    #allocation8 [shape = 'u8[512]{0}', space=vmem, size = 0x400, scoped, tag = 'input window, operand 4, single buffered']
    #allocation9 [shape = 's32[1]{0}', space=sflag, size = 0x4, scoped, tag = 'scoped memory for tpu_custom_call.1']
    #allocation10 [shape = 'u8[512]{0}', space=vmem, size = 0x400, scoped, tag = 'input window, operand 5, single buffered']
    #allocation11 [shape = 'u8[131072]{0}', space=vmem, size = 0x20000, scoped, tag = 'input window, operand 7, single buffered']
    #allocation12 [shape = 's32[1]{0}', space=sflag, size = 0x4, scoped, tag = 'scoped memory for tpu_custom_call.1']
    #allocation13 [shape = 'u8[131072]{0}', space=vmem, size = 0x20000, scoped, tag = 'input window, operand 9, single buffered']
    #allocation14 [shape = 'u8[98304]{0}', space=vmem, size = 0x18000, scoped, tag = 'input window, operand 13, single buffered']
    #allocation15 [shape = 's32[1]{0}', space=sflag, size = 0x4, scoped, tag = 'scoped memory for tpu_custom_call.1']
    #allocation16 [shape = 'u8[32768]{0}', space=vmem, size = 0x8000, scoped, tag = 'input window, operand 15, single buffered']
    #allocation17 [shape = 'u8[131072]{0}', space=vmem, size = 0x20000, scoped, tag = 'input window, operand 19, single buffered']
    #allocation18 [shape = 's32[1]{0}', space=sflag, size = 0x4, scoped, tag = 'scoped memory for tpu_custom_call.1']
    #allocation19 [shape = 'u8[131072]{0}', space=vmem, size = 0x20000, scoped, tag = 'input window, operand 21, single buffered']
    #allocation20 [shape = 'u8[8192]{0}', space=vmem, size = 0x2000, scoped, tag = 'output window, operand 0, single buffered']
    #allocation21 [shape = 'u8[4096]{0}', space=vmem, size = 0x1000, scoped, tag = 'output window, operand 1, single buffered']
    #allocation22 [shape = 's32[1]{0}', space=sflag, size = 0x4, scoped, tag = 'scoped memory for tpu_custom_call.1']
    %34 = vsyncpa [#allocation3], 0
    %35 = vsyncpa [#allocation6], 0
    %36 = vsyncpa [#allocation9], 0
    %37 = vsyncpa [#allocation12], 0
    %38 = vsyncpa [#allocation15], 0
    %39 = vsyncpa [#allocation18], 0
    %40 = vsyncpa [#allocation4], 0
    %41 = vsyncpa [#allocation22], 0
    // Predicated region
    $region2: #{tpu_custom_call.1} parent=1 // pred_check
      _
    $region3: #{tpu_custom_call.1} parent=1 // pred_check_branch
      %43 = sbr.rel (0) target = $region5
    $region4: #{tpu_custom_call.1} parent=1 // pred_region
      %s45 = ssub.s32 256, 256
      %46 = vsyncadd [#allocation3], %s45
      %s47 = sshll.u32 [#allocation2], 4
      %s48 = int_to_ptr.vmem [resolvable:$true] %s47
      %53 = dma.hbm_to_vmem [thread:$0]  %s0, 256, %s48, [#allocation3], 128, 128, 8
    $region5: #{tpu_custom_call.1} parent=1 // pred_fallthru
      _
    // Predicated region
    $region6: #{tpu_custom_call.1} parent=1 // pred_check
      _
    $region7: #{tpu_custom_call.1} parent=1 // pred_check_branch
      %55 = sbr.rel (0) target = $region9
    $region8: #{tpu_custom_call.1} parent=1 // pred_region
      %s57 = ssub.s32 3072, 3072
      %58 = vsyncadd [#allocation6], %s57
      %s59 = sshll.u32 [#allocation5], 4
      %s60 = int_to_ptr.vmem [resolvable:$true] %s59
      %65 = dma.hbm_to_vmem [thread:$0]  %s1, 3072, %s60, [#allocation6], 192, 192, 12
    $region9: #{tpu_custom_call.1} parent=1 // pred_fallthru
      _
    // Predicated region
    $region10: #{tpu_custom_call.1} parent=1 // pred_check
      _
    $region11: #{tpu_custom_call.1} parent=1 // pred_check_branch
      %67 = sbr.rel (0) target = $region13
    $region12: #{tpu_custom_call.1} parent=1 // pred_region
      _
    $region13: #{tpu_custom_call.1} parent=1 // pred_fallthru
      _
    // Predicated region
    $region14: #{tpu_custom_call.1} parent=1 // pred_check
      _
    $region15: #{tpu_custom_call.1} parent=1 // pred_check_branch
      %69 = sbr.rel (0) target = $region17
    $region16: #{tpu_custom_call.1} parent=1 // pred_region
      %s71 = ssub.s32 1024, 1024
      %72 = vsyncadd [#allocation6], %s71
      %s73 = sshll.u32 [#allocation7], 4
      %s74 = int_to_ptr.vmem [resolvable:$true] %s73
      %79 = dma.hbm_to_vmem [thread:$0]  %s3, 1024, %s74, [#allocation6], 64, 64, 4
    $region17: #{tpu_custom_call.1} parent=1 // pred_fallthru
      _
    // Predicated region
    $region18: #{tpu_custom_call.1} parent=1 // pred_check
      _
    $region19: #{tpu_custom_call.1} parent=1 // pred_check_branch
      %81 = sbr.rel (0) target = $region21
    $region20: #{tpu_custom_call.1} parent=1 // pred_region
      %s83 = ssub.s32 16, 16
      %84 = vsyncadd [#allocation9], %s83
      %s86 = sshll.u32 [#allocation8], 4
      %s87 = int_to_ptr.vmem [resolvable:$true] %s86
      %89 = dma.hbm_to_vmem [thread:$0]  %s4, 16, %s87, [#allocation9]
    $region21: #{tpu_custom_call.1} parent=1 // pred_fallthru
      _
    // Predicated region
    $region22: #{tpu_custom_call.1} parent=1 // pred_check
      _
    $region23: #{tpu_custom_call.1} parent=1 // pred_check_branch
      %91 = sbr.rel (0) target = $region25
    $region24: #{tpu_custom_call.1} parent=1 // pred_region
      %s93 = ssub.s32 16, 16
      %94 = vsyncadd [#allocation9], %s93
      %s96 = sshll.u32 [#allocation10], 4
      %s97 = int_to_ptr.vmem [resolvable:$true] %s96
      %99 = dma.hbm_to_vmem [thread:$0]  %s5, 16, %s97, [#allocation9]
    $region25: #{tpu_custom_call.1} parent=1 // pred_fallthru
      _
    // Predicated region
    $region26: #{tpu_custom_call.1} parent=1 // pred_check
      _
    $region27: #{tpu_custom_call.1} parent=1 // pred_check_branch
      %101 = sbr.rel (0) target = $region29
    $region28: #{tpu_custom_call.1} parent=1 // pred_region
      _
    $region29: #{tpu_custom_call.1} parent=1 // pred_fallthru
      _
    // Predicated region
    $region30: #{tpu_custom_call.1} parent=1 // pred_check
      _
    $region31: #{tpu_custom_call.1} parent=1 // pred_check_branch
      %103 = sbr.rel (0) target = $region33
    $region32: #{tpu_custom_call.1} parent=1 // pred_region
      %s105 = ssub.s32 4096, 4096
      %106 = vsyncadd [#allocation12], %s105
      %s107 = sshll.u32 [#allocation11], 4
      %s108 = int_to_ptr.vmem [resolvable:$true] %s107
      %113 = dma.hbm_to_vmem [thread:$0]  %s7, 4096, %s108, [#allocation12], 256, 256, 16
    $region33: #{tpu_custom_call.1} parent=1 // pred_fallthru
      _
    // Predicated region
    $region34: #{tpu_custom_call.1} parent=1 // pred_check
      _
    $region35: #{tpu_custom_call.1} parent=1 // pred_check_branch
      %115 = sbr.rel (0) target = $region37
    $region36: #{tpu_custom_call.1} parent=1 // pred_region
      _
    $region37: #{tpu_custom_call.1} parent=1 // pred_fallthru
      _
    // Predicated region
    $region38: #{tpu_custom_call.1} parent=1 // pred_check
      _
    $region39: #{tpu_custom_call.1} parent=1 // pred_check_branch
      %117 = sbr.rel (0) target = $region41
    $region40: #{tpu_custom_call.1} parent=1 // pred_region
      %s119 = ssub.s32 4096, 4096
      %120 = vsyncadd [#allocation12], %s119
      %s121 = sshll.u32 [#allocation13], 4
      %s122 = int_to_ptr.vmem [resolvable:$true] %s121
      %127 = dma.hbm_to_vmem [thread:$0]  %s9, 4096, %s122, [#allocation12], 64, 64, 4
    $region41: #{tpu_custom_call.1} parent=1 // pred_fallthru
      _
    // Predicated region
    $region42: #{tpu_custom_call.1} parent=1 // pred_check
      _
    $region43: #{tpu_custom_call.1} parent=1 // pred_check_branch
      %129 = sbr.rel (0) target = $region45
    $region44: #{tpu_custom_call.1} parent=1 // pred_region
      _
    $region45: #{tpu_custom_call.1} parent=1 // pred_fallthru
      _
    // Predicated region
    $region46: #{tpu_custom_call.1} parent=1 // pred_check
      _
    $region47: #{tpu_custom_call.1} parent=1 // pred_check_branch
      %131 = sbr.rel (0) target = $region49
    $region48: #{tpu_custom_call.1} parent=1 // pred_region
      _
    $region49: #{tpu_custom_call.1} parent=1 // pred_fallthru
      _
    // Predicated region
    $region50: #{tpu_custom_call.1} parent=1 // pred_check
      _
    $region51: #{tpu_custom_call.1} parent=1 // pred_check_branch
      %133 = sbr.rel (0) target = $region53
    $region52: #{tpu_custom_call.1} parent=1 // pred_region
      _
    $region53: #{tpu_custom_call.1} parent=1 // pred_fallthru
      _
    // Predicated region
    $region54: #{tpu_custom_call.1} parent=1 // pred_check
      _
    $region55: #{tpu_custom_call.1} parent=1 // pred_check_branch
      %135 = sbr.rel (0) target = $region57
    $region56: #{tpu_custom_call.1} parent=1 // pred_region
      %s137 = ssub.s32 3072, 3072
      %138 = vsyncadd [#allocation15], %s137
      %s139 = sshll.u32 [#allocation14], 4
      %s140 = int_to_ptr.vmem [resolvable:$true] %s139
      %145 = dma.hbm_to_vmem [thread:$0]  %s13, 3072, %s140, [#allocation15], 192, 192, 12
    $region57: #{tpu_custom_call.1} parent=1 // pred_fallthru
      _
    // Predicated region
    $region58: #{tpu_custom_call.1} parent=1 // pred_check
      _
    $region59: #{tpu_custom_call.1} parent=1 // pred_check_branch
      %147 = sbr.rel (0) target = $region61
    $region60: #{tpu_custom_call.1} parent=1 // pred_region
      _
    $region61: #{tpu_custom_call.1} parent=1 // pred_fallthru
      _
    // Predicated region
    $region62: #{tpu_custom_call.1} parent=1 // pred_check
      _
    $region63: #{tpu_custom_call.1} parent=1 // pred_check_branch
      %149 = sbr.rel (0) target = $region65
    $region64: #{tpu_custom_call.1} parent=1 // pred_region
      %s151 = ssub.s32 1024, 1024
      %152 = vsyncadd [#allocation15], %s151
      %s153 = sshll.u32 [#allocation16], 4
      %s154 = int_to_ptr.vmem [resolvable:$true] %s153
      %159 = dma.hbm_to_vmem [thread:$0]  %s15, 1024, %s154, [#allocation15], 64, 64, 4
    $region65: #{tpu_custom_call.1} parent=1 // pred_fallthru
      _
    // Predicated region
    $region66: #{tpu_custom_call.1} parent=1 // pred_check
      _
    $region67: #{tpu_custom_call.1} parent=1 // pred_check_branch
      %161 = sbr.rel (0) target = $region69
    $region68: #{tpu_custom_call.1} parent=1 // pred_region
      _
    $region69: #{tpu_custom_call.1} parent=1 // pred_fallthru
      _
    // Predicated region
    $region70: #{tpu_custom_call.1} parent=1 // pred_check
      _
    $region71: #{tpu_custom_call.1} parent=1 // pred_check_branch
      %163 = sbr.rel (0) target = $region73
    $region72: #{tpu_custom_call.1} parent=1 // pred_region
      _
    $region73: #{tpu_custom_call.1} parent=1 // pred_fallthru
      _
    // Predicated region
    $region74: #{tpu_custom_call.1} parent=1 // pred_check
      _
    $region75: #{tpu_custom_call.1} parent=1 // pred_check_branch
      %165 = sbr.rel (0) target = $region77
    $region76: #{tpu_custom_call.1} parent=1 // pred_region
      _
    $region77: #{tpu_custom_call.1} parent=1 // pred_fallthru
      _
    // Predicated region
    $region78: #{tpu_custom_call.1} parent=1 // pred_check
      _
    $region79: #{tpu_custom_call.1} parent=1 // pred_check_branch
      %167 = sbr.rel (0) target = $region81
    $region80: #{tpu_custom_call.1} parent=1 // pred_region
      %s169 = ssub.s32 4096, 4096
      %170 = vsyncadd [#allocation18], %s169
      %s171 = sshll.u32 [#allocation17], 4
      %s172 = int_to_ptr.vmem [resolvable:$true] %s171
      %177 = dma.hbm_to_vmem [thread:$0]  %s19, 4096, %s172, [#allocation18], 256, 256, 16
    $region81: #{tpu_custom_call.1} parent=1 // pred_fallthru
      _
    // Predicated region
    $region82: #{tpu_custom_call.1} parent=1 // pred_check
      _
    $region83: #{tpu_custom_call.1} parent=1 // pred_check_branch
      %179 = sbr.rel (0) target = $region85
    $region84: #{tpu_custom_call.1} parent=1 // pred_region
      _
    $region85: #{tpu_custom_call.1} parent=1 // pred_fallthru
      _
    // Predicated region
    $region86: #{tpu_custom_call.1} parent=1 // pred_check
      _
    $region87: #{tpu_custom_call.1} parent=1 // pred_check_branch
      %181 = sbr.rel (0) target = $region89
    $region88: #{tpu_custom_call.1} parent=1 // pred_region
      %s183 = ssub.s32 4096, 4096
      %184 = vsyncadd [#allocation18], %s183
      %s185 = sshll.u32 [#allocation19], 4
      %s186 = int_to_ptr.vmem [resolvable:$true] %s185
      %191 = dma.hbm_to_vmem [thread:$0]  %s21, 4096, %s186, [#allocation18], 64, 64, 4
    $region89: #{tpu_custom_call.1} parent=1 // pred_fallthru
      _
    // Predicated region
    $region90: #{tpu_custom_call.1} parent=1 // pred_check
      _
    $region91: #{tpu_custom_call.1} parent=1 // pred_check_branch
      %193 = sbr.rel (0) target = $region93
    $region92: #{tpu_custom_call.1} parent=1 // pred_region
      _
    $region93: #{tpu_custom_call.1} parent=1 // pred_fallthru
      _
    // Predicated region
    $region94: #{tpu_custom_call.1} parent=1 // pred_check
      _
    $region95: #{tpu_custom_call.1} parent=1 // pred_check_branch
      %195 = sbr.rel (0) target = $region97
    $region96: #{tpu_custom_call.1} parent=1 // pred_region
      _
    $region97: #{tpu_custom_call.1} parent=1 // pred_fallthru
      _
    // Predicated region
    $region98: #{tpu_custom_call.1} parent=1 // pred_check
      _
    $region99: #{tpu_custom_call.1} parent=1 // pred_check_branch
      %197 = sbr.rel (0) target = $region101
    $region100: #{tpu_custom_call.1} parent=1 // pred_region
      _
    $region101: #{tpu_custom_call.1} parent=1 // pred_fallthru
      _
    // Predicated region
    $region102: #{tpu_custom_call.1} parent=1 // pred_check
      _
    $region103: #{tpu_custom_call.1} parent=1 // pred_check_branch
      %199 = sbr.rel (0) target = $region105
    $region104: #{tpu_custom_call.1} parent=1 // pred_region
      _
    $region105: #{tpu_custom_call.1} parent=1 // pred_fallthru
      _
    // Predicated region
    $region106: #{tpu_custom_call.1} parent=1 // pred_check
      _
    $region107: #{tpu_custom_call.1} parent=1 // pred_check_branch
      %201 = sbr.rel (0) target = $region109
    $region108: #{tpu_custom_call.1} parent=1 // pred_region
      _
    $region109: #{tpu_custom_call.1} parent=1 // pred_fallthru
      _
    // Predicated region
    $region110: #{tpu_custom_call.1} parent=1 // pred_check
      _
    $region111: #{tpu_custom_call.1} parent=1 // pred_check_branch
      %203 = sbr.rel (0) target = $region113
    $region112: #{tpu_custom_call.1} parent=1 // pred_region
      %204 = dma.done [#allocation3], 256
    $region113: #{tpu_custom_call.1} parent=1 // pred_fallthru
      _
    // Predicated region
    $region114: #{tpu_custom_call.1} parent=1 // pred_check
      _
    $region115: #{tpu_custom_call.1} parent=1 // pred_check_branch
      %206 = sbr.rel (0) target = $region117
    $region116: #{tpu_custom_call.1} parent=1 // pred_region
      %207 = dma.done [#allocation6], 3072
    $region117: #{tpu_custom_call.1} parent=1 // pred_fallthru
      _
    // Predicated region
    $region118: #{tpu_custom_call.1} parent=1 // pred_check
      _
    $region119: #{tpu_custom_call.1} parent=1 // pred_check_branch
      %209 = sbr.rel (0) target = $region121
    $region120: #{tpu_custom_call.1} parent=1 // pred_region
      %210 = dma.done [#allocation6], 1024
    $region121: #{tpu_custom_call.1} parent=1 // pred_fallthru
      _
    // Predicated region
    $region122: #{tpu_custom_call.1} parent=1 // pred_check
      _
    $region123: #{tpu_custom_call.1} parent=1 // pred_check_branch
      %212 = sbr.rel (0) target = $region125
    $region124: #{tpu_custom_call.1} parent=1 // pred_region
      %213 = dma.done [#allocation9], 16
    $region125: #{tpu_custom_call.1} parent=1 // pred_fallthru
      _
    // Predicated region
    $region126: #{tpu_custom_call.1} parent=1 // pred_check
      _
    $region127: #{tpu_custom_call.1} parent=1 // pred_check_branch
      %215 = sbr.rel (0) target = $region129
    $region128: #{tpu_custom_call.1} parent=1 // pred_region
      %216 = dma.done [#allocation9], 16
    $region129: #{tpu_custom_call.1} parent=1 // pred_fallthru
      _
    // Predicated region
    $region130: #{tpu_custom_call.1} parent=1 // pred_check
      _
    $region131: #{tpu_custom_call.1} parent=1 // pred_check_branch
      %218 = sbr.rel (0) target = $region133
    $region132: #{tpu_custom_call.1} parent=1 // pred_region
      %219 = dma.done [#allocation12], 4096
    $region133: #{tpu_custom_call.1} parent=1 // pred_fallthru
      _
    // Predicated region
    $region134: #{tpu_custom_call.1} parent=1 // pred_check
      _
    $region135: #{tpu_custom_call.1} parent=1 // pred_check_branch
      %221 = sbr.rel (0) target = $region137
    $region136: #{tpu_custom_call.1} parent=1 // pred_region
      %222 = dma.done [#allocation12], 4096
    $region137: #{tpu_custom_call.1} parent=1 // pred_fallthru
      _
    // Predicated region
    $region138: #{tpu_custom_call.1} parent=1 // pred_check
      _
    $region139: #{tpu_custom_call.1} parent=1 // pred_check_branch
      %224 = sbr.rel (0) target = $region141
    $region140: #{tpu_custom_call.1} parent=1 // pred_region
      %225 = dma.done [#allocation15], 3072
    $region141: #{tpu_custom_call.1} parent=1 // pred_fallthru
      _
    // Predicated region
    $region142: #{tpu_custom_call.1} parent=1 // pred_check
      _
    $region143: #{tpu_custom_call.1} parent=1 // pred_check_branch
      %227 = sbr.rel (0) target = $region145
    $region144: #{tpu_custom_call.1} parent=1 // pred_region
      %228 = dma.done [#allocation15], 1024
    $region145: #{tpu_custom_call.1} parent=1 // pred_fallthru
      _
    // Predicated region
    $region146: #{tpu_custom_call.1} parent=1 // pred_check
      _
    $region147: #{tpu_custom_call.1} parent=1 // pred_check_branch
      %230 = sbr.rel (0) target = $region149
    $region148: #{tpu_custom_call.1} parent=1 // pred_region
      %231 = dma.done [#allocation18], 4096
    $region149: #{tpu_custom_call.1} parent=1 // pred_fallthru
      _
    // Predicated region
    $region150: #{tpu_custom_call.1} parent=1 // pred_check
      _
    $region151: #{tpu_custom_call.1} parent=1 // pred_check_branch
      %233 = sbr.rel (0) target = $region153
    $region152: #{tpu_custom_call.1} parent=1 // pred_region
      %234 = dma.done [#allocation18], 4096
    $region153: #{tpu_custom_call.1} parent=1 // pred_fallthru
      _
    %v236 = vld [vmem:[#allocation2] sm:$0xff]
    %v237 = vld [vmem:[#allocation2 + $0x8] sm:$0xff]
    %v238 = vpack.c.bf16 %v237, %v236
    %v239 = vld [vmem:[#allocation5] sm:$0xff]
    %v240 = vld [vmem:[#allocation5 + $0x8] sm:$0xf]
    %v241 = vld [vmem:[#allocation5 + $0xc] sm:$0xff]
    %v242 = vld [vmem:[#allocation5 + $0x14] sm:$0xf]
    %v243 = vld [vmem:[#allocation5 + $0x18] sm:$0xff]
    %v244 = vld [vmem:[#allocation5 + $0x20] sm:$0xf]
    %v245 = vld [vmem:[#allocation5 + $0x24] sm:$0xff]
    %v246 = vld [vmem:[#allocation5 + $0x2c] sm:$0xf]
    %v247 = vld [vmem:[#allocation5 + $0x30] sm:$0xff]
    %v248 = vld [vmem:[#allocation5 + $0x38] sm:$0xf]
    %v249 = vld [vmem:[#allocation5 + $0x3c] sm:$0xff]
    %v250 = vld [vmem:[#allocation5 + $0x44] sm:$0xf]
    %v251 = vld [vmem:[#allocation5 + $0x48] sm:$0xff]
    %v252 = vld [vmem:[#allocation5 + $0x50] sm:$0xf]
    %v253 = vld [vmem:[#allocation5 + $0x54] sm:$0xff]
    %v254 = vld [vmem:[#allocation5 + $0x5c] sm:$0xf]
    %v255 = vld [vmem:[#allocation5 + $0x60] sm:$0xff]
    %v256 = vld [vmem:[#allocation5 + $0x68] sm:$0xf]
    %v257 = vld [vmem:[#allocation5 + $0x6c] sm:$0xff]
    %v258 = vld [vmem:[#allocation5 + $0x74] sm:$0xf]
    %v259 = vld [vmem:[#allocation5 + $0x78] sm:$0xff]
    %v260 = vld [vmem:[#allocation5 + $0x80] sm:$0xf]
    %v261 = vld [vmem:[#allocation5 + $0x84] sm:$0xff]
    %v262 = vld [vmem:[#allocation5 + $0x8c] sm:$0xf]
    %v263 = vld [vmem:[#allocation5 + $0x90] sm:$0xff]
    %v264 = vld [vmem:[#allocation5 + $0x98] sm:$0xf]
    %v265 = vld [vmem:[#allocation5 + $0x9c] sm:$0xff]
    %v266 = vld [vmem:[#allocation5 + $0xa4] sm:$0xf]
    %v267 = vld [vmem:[#allocation5 + $0xa8] sm:$0xff]
    %v268 = vld [vmem:[#allocation5 + $0xb0] sm:$0xf]
    %v269 = vld [vmem:[#allocation5 + $0xb4] sm:$0xff]
    %v270 = vld [vmem:[#allocation5 + $0xbc] sm:$0xf]
    %v271 = vld [vmem:[%s2] sm:$0x7]
    %v273 = vlaneseq
    %v274 = vshrl.u32 %v273, 7
    %v275 = vsub.s32 0, %v274
    %v276 = vrot.slane %v271, %v275
    %v277 = vlaneseq
    %v278 = vshrl.u32 %v277, 7
    %v279 = vsub.s32 1, %v278
    %v280 = vrot.slane %v271, %v279
    %v281 = vlaneseq
    %v282 = vshrl.u32 %v281, 7
    %v283 = vsub.s32 2, %v282
    %v284 = vrot.slane %v271, %v283
    %v320 = vunpack.c.l.b16 %v239
    %v321 = vunpack.c.h.b16 %v239
    %v322 = vunpack.c.l.b16 %v240
    %v323 = vunpack.c.l.b16 %v241
    %v324 = vunpack.c.h.b16 %v241
    %v325 = vunpack.c.l.b16 %v242
    %v326 = vunpack.c.l.b16 %v243
    %v327 = vunpack.c.h.b16 %v243
    %v328 = vunpack.c.l.b16 %v244
    %v329 = vunpack.c.l.b16 %v245
    %v330 = vunpack.c.h.b16 %v245
    %v331 = vunpack.c.l.b16 %v246
    %v332 = vunpack.c.l.b16 %v247
    %v333 = vunpack.c.h.b16 %v247
    %v334 = vunpack.c.l.b16 %v248
    %v335 = vunpack.c.l.b16 %v249
    %v336 = vunpack.c.h.b16 %v249
    %v337 = vunpack.c.l.b16 %v250
    %v338 = vunpack.c.l.b16 %v251
    %v339 = vunpack.c.h.b16 %v251
    %v340 = vunpack.c.l.b16 %v252
    %v341 = vunpack.c.l.b16 %v253
    %v342 = vunpack.c.h.b16 %v253
    %v343 = vunpack.c.l.b16 %v254
    %v344 = vunpack.c.l.b16 %v255
    %v345 = vunpack.c.h.b16 %v255
    %v346 = vunpack.c.l.b16 %v256
    %v347 = vunpack.c.l.b16 %v257
    %v348 = vunpack.c.h.b16 %v257
    %v349 = vunpack.c.l.b16 %v258
    %v350 = vunpack.c.l.b16 %v259
    %v351 = vunpack.c.h.b16 %v259
    %v352 = vunpack.c.l.b16 %v260
    %v353 = vunpack.c.l.b16 %v261
    %v354 = vunpack.c.h.b16 %v261
    %v355 = vunpack.c.l.b16 %v262
    %v356 = vunpack.c.l.b16 %v263
    %v357 = vunpack.c.h.b16 %v263
    %v358 = vunpack.c.l.b16 %v264
    %v359 = vunpack.c.l.b16 %v265
    %v360 = vunpack.c.h.b16 %v265
    %v361 = vunpack.c.l.b16 %v266
    %v362 = vunpack.c.l.b16 %v267
    %v363 = vunpack.c.h.b16 %v267
    %v364 = vunpack.c.l.b16 %v268
    %v365 = vunpack.c.l.b16 %v269
    %v366 = vunpack.c.h.b16 %v269
    %v367 = vunpack.c.l.b16 %v270
    %v368 = vpack.c.b16 %v323, %v320
    %v369 = vpack.c.b16 %v324, %v321
    %v370 = vpack.c.b16 %v325, %v322
    %v371 = vpack.c.b16 %v329, %v326
    %v372 = vpack.c.b16 %v330, %v327
    %v373 = vpack.c.b16 %v331, %v328
    %v374 = vpack.c.b16 %v335, %v332
    %v375 = vpack.c.b16 %v336, %v333
    %v376 = vpack.c.b16 %v337, %v334
    %v377 = vpack.c.b16 %v341, %v338
    %v378 = vpack.c.b16 %v342, %v339
    %v379 = vpack.c.b16 %v343, %v340
    %v380 = vpack.c.b16 %v347, %v344
    %v381 = vpack.c.b16 %v348, %v345
    %v382 = vpack.c.b16 %v349, %v346
    %v383 = vpack.c.b16 %v353, %v350
    %v384 = vpack.c.b16 %v354, %v351
    %v385 = vpack.c.b16 %v355, %v352
    %v386 = vpack.c.b16 %v359, %v356
    %v387 = vpack.c.b16 %v360, %v357
    %v388 = vpack.c.b16 %v361, %v358
    %v389 = vpack.c.b16 %v365, %v362
    %v390 = vpack.c.b16 %v366, %v363
    %v391 = vpack.c.b16 %v367, %v364
    %416 = vmatprep.subr.bf16.mxu0 %v369
    %417 = vmatpush1.bf16.msra.mxu0 %v368
    %418 = vmatprep.subr.bf16.mxu0 %v372
    %419 = vmatpush1.bf16.msra.mxu0 %v371
    %420 = vmatprep.subr.bf16.mxu0 %v375
    %421 = vmatpush1.bf16.msra.mxu0 %v374
    %422 = vmatprep.subr.bf16.mxu0 %v378
    %423 = vmatpush1.bf16.msra.mxu0 %v377
    %424 = vmatprep.subr.bf16.mxu0 %v381
    %425 = vmatpush1.bf16.msra.mxu0 %v380
    %426 = vmatprep.subr.bf16.mxu0 %v384
    %427 = vmatpush1.bf16.msra.mxu0 %v383
    %428 = vmatprep.subr.bf16.mxu0 %v387
    %429 = vmatpush1.bf16.msra.mxu0 %v386
    %430 = vmatprep.subr.bf16.mxu0 %v390
    %431 = vmatpush1.bf16.msra.mxu0 %v389
    %432 = vmatprep.subr.bf16.mxu0 0
    %433 = vmatpush1.bf16.msra.mxu0 0
    %434 = vmatprep.subr.bf16.mxu0 0
    %435 = vmatpush1.bf16.msra.mxu0 0
    %436 = vmatprep.subr.bf16.mxu0 0
    %437 = vmatpush1.bf16.msra.mxu0 0
    %438 = vmatprep.subr.bf16.mxu0 0
    %439 = vmatpush1.bf16.msra.mxu0 0
    %440 = vmatprep.subr.bf16.mxu0 0
    %441 = vmatpush1.bf16.msra.mxu0 0
    %442 = vmatprep.subr.bf16.mxu0 0
    %443 = vmatpush1.bf16.msra.mxu0 0
    %444 = vmatprep.subr.bf16.mxu0 0
    %445 = vmatpush1.bf16.msra.mxu0 0
    %446 = vmatprep.subr.bf16.mxu0 0
    %447 = vmatpush1.bf16.msra.mxu0 0
    %448 = vmatprep.mubr.bf16.mxu0 0
    %449 = vmatmul.mubr.bf16.gmra.mrb[0].mxu0 %v238
    %v450 = vpop.f32.mrb[0].mxu0
    %v451 = vadd.f32 %v276, %v450
    %v452 = vpop.f32.mrb[0].mxu0
    %v453 = vadd.f32 %v280, %v452
    %v454 = vpop.f32.mrb[0].mxu0
    %v455 = vadd.f32 %v276, %v454
    %v456 = vpop.f32.mrb[0].mxu0
    %v457 = vadd.f32 %v280, %v456
    %458 = vdwg.mxu0
    %459 = vmatprep.subr.bf16.mxu0 0
    %460 = vmatpush1.bf16.msra.mxu0 %v370
    %461 = vmatprep.subr.bf16.mxu0 0
    %462 = vmatpush1.bf16.msra.mxu0 %v373
    %463 = vmatprep.subr.bf16.mxu0 0
    %464 = vmatpush1.bf16.msra.mxu0 %v376
    %465 = vmatprep.subr.bf16.mxu0 0
    %466 = vmatpush1.bf16.msra.mxu0 %v379
    %467 = vmatprep.subr.bf16.mxu0 0
    %468 = vmatpush1.bf16.msra.mxu0 %v382
    %469 = vmatprep.subr.bf16.mxu0 0
    %470 = vmatpush1.bf16.msra.mxu0 %v385
    %471 = vmatprep.subr.bf16.mxu0 0
    %472 = vmatpush1.bf16.msra.mxu0 %v388
    %473 = vmatprep.subr.bf16.mxu0 0
    %474 = vmatpush1.bf16.msra.mxu0 %v391
    %475 = vmatprep.subr.bf16.mxu0 0
    %476 = vmatpush1.bf16.msra.mxu0 0
    %477 = vmatprep.subr.bf16.mxu0 0
    %478 = vmatpush1.bf16.msra.mxu0 0
    %479 = vmatprep.subr.bf16.mxu0 0
    %480 = vmatpush1.bf16.msra.mxu0 0
    %481 = vmatprep.subr.bf16.mxu0 0
    %482 = vmatpush1.bf16.msra.mxu0 0
    %483 = vmatprep.subr.bf16.mxu0 0
    %484 = vmatpush1.bf16.msra.mxu0 0
    %485 = vmatprep.subr.bf16.mxu0 0
    %486 = vmatpush1.bf16.msra.mxu0 0
    %487 = vmatprep.subr.bf16.mxu0 0
    %488 = vmatpush1.bf16.msra.mxu0 0
    %489 = vmatprep.subr.bf16.mxu0 0
    %490 = vmatpush1.bf16.msra.mxu0 0
    %491 = vmatprep.mubr.bf16.mxu0 0
    %492 = vmatmul.mubr.bf16.gmra.mrb[0].mxu0 %v238
    %v493 = vpop.f32.mrb[0].mxu0
    %v494 = vadd.f32 %v284, %v493
    %v495 = vpop.f32.mrb[0].mxu0
    %v496 = vpop.f32.mrb[0].mxu0
    %v497 = vadd.f32 %v284, %v496
    %v498 = vpop.f32.mrb[0].mxu0
    %499 = vdwg.mxu0
    %v500 = vpack.c.bf16 %v451, %v451
    %v501 = vpack.c.bf16 %v453, %v453
    %v502 = vpack.c.bf16 %v494, %v494
    %vm503 = vcmask 261120
    %v505 = vsel %vm503, %v500, 0
    %v508 = vsel %vm503, %v501, 0
    %510 = vmatprep.subr.bf16.mxu0 0
    %511 = vmatpush1.bf16.xpose.msra.mxu0 %v508
    %512 = vmatprep.subr.bf16.mxu0 0
    %513 = vmatpush1.bf16.xpose.msra.mxu0 0
    %514 = vmatprep.subr.bf16.mxu0 0
    %515 = vmatpush1.bf16.xpose.msra.mxu0 0
    %516 = vmatprep.subr.bf16.mxu0 0
    %517 = vmatpush1.bf16.xpose.msra.mxu0 0
    %518 = vmatprep.subr.bf16.mxu0 0
    %519 = vmatpush1.bf16.xpose.msra.mxu0 0
    %520 = vmatprep.subr.bf16.mxu0 0
    %521 = vmatpush1.bf16.xpose.msra.mxu0 0
    %522 = vmatprep.subr.bf16.mxu0 0
    %523 = vmatpush1.bf16.xpose.msra.mxu0 0
    %524 = vmatprep.subr.bf16.mxu0 0
    %525 = vmatpush1.bf16.xpose.msra.mxu0 0
    %526 = vmatprep.subr.bf16.mxu0 0
    %527 = vmatpush1.bf16.xpose.msra.mxu0 0
    %528 = vmatprep.subr.bf16.mxu0 0
    %529 = vmatpush1.bf16.xpose.msra.mxu0 0
    %530 = vmatprep.subr.bf16.mxu0 0
    %531 = vmatpush1.bf16.xpose.msra.mxu0 0
    %532 = vmatprep.subr.bf16.mxu0 0
    %533 = vmatpush1.bf16.xpose.msra.mxu0 0
    %534 = vmatprep.subr.bf16.mxu0 0
    %535 = vmatpush1.bf16.xpose.msra.mxu0 0
    %536 = vmatprep.subr.bf16.mxu0 0
    %537 = vmatpush1.bf16.xpose.msra.mxu0 0
    %538 = vmatprep.subr.bf16.mxu0 0
    %539 = vmatpush1.bf16.xpose.msra.mxu0 0
    %540 = vmatprep.subr.bf16.mxu0 0
    %541 = vmatpush1.bf16.xpose.msra.mxu0 0
    %542 = vmatprep.mubr.bf16.mxu0 0
    %543 = vmatmul.mubr.bf16.gmra.mrb[0].mxu0 %v505
    %v544 = vpop.f32.mrb[0].mxu0
    %v545 = vadd.f32 0.0, %v544
    %v546 = vpop.f32.mrb[0].mxu0
    %v547 = vpop.f32.mrb[0].mxu0
    %v548 = vpop.f32.mrb[0].mxu0
    %549 = vdwg.mxu0
    %v550 = vmul.f32 %v545, 0.17677669
    %vm551 = vcmask 64512
    %v552 = vsel %vm551, %v550, -inf
    %553 = vmax.xlane.f32.xlu0 %v552
    %v554 = vpop.xlane.xlu0 %553
    %v555 = vsub.f32 %v550, %v554
    %v556 = vmul.f32 %v555, 1.442695
    %v557 = vpow.pop %v556
    %v558 = vsel %vm551, %v557, 0.0
    %559 = vadd.xlane.f32.xlu0 %v558
    %v560 = vpop.xlane.xlu0 %559
    %v561 = vrcp.pop %v560
    %v562 = vmul.f32 %v557, %v561
    %v563 = vpack.c.bf16 %v562, %v562
    %v565 = vsel %vm551, %v563, 0
    %vm567 = vcmask 1043456
    %v569 = vsel %vm567, %v502, 0
    %571 = vmatprep.subr.bf16.mxu0 0
    %572 = vmatpush1.bf16.msra.mxu0 %v569
    %573 = vmatprep.subr.bf16.mxu0 0
    %574 = vmatpush1.bf16.msra.mxu0 0
    %575 = vmatprep.subr.bf16.mxu0 0
    %576 = vmatpush1.bf16.msra.mxu0 0
    %577 = vmatprep.subr.bf16.mxu0 0
    %578 = vmatpush1.bf16.msra.mxu0 0
    %579 = vmatprep.subr.bf16.mxu0 0
    %580 = vmatpush1.bf16.msra.mxu0 0
    %581 = vmatprep.subr.bf16.mxu0 0
    %582 = vmatpush1.bf16.msra.mxu0 0
    %583 = vmatprep.subr.bf16.mxu0 0
    %584 = vmatpush1.bf16.msra.mxu0 0
    %585 = vmatprep.subr.bf16.mxu0 0
    %586 = vmatpush1.bf16.msra.mxu0 0
    %587 = vmatprep.subr.bf16.mxu0 0
    %588 = vmatpush1.bf16.msra.mxu0 0
    %589 = vmatprep.subr.bf16.mxu0 0
    %590 = vmatpush1.bf16.msra.mxu0 0
    %591 = vmatprep.subr.bf16.mxu0 0
    %592 = vmatpush1.bf16.msra.mxu0 0
    %593 = vmatprep.subr.bf16.mxu0 0
    %594 = vmatpush1.bf16.msra.mxu0 0
    %595 = vmatprep.subr.bf16.mxu0 0
    %596 = vmatpush1.bf16.msra.mxu0 0
    %597 = vmatprep.subr.bf16.mxu0 0
    %598 = vmatpush1.bf16.msra.mxu0 0
    %599 = vmatprep.subr.bf16.mxu0 0
    %600 = vmatpush1.bf16.msra.mxu0 0
    %601 = vmatprep.subr.bf16.mxu0 0
    %602 = vmatpush1.bf16.msra.mxu0 0
    %603 = vmatprep.mubr.bf16.mxu0 0
    %604 = vmatmul.mubr.bf16.gmra.mrb[0].mxu0 %v565
    %v605 = vpop.f32.mrb[0].mxu0
    %v606 = vadd.f32 0.0, %v605
    %v607 = vpop.f32.mrb[0].mxu0
    %v608 = vpop.f32.mrb[0].mxu0
    %v609 = vpop.f32.mrb[0].mxu0
    %610 = vdwg.mxu0
    %v611 = vpack.c.bf16 %v606, %v606
    %v612 = vld [vmem:[#allocation7] sm:$0xf]
    %v613 = vld [vmem:[#allocation7 + $0x4] sm:$0xf]
    %v614 = vld [vmem:[#allocation7 + $0x8] sm:$0xf]
    %v615 = vld [vmem:[#allocation7 + $0xc] sm:$0xf]
    %617 = vrot.lane.b32.xlu0 %v500, 96
    %v618 = vpop.permute.xlu0 %617
    %620 = vrot.lane.b32.xlu0 %v501, 96
    %v621 = vpop.permute.xlu0 %620
    %v623 = vsel %vm503, %v618, 0
    %v626 = vsel %vm503, %v621, 0
    %628 = vmatprep.subr.bf16.mxu0 0
    %629 = vmatpush1.bf16.xpose.msra.mxu0 %v626
    %630 = vmatprep.subr.bf16.mxu0 0
    %631 = vmatpush1.bf16.xpose.msra.mxu0 0
    %632 = vmatprep.subr.bf16.mxu0 0
    %633 = vmatpush1.bf16.xpose.msra.mxu0 0
    %634 = vmatprep.subr.bf16.mxu0 0
    %635 = vmatpush1.bf16.xpose.msra.mxu0 0
    %636 = vmatprep.subr.bf16.mxu0 0
    %637 = vmatpush1.bf16.xpose.msra.mxu0 0
    %638 = vmatprep.subr.bf16.mxu0 0
    %639 = vmatpush1.bf16.xpose.msra.mxu0 0
    %640 = vmatprep.subr.bf16.mxu0 0
    %641 = vmatpush1.bf16.xpose.msra.mxu0 0
    %642 = vmatprep.subr.bf16.mxu0 0
    %643 = vmatpush1.bf16.xpose.msra.mxu0 0
    %644 = vmatprep.subr.bf16.mxu0 0
    %645 = vmatpush1.bf16.xpose.msra.mxu0 0
    %646 = vmatprep.subr.bf16.mxu0 0
    %647 = vmatpush1.bf16.xpose.msra.mxu0 0
    %648 = vmatprep.subr.bf16.mxu0 0
    %649 = vmatpush1.bf16.xpose.msra.mxu0 0
    %650 = vmatprep.subr.bf16.mxu0 0
    %651 = vmatpush1.bf16.xpose.msra.mxu0 0
    %652 = vmatprep.subr.bf16.mxu0 0
    %653 = vmatpush1.bf16.xpose.msra.mxu0 0
    %654 = vmatprep.subr.bf16.mxu0 0
    %655 = vmatpush1.bf16.xpose.msra.mxu0 0
    %656 = vmatprep.subr.bf16.mxu0 0
    %657 = vmatpush1.bf16.xpose.msra.mxu0 0
    %658 = vmatprep.subr.bf16.mxu0 0
    %659 = vmatpush1.bf16.xpose.msra.mxu0 0
    %660 = vmatprep.mubr.bf16.mxu0 0
    %661 = vmatmul.mubr.bf16.gmra.mrb[0].mxu0 %v623
    %v662 = vpop.f32.mrb[0].mxu0
    %v663 = vadd.f32 0.0, %v662
    %v664 = vpop.f32.mrb[0].mxu0
    %v665 = vpop.f32.mrb[0].mxu0
    %v666 = vpop.f32.mrb[0].mxu0
    %667 = vdwg.mxu0
    %v668 = vmul.f32 %v663, 0.17677669
    %v669 = vsel %vm551, %v668, -inf
    %670 = vmax.xlane.f32.xlu0 %v669
    %v671 = vpop.xlane.xlu0 %670
    %v672 = vsub.f32 %v668, %v671
    %v673 = vmul.f32 %v672, 1.442695
    %v674 = vpow.pop %v673
    %v675 = vsel %vm551, %v674, 0.0
    %676 = vadd.xlane.f32.xlu0 %v675
    %v677 = vpop.xlane.xlu0 %676
    %v678 = vrcp.pop %v677
    %v679 = vmul.f32 %v674, %v678
    %v680 = vpack.c.bf16 %v679, %v679
    %682 = vrot.lane.b32.xlu0 %v502, 96
    %v683 = vpop.permute.xlu0 %682
    %v685 = vsel %vm551, %v680, 0
    %v688 = vsel %vm567, %v683, 0
    %690 = vmatprep.subr.bf16.mxu0 0
    %691 = vmatpush1.bf16.msra.mxu0 %v688
    %692 = vmatprep.subr.bf16.mxu0 0
    %693 = vmatpush1.bf16.msra.mxu0 0
    %694 = vmatprep.subr.bf16.mxu0 0
    %695 = vmatpush1.bf16.msra.mxu0 0
    %696 = vmatprep.subr.bf16.mxu0 0
    %697 = vmatpush1.bf16.msra.mxu0 0
    %698 = vmatprep.subr.bf16.mxu0 0
    %699 = vmatpush1.bf16.msra.mxu0 0
    %700 = vmatprep.subr.bf16.mxu0 0
    %701 = vmatpush1.bf16.msra.mxu0 0
    %702 = vmatprep.subr.bf16.mxu0 0
    %703 = vmatpush1.bf16.msra.mxu0 0
    %704 = vmatprep.subr.bf16.mxu0 0
    %705 = vmatpush1.bf16.msra.mxu0 0
    %706 = vmatprep.subr.bf16.mxu0 0
    %707 = vmatpush1.bf16.msra.mxu0 0
    %708 = vmatprep.subr.bf16.mxu0 0
    %709 = vmatpush1.bf16.msra.mxu0 0
    %710 = vmatprep.subr.bf16.mxu0 0
    %711 = vmatpush1.bf16.msra.mxu0 0
    %712 = vmatprep.subr.bf16.mxu0 0
    %713 = vmatpush1.bf16.msra.mxu0 0
    %714 = vmatprep.subr.bf16.mxu0 0
    %715 = vmatpush1.bf16.msra.mxu0 0
    %716 = vmatprep.subr.bf16.mxu0 0
    %717 = vmatpush1.bf16.msra.mxu0 0
    %718 = vmatprep.subr.bf16.mxu0 0
    %719 = vmatpush1.bf16.msra.mxu0 0
    %720 = vmatprep.subr.bf16.mxu0 0
    %721 = vmatpush1.bf16.msra.mxu0 0
    %722 = vmatprep.mubr.bf16.mxu0 0
    %723 = vmatmul.mubr.bf16.gmra.mrb[0].mxu0 %v685
    %v724 = vpop.f32.mrb[0].mxu0
    %v725 = vadd.f32 0.0, %v724
    %v726 = vpop.f32.mrb[0].mxu0
    %v727 = vpop.f32.mrb[0].mxu0
    %v728 = vpop.f32.mrb[0].mxu0
    %729 = vdwg.mxu0
    %v730 = vpack.c.bf16 %v725, %v725
    %s731 = scalar_lea.vmem [#allocation7], 16
    %v732 = vld [vmem:[%s731] sm:$0xf]
    %v733 = vld [vmem:[%s731 + $0x4] sm:$0xf]
    %v734 = vld [vmem:[%s731 + $0x8] sm:$0xf]
    %v735 = vld [vmem:[%s731 + $0xc] sm:$0xf]
    %v740 = vunpack.c.l.b16 %v732
    %v741 = vunpack.c.l.b16 %v733
    %v742 = vunpack.c.l.b16 %v734
    %v743 = vunpack.c.l.b16 %v735
    %v744 = vpack.c.b16 %v741, %v740
    %v745 = vpack.c.b16 %v743, %v742
    %v749 = vsel %vm503, %v730, 0
    %751 = vmatprep.subr.bf16.mxu0 0
    %752 = vmatpush1.bf16.msra.mxu0 %v744
    %753 = vmatprep.subr.bf16.mxu0 0
    %754 = vmatpush1.bf16.msra.mxu0 %v745
    %755 = vmatprep.subr.bf16.mxu0 0
    %756 = vmatpush1.bf16.msra.mxu0 0
    %757 = vmatprep.subr.bf16.mxu0 0
    %758 = vmatpush1.bf16.msra.mxu0 0
    %759 = vmatprep.subr.bf16.mxu0 0
    %760 = vmatpush1.bf16.msra.mxu0 0
    %761 = vmatprep.subr.bf16.mxu0 0
    %762 = vmatpush1.bf16.msra.mxu0 0
    %763 = vmatprep.subr.bf16.mxu0 0
    %764 = vmatpush1.bf16.msra.mxu0 0
    %765 = vmatprep.subr.bf16.mxu0 0
    %766 = vmatpush1.bf16.msra.mxu0 0
    %767 = vmatprep.subr.bf16.mxu0 0
    %768 = vmatpush1.bf16.msra.mxu0 0
    %769 = vmatprep.subr.bf16.mxu0 0
    %770 = vmatpush1.bf16.msra.mxu0 0
    %771 = vmatprep.subr.bf16.mxu0 0
    %772 = vmatpush1.bf16.msra.mxu0 0
    %773 = vmatprep.subr.bf16.mxu0 0
    %774 = vmatpush1.bf16.msra.mxu0 0
    %775 = vmatprep.subr.bf16.mxu0 0
    %776 = vmatpush1.bf16.msra.mxu0 0
    %777 = vmatprep.subr.bf16.mxu0 0
    %778 = vmatpush1.bf16.msra.mxu0 0
    %779 = vmatprep.subr.bf16.mxu0 0
    %780 = vmatpush1.bf16.msra.mxu0 0
    %781 = vmatprep.subr.bf16.mxu0 0
    %782 = vmatpush1.bf16.msra.mxu0 0
    %783 = vmatprep.mubr.bf16.mxu0 0
    %784 = vmatmul.mubr.bf16.gmra.mrb[0].mxu0 %v749
    %v785 = vpop.f32.mrb[0].mxu0
    %v786 = vadd.f32 0.0, %v785
    %v787 = vpop.f32.mrb[0].mxu0
    %v788 = vpop.f32.mrb[0].mxu0
    %v789 = vpop.f32.mrb[0].mxu0
    %790 = vdwg.mxu0
    %v795 = vunpack.c.l.b16 %v612
    %v796 = vunpack.c.l.b16 %v613
    %v797 = vunpack.c.l.b16 %v614
    %v798 = vunpack.c.l.b16 %v615
    %v799 = vpack.c.b16 %v796, %v795
    %v800 = vpack.c.b16 %v798, %v797
    %v804 = vsel %vm503, %v611, 0
    %806 = vmatprep.subr.bf16.mxu0 0
    %807 = vmatpush1.bf16.msra.mxu0 %v799
    %808 = vmatprep.subr.bf16.mxu0 0
    %809 = vmatpush1.bf16.msra.mxu0 %v800
    %810 = vmatprep.subr.bf16.mxu0 0
    %811 = vmatpush1.bf16.msra.mxu0 0
    %812 = vmatprep.subr.bf16.mxu0 0
    %813 = vmatpush1.bf16.msra.mxu0 0
    %814 = vmatprep.subr.bf16.mxu0 0
    %815 = vmatpush1.bf16.msra.mxu0 0
    %816 = vmatprep.subr.bf16.mxu0 0
    %817 = vmatpush1.bf16.msra.mxu0 0
    %818 = vmatprep.subr.bf16.mxu0 0
    %819 = vmatpush1.bf16.msra.mxu0 0
    %820 = vmatprep.subr.bf16.mxu0 0
    %821 = vmatpush1.bf16.msra.mxu0 0
    %822 = vmatprep.subr.bf16.mxu0 0
    %823 = vmatpush1.bf16.msra.mxu0 0
    %824 = vmatprep.subr.bf16.mxu0 0
    %825 = vmatpush1.bf16.msra.mxu0 0
    %826 = vmatprep.subr.bf16.mxu0 0
    %827 = vmatpush1.bf16.msra.mxu0 0
    %828 = vmatprep.subr.bf16.mxu0 0
    %829 = vmatpush1.bf16.msra.mxu0 0
    %830 = vmatprep.subr.bf16.mxu0 0
    %831 = vmatpush1.bf16.msra.mxu0 0
    %832 = vmatprep.subr.bf16.mxu0 0
    %833 = vmatpush1.bf16.msra.mxu0 0
    %834 = vmatprep.subr.bf16.mxu0 0
    %835 = vmatpush1.bf16.msra.mxu0 0
    %836 = vmatprep.subr.bf16.mxu0 0
    %837 = vmatpush1.bf16.msra.mxu0 0
    %838 = vmatprep.mubr.bf16.mxu0 0
    %839 = vmatmul.mubr.bf16.gmra.mrb[0].mxu0 %v804
    %v840 = vpop.f32.mrb[0].mxu0
    %v841 = vadd.f32 %v786, %v840
    %v842 = vpop.f32.mrb[0].mxu0
    %v843 = vpop.f32.mrb[0].mxu0
    %v844 = vpop.f32.mrb[0].mxu0
    %845 = vdwg.mxu0
    %846 = vrot.lane.b32.xlu0 %v500, 64
    %v847 = vpop.permute.xlu0 %846
    %848 = vrot.lane.b32.xlu0 %v501, 64
    %v849 = vpop.permute.xlu0 %848
    %v851 = vsel %vm503, %v847, 0
    %v854 = vsel %vm503, %v849, 0
    %856 = vmatprep.subr.bf16.mxu0 0
    %857 = vmatpush1.bf16.xpose.msra.mxu0 %v854
    %858 = vmatprep.subr.bf16.mxu0 0
    %859 = vmatpush1.bf16.xpose.msra.mxu0 0
    %860 = vmatprep.subr.bf16.mxu0 0
    %861 = vmatpush1.bf16.xpose.msra.mxu0 0
    %862 = vmatprep.subr.bf16.mxu0 0
    %863 = vmatpush1.bf16.xpose.msra.mxu0 0
    %864 = vmatprep.subr.bf16.mxu0 0
    %865 = vmatpush1.bf16.xpose.msra.mxu0 0
    %866 = vmatprep.subr.bf16.mxu0 0
    %867 = vmatpush1.bf16.xpose.msra.mxu0 0
    %868 = vmatprep.subr.bf16.mxu0 0
    %869 = vmatpush1.bf16.xpose.msra.mxu0 0
    %870 = vmatprep.subr.bf16.mxu0 0
    %871 = vmatpush1.bf16.xpose.msra.mxu0 0
    %872 = vmatprep.subr.bf16.mxu0 0
    %873 = vmatpush1.bf16.xpose.msra.mxu0 0
    %874 = vmatprep.subr.bf16.mxu0 0
    %875 = vmatpush1.bf16.xpose.msra.mxu0 0
    %876 = vmatprep.subr.bf16.mxu0 0
    %877 = vmatpush1.bf16.xpose.msra.mxu0 0
    %878 = vmatprep.subr.bf16.mxu0 0
    %879 = vmatpush1.bf16.xpose.msra.mxu0 0
    %880 = vmatprep.subr.bf16.mxu0 0
    %881 = vmatpush1.bf16.xpose.msra.mxu0 0
    %882 = vmatprep.subr.bf16.mxu0 0
    %883 = vmatpush1.bf16.xpose.msra.mxu0 0
    %884 = vmatprep.subr.bf16.mxu0 0
    %885 = vmatpush1.bf16.xpose.msra.mxu0 0
    %886 = vmatprep.subr.bf16.mxu0 0
    %887 = vmatpush1.bf16.xpose.msra.mxu0 0
    %888 = vmatprep.mubr.bf16.mxu0 0
    %889 = vmatmul.mubr.bf16.gmra.mrb[0].mxu0 %v851
    %v890 = vpop.f32.mrb[0].mxu0
    %v891 = vadd.f32 0.0, %v890
    %v892 = vpop.f32.mrb[0].mxu0
    %v893 = vpop.f32.mrb[0].mxu0
    %v894 = vpop.f32.mrb[0].mxu0
    %895 = vdwg.mxu0
    %v896 = vmul.f32 %v891, 0.17677669
    %v897 = vsel %vm551, %v896, -inf
    %898 = vmax.xlane.f32.xlu0 %v897
    %v899 = vpop.xlane.xlu0 %898
    %v900 = vsub.f32 %v896, %v899
    %v901 = vmul.f32 %v900, 1.442695
    %v902 = vpow.pop %v901
    %v903 = vsel %vm551, %v902, 0.0
    %904 = vadd.xlane.f32.xlu0 %v903
    %v905 = vpop.xlane.xlu0 %904
    %v906 = vrcp.pop %v905
    %v907 = vmul.f32 %v902, %v906
    %v908 = vpack.c.bf16 %v907, %v907
    %909 = vrot.lane.b32.xlu0 %v502, 64
    %v910 = vpop.permute.xlu0 %909
    %v912 = vsel %vm551, %v908, 0
    %v915 = vsel %vm567, %v910, 0
    %917 = vmatprep.subr.bf16.mxu0 0
    %918 = vmatpush1.bf16.msra.mxu0 %v915
    %919 = vmatprep.subr.bf16.mxu0 0
    %920 = vmatpush1.bf16.msra.mxu0 0
    %921 = vmatprep.subr.bf16.mxu0 0
    %922 = vmatpush1.bf16.msra.mxu0 0
    %923 = vmatprep.subr.bf16.mxu0 0
    %924 = vmatpush1.bf16.msra.mxu0 0
    %925 = vmatprep.subr.bf16.mxu0 0
    %926 = vmatpush1.bf16.msra.mxu0 0
    %927 = vmatprep.subr.bf16.mxu0 0
    %928 = vmatpush1.bf16.msra.mxu0 0
    %929 = vmatprep.subr.bf16.mxu0 0
    %930 = vmatpush1.bf16.msra.mxu0 0
    %931 = vmatprep.subr.bf16.mxu0 0
    %932 = vmatpush1.bf16.msra.mxu0 0
    %933 = vmatprep.subr.bf16.mxu0 0
    %934 = vmatpush1.bf16.msra.mxu0 0
    %935 = vmatprep.subr.bf16.mxu0 0
    %936 = vmatpush1.bf16.msra.mxu0 0
    %937 = vmatprep.subr.bf16.mxu0 0
    %938 = vmatpush1.bf16.msra.mxu0 0
    %939 = vmatprep.subr.bf16.mxu0 0
    %940 = vmatpush1.bf16.msra.mxu0 0
    %941 = vmatprep.subr.bf16.mxu0 0
    %942 = vmatpush1.bf16.msra.mxu0 0
    %943 = vmatprep.subr.bf16.mxu0 0
    %944 = vmatpush1.bf16.msra.mxu0 0
    %945 = vmatprep.subr.bf16.mxu0 0
    %946 = vmatpush1.bf16.msra.mxu0 0
    %947 = vmatprep.subr.bf16.mxu0 0
    %948 = vmatpush1.bf16.msra.mxu0 0
    %949 = vmatprep.mubr.bf16.mxu0 0
    %950 = vmatmul.mubr.bf16.gmra.mrb[0].mxu0 %v912
    %v951 = vpop.f32.mrb[0].mxu0
    %v952 = vadd.f32 0.0, %v951
    %v953 = vpop.f32.mrb[0].mxu0
    %v954 = vpop.f32.mrb[0].mxu0
    %v955 = vpop.f32.mrb[0].mxu0
    %956 = vdwg.mxu0
    %v957 = vpack.c.bf16 %v952, %v952
    %s958 = scalar_lea.vmem [#allocation7], 32
    %v959 = vld [vmem:[%s958] sm:$0xf]
    %v960 = vld [vmem:[%s958 + $0x4] sm:$0xf]
    %v961 = vld [vmem:[%s958 + $0x8] sm:$0xf]
    %v962 = vld [vmem:[%s958 + $0xc] sm:$0xf]
    %v967 = vunpack.c.l.b16 %v959
    %v968 = vunpack.c.l.b16 %v960
    %v969 = vunpack.c.l.b16 %v961
    %v970 = vunpack.c.l.b16 %v962
    %v971 = vpack.c.b16 %v968, %v967
    %v972 = vpack.c.b16 %v970, %v969
    %v976 = vsel %vm503, %v957, 0
    %978 = vmatprep.subr.bf16.mxu0 0
    %979 = vmatpush1.bf16.msra.mxu0 %v971
    %980 = vmatprep.subr.bf16.mxu0 0
    %981 = vmatpush1.bf16.msra.mxu0 %v972
    %982 = vmatprep.subr.bf16.mxu0 0
    %983 = vmatpush1.bf16.msra.mxu0 0
    %984 = vmatprep.subr.bf16.mxu0 0
    %985 = vmatpush1.bf16.msra.mxu0 0
    %986 = vmatprep.subr.bf16.mxu0 0
    %987 = vmatpush1.bf16.msra.mxu0 0
    %988 = vmatprep.subr.bf16.mxu0 0
    %989 = vmatpush1.bf16.msra.mxu0 0
    %990 = vmatprep.subr.bf16.mxu0 0
    %991 = vmatpush1.bf16.msra.mxu0 0
    %992 = vmatprep.subr.bf16.mxu0 0
    %993 = vmatpush1.bf16.msra.mxu0 0
    %994 = vmatprep.subr.bf16.mxu0 0
    %995 = vmatpush1.bf16.msra.mxu0 0
    %996 = vmatprep.subr.bf16.mxu0 0
    %997 = vmatpush1.bf16.msra.mxu0 0
    %998 = vmatprep.subr.bf16.mxu0 0
    %999 = vmatpush1.bf16.msra.mxu0 0
    %1000 = vmatprep.subr.bf16.mxu0 0
    %1001 = vmatpush1.bf16.msra.mxu0 0
    %1002 = vmatprep.subr.bf16.mxu0 0
    %1003 = vmatpush1.bf16.msra.mxu0 0
    %1004 = vmatprep.subr.bf16.mxu0 0
    %1005 = vmatpush1.bf16.msra.mxu0 0
    %1006 = vmatprep.subr.bf16.mxu0 0
    %1007 = vmatpush1.bf16.msra.mxu0 0
    %1008 = vmatprep.subr.bf16.mxu0 0
    %1009 = vmatpush1.bf16.msra.mxu0 0
    %1010 = vmatprep.mubr.bf16.mxu0 0
    %1011 = vmatmul.mubr.bf16.gmra.mrb[0].mxu0 %v976
    %v1012 = vpop.f32.mrb[0].mxu0
    %v1013 = vadd.f32 0.0, %v1012
    %v1014 = vpop.f32.mrb[0].mxu0
    %v1015 = vpop.f32.mrb[0].mxu0
    %v1016 = vpop.f32.mrb[0].mxu0
    %1017 = vdwg.mxu0
    %v1018 = vadd.f32 %v841, %v1013
    %1019 = vrot.lane.b32.xlu0 %v500, 32
    %v1020 = vpop.permute.xlu0 %1019
    %1021 = vrot.lane.b32.xlu0 %v501, 32
    %v1022 = vpop.permute.xlu0 %1021
    %v1024 = vsel %vm503, %v1020, 0
    %v1027 = vsel %vm503, %v1022, 0
    %1029 = vmatprep.subr.bf16.mxu0 0
    %1030 = vmatpush1.bf16.xpose.msra.mxu0 %v1027
    %1031 = vmatprep.subr.bf16.mxu0 0
    %1032 = vmatpush1.bf16.xpose.msra.mxu0 0
    %1033 = vmatprep.subr.bf16.mxu0 0
    %1034 = vmatpush1.bf16.xpose.msra.mxu0 0
    %1035 = vmatprep.subr.bf16.mxu0 0
    %1036 = vmatpush1.bf16.xpose.msra.mxu0 0
    %1037 = vmatprep.subr.bf16.mxu0 0
    %1038 = vmatpush1.bf16.xpose.msra.mxu0 0
    %1039 = vmatprep.subr.bf16.mxu0 0
    %1040 = vmatpush1.bf16.xpose.msra.mxu0 0
    %1041 = vmatprep.subr.bf16.mxu0 0
    %1042 = vmatpush1.bf16.xpose.msra.mxu0 0
    %1043 = vmatprep.subr.bf16.mxu0 0
    %1044 = vmatpush1.bf16.xpose.msra.mxu0 0
    %1045 = vmatprep.subr.bf16.mxu0 0
    %1046 = vmatpush1.bf16.xpose.msra.mxu0 0
    %1047 = vmatprep.subr.bf16.mxu0 0
    %1048 = vmatpush1.bf16.xpose.msra.mxu0 0
    %1049 = vmatprep.subr.bf16.mxu0 0
    %1050 = vmatpush1.bf16.xpose.msra.mxu0 0
    %1051 = vmatprep.subr.bf16.mxu0 0
    %1052 = vmatpush1.bf16.xpose.msra.mxu0 0
    %1053 = vmatprep.subr.bf16.mxu0 0
    %1054 = vmatpush1.bf16.xpose.msra.mxu0 0
    %1055 = vmatprep.subr.bf16.mxu0 0
    %1056 = vmatpush1.bf16.xpose.msra.mxu0 0
    %1057 = vmatprep.subr.bf16.mxu0 0
    %1058 = vmatpush1.bf16.xpose.msra.mxu0 0
    %1059 = vmatprep.subr.bf16.mxu0 0
    %1060 = vmatpush1.bf16.xpose.msra.mxu0 0
    %1061 = vmatprep.mubr.bf16.mxu0 0
    %1062 = vmatmul.mubr.bf16.gmra.mrb[0].mxu0 %v1024
    %v1063 = vpop.f32.mrb[0].mxu0
    %v1064 = vadd.f32 0.0, %v1063
    %v1065 = vpop.f32.mrb[0].mxu0
    %v1066 = vpop.f32.mrb[0].mxu0
    %v1067 = vpop.f32.mrb[0].mxu0
    %1068 = vdwg.mxu0
    %v1069 = vmul.f32 %v1064, 0.17677669
    %v1070 = vsel %vm551, %v1069, -inf
    %1071 = vmax.xlane.f32.xlu0 %v1070
    %v1072 = vpop.xlane.xlu0 %1071
    %v1073 = vsub.f32 %v1069, %v1072
    %v1074 = vmul.f32 %v1073, 1.442695
    %v1075 = vpow.pop %v1074
    %v1076 = vsel %vm551, %v1075, 0.0
    %1077 = vadd.xlane.f32.xlu0 %v1076
    %v1078 = vpop.xlane.xlu0 %1077
    %v1079 = vrcp.pop %v1078
    %v1080 = vmul.f32 %v1075, %v1079
    %v1081 = vpack.c.bf16 %v1080, %v1080
    %1082 = vrot.lane.b32.xlu0 %v502, 32
    %v1083 = vpop.permute.xlu0 %1082
    %v1085 = vsel %vm551, %v1081, 0
    %v1088 = vsel %vm567, %v1083, 0
    %1090 = vmatprep.subr.bf16.mxu0 0
    %1091 = vmatpush1.bf16.msra.mxu0 %v1088
    %1092 = vmatprep.subr.bf16.mxu0 0
    %1093 = vmatpush1.bf16.msra.mxu0 0
    %1094 = vmatprep.subr.bf16.mxu0 0
    %1095 = vmatpush1.bf16.msra.mxu0 0
    %1096 = vmatprep.subr.bf16.mxu0 0
    %1097 = vmatpush1.bf16.msra.mxu0 0
    %1098 = vmatprep.subr.bf16.mxu0 0
    %1099 = vmatpush1.bf16.msra.mxu0 0
    %1100 = vmatprep.subr.bf16.mxu0 0
    %1101 = vmatpush1.bf16.msra.mxu0 0
    %1102 = vmatprep.subr.bf16.mxu0 0
    %1103 = vmatpush1.bf16.msra.mxu0 0
    %1104 = vmatprep.subr.bf16.mxu0 0
    %1105 = vmatpush1.bf16.msra.mxu0 0
    %1106 = vmatprep.subr.bf16.mxu0 0
    %1107 = vmatpush1.bf16.msra.mxu0 0
    %1108 = vmatprep.subr.bf16.mxu0 0
    %1109 = vmatpush1.bf16.msra.mxu0 0
    %1110 = vmatprep.subr.bf16.mxu0 0
    %1111 = vmatpush1.bf16.msra.mxu0 0
    %1112 = vmatprep.subr.bf16.mxu0 0
    %1113 = vmatpush1.bf16.msra.mxu0 0
    %1114 = vmatprep.subr.bf16.mxu0 0
    %1115 = vmatpush1.bf16.msra.mxu0 0
    %1116 = vmatprep.subr.bf16.mxu0 0
    %1117 = vmatpush1.bf16.msra.mxu0 0
    %1118 = vmatprep.subr.bf16.mxu0 0
    %1119 = vmatpush1.bf16.msra.mxu0 0
    %1120 = vmatprep.subr.bf16.mxu0 0
    %1121 = vmatpush1.bf16.msra.mxu0 0
    %1122 = vmatprep.mubr.bf16.mxu0 0
    %1123 = vmatmul.mubr.bf16.gmra.mrb[0].mxu0 %v1085
    %v1124 = vpop.f32.mrb[0].mxu0
    %v1125 = vadd.f32 0.0, %v1124
    %v1126 = vpop.f32.mrb[0].mxu0
    %v1127 = vpop.f32.mrb[0].mxu0
    %v1128 = vpop.f32.mrb[0].mxu0
    %1129 = vdwg.mxu0
    %v1130 = vpack.c.bf16 %v1125, %v1125
    %s1131 = scalar_lea.vmem [#allocation7], 48
    %v1132 = vld [vmem:[%s1131] sm:$0xf]
    %v1133 = vld [vmem:[%s1131 + $0x4] sm:$0xf]
    %v1134 = vld [vmem:[%s1131 + $0x8] sm:$0xf]
    %v1135 = vld [vmem:[%s1131 + $0xc] sm:$0xf]
    %v1140 = vunpack.c.l.b16 %v1132
    %v1141 = vunpack.c.l.b16 %v1133
    %v1142 = vunpack.c.l.b16 %v1134
    %v1143 = vunpack.c.l.b16 %v1135
    %v1144 = vpack.c.b16 %v1141, %v1140
    %v1145 = vpack.c.b16 %v1143, %v1142
    %v1149 = vsel %vm503, %v1130, 0
    %1151 = vmatprep.subr.bf16.mxu0 0
    %1152 = vmatpush1.bf16.msra.mxu0 %v1144
    %1153 = vmatprep.subr.bf16.mxu0 0
    %1154 = vmatpush1.bf16.msra.mxu0 %v1145
    %1155 = vmatprep.subr.bf16.mxu0 0
    %1156 = vmatpush1.bf16.msra.mxu0 0
    %1157 = vmatprep.subr.bf16.mxu0 0
    %1158 = vmatpush1.bf16.msra.mxu0 0
    %1159 = vmatprep.subr.bf16.mxu0 0
    %1160 = vmatpush1.bf16.msra.mxu0 0
    %1161 = vmatprep.subr.bf16.mxu0 0
    %1162 = vmatpush1.bf16.msra.mxu0 0
    %1163 = vmatprep.subr.bf16.mxu0 0
    %1164 = vmatpush1.bf16.msra.mxu0 0
    %1165 = vmatprep.subr.bf16.mxu0 0
    %1166 = vmatpush1.bf16.msra.mxu0 0
    %1167 = vmatprep.subr.bf16.mxu0 0
    %1168 = vmatpush1.bf16.msra.mxu0 0
    %1169 = vmatprep.subr.bf16.mxu0 0
    %1170 = vmatpush1.bf16.msra.mxu0 0
    %1171 = vmatprep.subr.bf16.mxu0 0
    %1172 = vmatpush1.bf16.msra.mxu0 0
    %1173 = vmatprep.subr.bf16.mxu0 0
    %1174 = vmatpush1.bf16.msra.mxu0 0
    %1175 = vmatprep.subr.bf16.mxu0 0
    %1176 = vmatpush1.bf16.msra.mxu0 0
    %1177 = vmatprep.subr.bf16.mxu0 0
    %1178 = vmatpush1.bf16.msra.mxu0 0
    %1179 = vmatprep.subr.bf16.mxu0 0
    %1180 = vmatpush1.bf16.msra.mxu0 0
    %1181 = vmatprep.subr.bf16.mxu0 0
    %1182 = vmatpush1.bf16.msra.mxu0 0
    %1183 = vmatprep.mubr.bf16.mxu0 0
    %1184 = vmatmul.mubr.bf16.gmra.mrb[0].mxu0 %v1149
    %v1185 = vpop.f32.mrb[0].mxu0
    %v1186 = vadd.f32 0.0, %v1185
    %v1187 = vpop.f32.mrb[0].mxu0
    %v1188 = vpop.f32.mrb[0].mxu0
    %v1189 = vpop.f32.mrb[0].mxu0
    %1190 = vdwg.mxu0
    %v1191 = vadd.f32 %v1018, %v1186
    %v1192 = vpack.c.bf16 %v455, %v455
    %v1193 = vpack.c.bf16 %v457, %v457
    %v1194 = vpack.c.bf16 %v497, %v497
    %v1196 = vsel %vm503, %v1192, 0
    %v1199 = vsel %vm503, %v1193, 0
    %1201 = vmatprep.subr.bf16.mxu0 0
    %1202 = vmatpush1.bf16.xpose.msra.mxu0 %v1199
    %1203 = vmatprep.subr.bf16.mxu0 0
    %1204 = vmatpush1.bf16.xpose.msra.mxu0 0
    %1205 = vmatprep.subr.bf16.mxu0 0
    %1206 = vmatpush1.bf16.xpose.msra.mxu0 0
    %1207 = vmatprep.subr.bf16.mxu0 0
    %1208 = vmatpush1.bf16.xpose.msra.mxu0 0
    %1209 = vmatprep.subr.bf16.mxu0 0
    %1210 = vmatpush1.bf16.xpose.msra.mxu0 0
    %1211 = vmatprep.subr.bf16.mxu0 0
    %1212 = vmatpush1.bf16.xpose.msra.mxu0 0
    %1213 = vmatprep.subr.bf16.mxu0 0
    %1214 = vmatpush1.bf16.xpose.msra.mxu0 0
    %1215 = vmatprep.subr.bf16.mxu0 0
    %1216 = vmatpush1.bf16.xpose.msra.mxu0 0
    %1217 = vmatprep.subr.bf16.mxu0 0
    %1218 = vmatpush1.bf16.xpose.msra.mxu0 0
    %1219 = vmatprep.subr.bf16.mxu0 0
    %1220 = vmatpush1.bf16.xpose.msra.mxu0 0
    %1221 = vmatprep.subr.bf16.mxu0 0
    %1222 = vmatpush1.bf16.xpose.msra.mxu0 0
    %1223 = vmatprep.subr.bf16.mxu0 0
    %1224 = vmatpush1.bf16.xpose.msra.mxu0 0
    %1225 = vmatprep.subr.bf16.mxu0 0
    %1226 = vmatpush1.bf16.xpose.msra.mxu0 0
    %1227 = vmatprep.subr.bf16.mxu0 0
    %1228 = vmatpush1.bf16.xpose.msra.mxu0 0
    %1229 = vmatprep.subr.bf16.mxu0 0
    %1230 = vmatpush1.bf16.xpose.msra.mxu0 0
    %1231 = vmatprep.subr.bf16.mxu0 0
    %1232 = vmatpush1.bf16.xpose.msra.mxu0 0
    %1233 = vmatprep.mubr.bf16.mxu0 0
    %1234 = vmatmul.mubr.bf16.gmra.mrb[0].mxu0 %v1196
    %v1235 = vpop.f32.mrb[0].mxu0
    %v1236 = vadd.f32 0.0, %v1235
    %v1237 = vpop.f32.mrb[0].mxu0
    %v1238 = vpop.f32.mrb[0].mxu0
    %v1239 = vpop.f32.mrb[0].mxu0
    %1240 = vdwg.mxu0
    %v1241 = vmul.f32 %v1236, 0.17677669
    %v1242 = vsel %vm551, %v1241, -inf
    %1243 = vmax.xlane.f32.xlu0 %v1242
    %v1244 = vpop.xlane.xlu0 %1243
    %v1245 = vsub.f32 %v1241, %v1244
    %v1246 = vmul.f32 %v1245, 1.442695
    %v1247 = vpow.pop %v1246
    %v1248 = vsel %vm551, %v1247, 0.0
    %1249 = vadd.xlane.f32.xlu0 %v1248
    %v1250 = vpop.xlane.xlu0 %1249
    %v1251 = vrcp.pop %v1250
    %v1252 = vmul.f32 %v1247, %v1251
    %v1253 = vpack.c.bf16 %v1252, %v1252
    %v1255 = vsel %vm551, %v1253, 0
    %v1258 = vsel %vm567, %v1194, 0
    %1260 = vmatprep.subr.bf16.mxu0 0
    %1261 = vmatpush1.bf16.msra.mxu0 %v1258
    %1262 = vmatprep.subr.bf16.mxu0 0
    %1263 = vmatpush1.bf16.msra.mxu0 0
    %1264 = vmatprep.subr.bf16.mxu0 0
    %1265 = vmatpush1.bf16.msra.mxu0 0
    %1266 = vmatprep.subr.bf16.mxu0 0
    %1267 = vmatpush1.bf16.msra.mxu0 0
    %1268 = vmatprep.subr.bf16.mxu0 0
    %1269 = vmatpush1.bf16.msra.mxu0 0
    %1270 = vmatprep.subr.bf16.mxu0 0
    %1271 = vmatpush1.bf16.msra.mxu0 0
    %1272 = vmatprep.subr.bf16.mxu0 0
    %1273 = vmatpush1.bf16.msra.mxu0 0
    %1274 = vmatprep.subr.bf16.mxu0 0
    %1275 = vmatpush1.bf16.msra.mxu0 0
    %1276 = vmatprep.subr.bf16.mxu0 0
    %1277 = vmatpush1.bf16.msra.mxu0 0
    %1278 = vmatprep.subr.bf16.mxu0 0
    %1279 = vmatpush1.bf16.msra.mxu0 0
    %1280 = vmatprep.subr.bf16.mxu0 0
    %1281 = vmatpush1.bf16.msra.mxu0 0
    %1282 = vmatprep.subr.bf16.mxu0 0
    %1283 = vmatpush1.bf16.msra.mxu0 0
    %1284 = vmatprep.subr.bf16.mxu0 0
    %1285 = vmatpush1.bf16.msra.mxu0 0
    %1286 = vmatprep.subr.bf16.mxu0 0
    %1287 = vmatpush1.bf16.msra.mxu0 0
    %1288 = vmatprep.subr.bf16.mxu0 0
    %1289 = vmatpush1.bf16.msra.mxu0 0
    %1290 = vmatprep.subr.bf16.mxu0 0
    %1291 = vmatpush1.bf16.msra.mxu0 0
    %1292 = vmatprep.mubr.bf16.mxu0 0
    %1293 = vmatmul.mubr.bf16.gmra.mrb[0].mxu0 %v1255
    %v1294 = vpop.f32.mrb[0].mxu0
    %v1295 = vadd.f32 0.0, %v1294
    %v1296 = vpop.f32.mrb[0].mxu0
    %v1297 = vpop.f32.mrb[0].mxu0
    %v1298 = vpop.f32.mrb[0].mxu0
    %1299 = vdwg.mxu0
    %v1300 = vpack.c.bf16 %v1295, %v1295
    %1302 = vrot.lane.b32.xlu0 %v1192, 96
    %v1303 = vpop.permute.xlu0 %1302
    %1305 = vrot.lane.b32.xlu0 %v1193, 96
    %v1306 = vpop.permute.xlu0 %1305
    %v1308 = vsel %vm503, %v1303, 0
    %v1311 = vsel %vm503, %v1306, 0
    %1313 = vmatprep.subr.bf16.mxu0 0
    %1314 = vmatpush1.bf16.xpose.msra.mxu0 %v1311
    %1315 = vmatprep.subr.bf16.mxu0 0
    %1316 = vmatpush1.bf16.xpose.msra.mxu0 0
    %1317 = vmatprep.subr.bf16.mxu0 0
    %1318 = vmatpush1.bf16.xpose.msra.mxu0 0
    %1319 = vmatprep.subr.bf16.mxu0 0
    %1320 = vmatpush1.bf16.xpose.msra.mxu0 0
    %1321 = vmatprep.subr.bf16.mxu0 0
    %1322 = vmatpush1.bf16.xpose.msra.mxu0 0
    %1323 = vmatprep.subr.bf16.mxu0 0
    %1324 = vmatpush1.bf16.xpose.msra.mxu0 0
    %1325 = vmatprep.subr.bf16.mxu0 0
    %1326 = vmatpush1.bf16.xpose.msra.mxu0 0
    %1327 = vmatprep.subr.bf16.mxu0 0
    %1328 = vmatpush1.bf16.xpose.msra.mxu0 0
    %1329 = vmatprep.subr.bf16.mxu0 0
    %1330 = vmatpush1.bf16.xpose.msra.mxu0 0
    %1331 = vmatprep.subr.bf16.mxu0 0
    %1332 = vmatpush1.bf16.xpose.msra.mxu0 0
    %1333 = vmatprep.subr.bf16.mxu0 0
    %1334 = vmatpush1.bf16.xpose.msra.mxu0 0
    %1335 = vmatprep.subr.bf16.mxu0 0
    %1336 = vmatpush1.bf16.xpose.msra.mxu0 0
    %1337 = vmatprep.subr.bf16.mxu0 0
    %1338 = vmatpush1.bf16.xpose.msra.mxu0 0
    %1339 = vmatprep.subr.bf16.mxu0 0
    %1340 = vmatpush1.bf16.xpose.msra.mxu0 0
    %1341 = vmatprep.subr.bf16.mxu0 0
    %1342 = vmatpush1.bf16.xpose.msra.mxu0 0
    %1343 = vmatprep.subr.bf16.mxu0 0
    %1344 = vmatpush1.bf16.xpose.msra.mxu0 0
    %1345 = vmatprep.mubr.bf16.mxu0 0
    %1346 = vmatmul.mubr.bf16.gmra.mrb[0].mxu0 %v1308
    %v1347 = vpop.f32.mrb[0].mxu0
    %v1348 = vadd.f32 0.0, %v1347
    %v1349 = vpop.f32.mrb[0].mxu0
    %v1350 = vpop.f32.mrb[0].mxu0
    %v1351 = vpop.f32.mrb[0].mxu0
    %1352 = vdwg.mxu0
    %v1353 = vmul.f32 %v1348, 0.17677669
    %v1354 = vsel %vm551, %v1353, -inf
    %1355 = vmax.xlane.f32.xlu0 %v1354
    %v1356 = vpop.xlane.xlu0 %1355
    %v1357 = vsub.f32 %v1353, %v1356
    %v1358 = vmul.f32 %v1357, 1.442695
    %v1359 = vpow.pop %v1358
    %v1360 = vsel %vm551, %v1359, 0.0
    %1361 = vadd.xlane.f32.xlu0 %v1360
    %v1362 = vpop.xlane.xlu0 %1361
    %v1363 = vrcp.pop %v1362
    %v1364 = vmul.f32 %v1359, %v1363
    %v1365 = vpack.c.bf16 %v1364, %v1364
    %1367 = vrot.lane.b32.xlu0 %v1194, 96
    %v1368 = vpop.permute.xlu0 %1367
    %v1370 = vsel %vm551, %v1365, 0
    %v1373 = vsel %vm567, %v1368, 0
    %1375 = vmatprep.subr.bf16.mxu0 0
    %1376 = vmatpush1.bf16.msra.mxu0 %v1373
    %1377 = vmatprep.subr.bf16.mxu0 0
    %1378 = vmatpush1.bf16.msra.mxu0 0
    %1379 = vmatprep.subr.bf16.mxu0 0
    %1380 = vmatpush1.bf16.msra.mxu0 0
    %1381 = vmatprep.subr.bf16.mxu0 0
    %1382 = vmatpush1.bf16.msra.mxu0 0
    %1383 = vmatprep.subr.bf16.mxu0 0
    %1384 = vmatpush1.bf16.msra.mxu0 0
    %1385 = vmatprep.subr.bf16.mxu0 0
    %1386 = vmatpush1.bf16.msra.mxu0 0
    %1387 = vmatprep.subr.bf16.mxu0 0
    %1388 = vmatpush1.bf16.msra.mxu0 0
    %1389 = vmatprep.subr.bf16.mxu0 0
    %1390 = vmatpush1.bf16.msra.mxu0 0
    %1391 = vmatprep.subr.bf16.mxu0 0
    %1392 = vmatpush1.bf16.msra.mxu0 0
    %1393 = vmatprep.subr.bf16.mxu0 0
    %1394 = vmatpush1.bf16.msra.mxu0 0
    %1395 = vmatprep.subr.bf16.mxu0 0
    %1396 = vmatpush1.bf16.msra.mxu0 0
    %1397 = vmatprep.subr.bf16.mxu0 0
    %1398 = vmatpush1.bf16.msra.mxu0 0
    %1399 = vmatprep.subr.bf16.mxu0 0
    %1400 = vmatpush1.bf16.msra.mxu0 0
    %1401 = vmatprep.subr.bf16.mxu0 0
    %1402 = vmatpush1.bf16.msra.mxu0 0
    %1403 = vmatprep.subr.bf16.mxu0 0
    %1404 = vmatpush1.bf16.msra.mxu0 0
    %1405 = vmatprep.subr.bf16.mxu0 0
    %1406 = vmatpush1.bf16.msra.mxu0 0
    %1407 = vmatprep.mubr.bf16.mxu0 0
    %1408 = vmatmul.mubr.bf16.gmra.mrb[0].mxu0 %v1370
    %v1409 = vpop.f32.mrb[0].mxu0
    %v1410 = vadd.f32 0.0, %v1409
    %v1411 = vpop.f32.mrb[0].mxu0
    %v1412 = vpop.f32.mrb[0].mxu0
    %v1413 = vpop.f32.mrb[0].mxu0
    %1414 = vdwg.mxu0
    %v1415 = vpack.c.bf16 %v1410, %v1410
    %v1417 = vsel %vm503, %v1415, 0
    %1419 = vmatprep.subr.bf16.mxu0 0
    %1420 = vmatpush1.bf16.msra.mxu0 %v744
    %1421 = vmatprep.subr.bf16.mxu0 0
    %1422 = vmatpush1.bf16.msra.mxu0 %v745
    %1423 = vmatprep.subr.bf16.mxu0 0
    %1424 = vmatpush1.bf16.msra.mxu0 0
    %1425 = vmatprep.subr.bf16.mxu0 0
    %1426 = vmatpush1.bf16.msra.mxu0 0
    %1427 = vmatprep.subr.bf16.mxu0 0
    %1428 = vmatpush1.bf16.msra.mxu0 0
    %1429 = vmatprep.subr.bf16.mxu0 0
    %1430 = vmatpush1.bf16.msra.mxu0 0
    %1431 = vmatprep.subr.bf16.mxu0 0
    %1432 = vmatpush1.bf16.msra.mxu0 0
    %1433 = vmatprep.subr.bf16.mxu0 0
    %1434 = vmatpush1.bf16.msra.mxu0 0
    %1435 = vmatprep.subr.bf16.mxu0 0
    %1436 = vmatpush1.bf16.msra.mxu0 0
    %1437 = vmatprep.subr.bf16.mxu0 0
    %1438 = vmatpush1.bf16.msra.mxu0 0
    %1439 = vmatprep.subr.bf16.mxu0 0
    %1440 = vmatpush1.bf16.msra.mxu0 0
    %1441 = vmatprep.subr.bf16.mxu0 0
    %1442 = vmatpush1.bf16.msra.mxu0 0
    %1443 = vmatprep.subr.bf16.mxu0 0
    %1444 = vmatpush1.bf16.msra.mxu0 0
    %1445 = vmatprep.subr.bf16.mxu0 0
    %1446 = vmatpush1.bf16.msra.mxu0 0
    %1447 = vmatprep.subr.bf16.mxu0 0
    %1448 = vmatpush1.bf16.msra.mxu0 0
    %1449 = vmatprep.subr.bf16.mxu0 0
    %1450 = vmatpush1.bf16.msra.mxu0 0
    %1451 = vmatprep.mubr.bf16.mxu0 0
    %1452 = vmatmul.mubr.bf16.gmra.mrb[0].mxu0 %v1417
    %v1453 = vpop.f32.mrb[0].mxu0
    %v1454 = vadd.f32 0.0, %v1453
    %v1455 = vpop.f32.mrb[0].mxu0
    %v1456 = vpop.f32.mrb[0].mxu0
    %v1457 = vpop.f32.mrb[0].mxu0
    %1458 = vdwg.mxu0
    %v1460 = vsel %vm503, %v1300, 0
    %1462 = vmatprep.subr.bf16.mxu0 0
    %1463 = vmatpush1.bf16.msra.mxu0 %v799
    %1464 = vmatprep.subr.bf16.mxu0 0
    %1465 = vmatpush1.bf16.msra.mxu0 %v800
    %1466 = vmatprep.subr.bf16.mxu0 0
    %1467 = vmatpush1.bf16.msra.mxu0 0
    %1468 = vmatprep.subr.bf16.mxu0 0
    %1469 = vmatpush1.bf16.msra.mxu0 0
    %1470 = vmatprep.subr.bf16.mxu0 0
    %1471 = vmatpush1.bf16.msra.mxu0 0
    %1472 = vmatprep.subr.bf16.mxu0 0
    %1473 = vmatpush1.bf16.msra.mxu0 0
    %1474 = vmatprep.subr.bf16.mxu0 0
    %1475 = vmatpush1.bf16.msra.mxu0 0
    %1476 = vmatprep.subr.bf16.mxu0 0
    %1477 = vmatpush1.bf16.msra.mxu0 0
    %1478 = vmatprep.subr.bf16.mxu0 0
    %1479 = vmatpush1.bf16.msra.mxu0 0
    %1480 = vmatprep.subr.bf16.mxu0 0
    %1481 = vmatpush1.bf16.msra.mxu0 0
    %1482 = vmatprep.subr.bf16.mxu0 0
    %1483 = vmatpush1.bf16.msra.mxu0 0
    %1484 = vmatprep.subr.bf16.mxu0 0
    %1485 = vmatpush1.bf16.msra.mxu0 0
    %1486 = vmatprep.subr.bf16.mxu0 0
    %1487 = vmatpush1.bf16.msra.mxu0 0
    %1488 = vmatprep.subr.bf16.mxu0 0
    %1489 = vmatpush1.bf16.msra.mxu0 0
    %1490 = vmatprep.subr.bf16.mxu0 0
    %1491 = vmatpush1.bf16.msra.mxu0 0
    %1492 = vmatprep.subr.bf16.mxu0 0
    %1493 = vmatpush1.bf16.msra.mxu0 0
    %1494 = vmatprep.mubr.bf16.mxu0 0
    %1495 = vmatmul.mubr.bf16.gmra.mrb[0].mxu0 %v1460
    %v1496 = vpop.f32.mrb[0].mxu0
    %v1497 = vadd.f32 %v1454, %v1496
    %v1498 = vpop.f32.mrb[0].mxu0
    %v1499 = vpop.f32.mrb[0].mxu0
    %v1500 = vpop.f32.mrb[0].mxu0
    %1501 = vdwg.mxu0
    %1502 = vrot.lane.b32.xlu0 %v1192, 64
    %v1503 = vpop.permute.xlu0 %1502
    %1504 = vrot.lane.b32.xlu0 %v1193, 64
    %v1505 = vpop.permute.xlu0 %1504
    %v1507 = vsel %vm503, %v1503, 0
    %v1510 = vsel %vm503, %v1505, 0
    %1512 = vmatprep.subr.bf16.mxu0 0
    %1513 = vmatpush1.bf16.xpose.msra.mxu0 %v1510
    %1514 = vmatprep.subr.bf16.mxu0 0
    %1515 = vmatpush1.bf16.xpose.msra.mxu0 0
    %1516 = vmatprep.subr.bf16.mxu0 0
    %1517 = vmatpush1.bf16.xpose.msra.mxu0 0
    %1518 = vmatprep.subr.bf16.mxu0 0
    %1519 = vmatpush1.bf16.xpose.msra.mxu0 0
    %1520 = vmatprep.subr.bf16.mxu0 0
    %1521 = vmatpush1.bf16.xpose.msra.mxu0 0
    %1522 = vmatprep.subr.bf16.mxu0 0
    %1523 = vmatpush1.bf16.xpose.msra.mxu0 0
    %1524 = vmatprep.subr.bf16.mxu0 0
    %1525 = vmatpush1.bf16.xpose.msra.mxu0 0
    %1526 = vmatprep.subr.bf16.mxu0 0
    %1527 = vmatpush1.bf16.xpose.msra.mxu0 0
    %1528 = vmatprep.subr.bf16.mxu0 0
    %1529 = vmatpush1.bf16.xpose.msra.mxu0 0
    %1530 = vmatprep.subr.bf16.mxu0 0
    %1531 = vmatpush1.bf16.xpose.msra.mxu0 0
    %1532 = vmatprep.subr.bf16.mxu0 0
    %1533 = vmatpush1.bf16.xpose.msra.mxu0 0
    %1534 = vmatprep.subr.bf16.mxu0 0
    %1535 = vmatpush1.bf16.xpose.msra.mxu0 0
    %1536 = vmatprep.subr.bf16.mxu0 0
    %1537 = vmatpush1.bf16.xpose.msra.mxu0 0
    %1538 = vmatprep.subr.bf16.mxu0 0
    %1539 = vmatpush1.bf16.xpose.msra.mxu0 0
    %1540 = vmatprep.subr.bf16.mxu0 0
    %1541 = vmatpush1.bf16.xpose.msra.mxu0 0
    %1542 = vmatprep.subr.bf16.mxu0 0
    %1543 = vmatpush1.bf16.xpose.msra.mxu0 0
    %1544 = vmatprep.mubr.bf16.mxu0 0
    %1545 = vmatmul.mubr.bf16.gmra.mrb[0].mxu0 %v1507
    %v1546 = vpop.f32.mrb[0].mxu0
    %v1547 = vadd.f32 0.0, %v1546
    %v1548 = vpop.f32.mrb[0].mxu0
    %v1549 = vpop.f32.mrb[0].mxu0
    %v1550 = vpop.f32.mrb[0].mxu0
    %1551 = vdwg.mxu0
    %v1552 = vmul.f32 %v1547, 0.17677669
    %v1553 = vsel %vm551, %v1552, -inf
    %1554 = vmax.xlane.f32.xlu0 %v1553
    %v1555 = vpop.xlane.xlu0 %1554
    %v1556 = vsub.f32 %v1552, %v1555
    %v1557 = vmul.f32 %v1556, 1.442695
    %v1558 = vpow.pop %v1557
    %v1559 = vsel %vm551, %v1558, 0.0
    %1560 = vadd.xlane.f32.xlu0 %v1559
    %v1561 = vpop.xlane.xlu0 %1560
    %v1562 = vrcp.pop %v1561
    %v1563 = vmul.f32 %v1558, %v1562
    %v1564 = vpack.c.bf16 %v1563, %v1563
    %1565 = vrot.lane.b32.xlu0 %v1194, 64
    %v1566 = vpop.permute.xlu0 %1565
    %v1568 = vsel %vm551, %v1564, 0
    %v1571 = vsel %vm567, %v1566, 0
    %1573 = vmatprep.subr.bf16.mxu0 0
    %1574 = vmatpush1.bf16.msra.mxu0 %v1571
    %1575 = vmatprep.subr.bf16.mxu0 0
    %1576 = vmatpush1.bf16.msra.mxu0 0
    %1577 = vmatprep.subr.bf16.mxu0 0
    %1578 = vmatpush1.bf16.msra.mxu0 0
    %1579 = vmatprep.subr.bf16.mxu0 0
    %1580 = vmatpush1.bf16.msra.mxu0 0
    %1581 = vmatprep.subr.bf16.mxu0 0
    %1582 = vmatpush1.bf16.msra.mxu0 0
    %1583 = vmatprep.subr.bf16.mxu0 0
    %1584 = vmatpush1.bf16.msra.mxu0 0
    %1585 = vmatprep.subr.bf16.mxu0 0
    %1586 = vmatpush1.bf16.msra.mxu0 0
    %1587 = vmatprep.subr.bf16.mxu0 0
    %1588 = vmatpush1.bf16.msra.mxu0 0
    %1589 = vmatprep.subr.bf16.mxu0 0
    %1590 = vmatpush1.bf16.msra.mxu0 0
    %1591 = vmatprep.subr.bf16.mxu0 0
    %1592 = vmatpush1.bf16.msra.mxu0 0
    %1593 = vmatprep.subr.bf16.mxu0 0
    %1594 = vmatpush1.bf16.msra.mxu0 0
    %1595 = vmatprep.subr.bf16.mxu0 0
    %1596 = vmatpush1.bf16.msra.mxu0 0
    %1597 = vmatprep.subr.bf16.mxu0 0
    %1598 = vmatpush1.bf16.msra.mxu0 0
    %1599 = vmatprep.subr.bf16.mxu0 0
    %1600 = vmatpush1.bf16.msra.mxu0 0
    %1601 = vmatprep.subr.bf16.mxu0 0
    %1602 = vmatpush1.bf16.msra.mxu0 0
    %1603 = vmatprep.subr.bf16.mxu0 0
    %1604 = vmatpush1.bf16.msra.mxu0 0
    %1605 = vmatprep.mubr.bf16.mxu0 0
    %1606 = vmatmul.mubr.bf16.gmra.mrb[0].mxu0 %v1568
    %v1607 = vpop.f32.mrb[0].mxu0
    %v1608 = vadd.f32 0.0, %v1607
    %v1609 = vpop.f32.mrb[0].mxu0
    %v1610 = vpop.f32.mrb[0].mxu0
    %v1611 = vpop.f32.mrb[0].mxu0
    %1612 = vdwg.mxu0
    %v1613 = vpack.c.bf16 %v1608, %v1608
    %v1615 = vsel %vm503, %v1613, 0
    %1617 = vmatprep.subr.bf16.mxu0 0
    %1618 = vmatpush1.bf16.msra.mxu0 %v971
    %1619 = vmatprep.subr.bf16.mxu0 0
    %1620 = vmatpush1.bf16.msra.mxu0 %v972
    %1621 = vmatprep.subr.bf16.mxu0 0
    %1622 = vmatpush1.bf16.msra.mxu0 0
    %1623 = vmatprep.subr.bf16.mxu0 0
    %1624 = vmatpush1.bf16.msra.mxu0 0
    %1625 = vmatprep.subr.bf16.mxu0 0
    %1626 = vmatpush1.bf16.msra.mxu0 0
    %1627 = vmatprep.subr.bf16.mxu0 0
    %1628 = vmatpush1.bf16.msra.mxu0 0
    %1629 = vmatprep.subr.bf16.mxu0 0
    %1630 = vmatpush1.bf16.msra.mxu0 0
    %1631 = vmatprep.subr.bf16.mxu0 0
    %1632 = vmatpush1.bf16.msra.mxu0 0
    %1633 = vmatprep.subr.bf16.mxu0 0
    %1634 = vmatpush1.bf16.msra.mxu0 0
    %1635 = vmatprep.subr.bf16.mxu0 0
    %1636 = vmatpush1.bf16.msra.mxu0 0
    %1637 = vmatprep.subr.bf16.mxu0 0
    %1638 = vmatpush1.bf16.msra.mxu0 0
    %1639 = vmatprep.subr.bf16.mxu0 0
    %1640 = vmatpush1.bf16.msra.mxu0 0
    %1641 = vmatprep.subr.bf16.mxu0 0
    %1642 = vmatpush1.bf16.msra.mxu0 0
    %1643 = vmatprep.subr.bf16.mxu0 0
    %1644 = vmatpush1.bf16.msra.mxu0 0
    %1645 = vmatprep.subr.bf16.mxu0 0
    %1646 = vmatpush1.bf16.msra.mxu0 0
    %1647 = vmatprep.subr.bf16.mxu0 0
    %1648 = vmatpush1.bf16.msra.mxu0 0
    %1649 = vmatprep.mubr.bf16.mxu0 0
    %1650 = vmatmul.mubr.bf16.gmra.mrb[0].mxu0 %v1615
    %v1651 = vpop.f32.mrb[0].mxu0
    %v1652 = vadd.f32 0.0, %v1651
    %v1653 = vpop.f32.mrb[0].mxu0
    %v1654 = vpop.f32.mrb[0].mxu0
    %v1655 = vpop.f32.mrb[0].mxu0
    %1656 = vdwg.mxu0
    %v1657 = vadd.f32 %v1497, %v1652
    %1658 = vrot.lane.b32.xlu0 %v1192, 32
    %v1659 = vpop.permute.xlu0 %1658
    %1660 = vrot.lane.b32.xlu0 %v1193, 32
    %v1661 = vpop.permute.xlu0 %1660
    %v1663 = vsel %vm503, %v1659, 0
    %v1666 = vsel %vm503, %v1661, 0
    %1668 = vmatprep.subr.bf16.mxu0 0
    %1669 = vmatpush1.bf16.xpose.msra.mxu0 %v1666
    %1670 = vmatprep.subr.bf16.mxu0 0
    %1671 = vmatpush1.bf16.xpose.msra.mxu0 0
    %1672 = vmatprep.subr.bf16.mxu0 0
    %1673 = vmatpush1.bf16.xpose.msra.mxu0 0
    %1674 = vmatprep.subr.bf16.mxu0 0
    %1675 = vmatpush1.bf16.xpose.msra.mxu0 0
    %1676 = vmatprep.subr.bf16.mxu0 0
    %1677 = vmatpush1.bf16.xpose.msra.mxu0 0
    %1678 = vmatprep.subr.bf16.mxu0 0
    %1679 = vmatpush1.bf16.xpose.msra.mxu0 0
    %1680 = vmatprep.subr.bf16.mxu0 0
    %1681 = vmatpush1.bf16.xpose.msra.mxu0 0
    %1682 = vmatprep.subr.bf16.mxu0 0
    %1683 = vmatpush1.bf16.xpose.msra.mxu0 0
    %1684 = vmatprep.subr.bf16.mxu0 0
    %1685 = vmatpush1.bf16.xpose.msra.mxu0 0
    %1686 = vmatprep.subr.bf16.mxu0 0
    %1687 = vmatpush1.bf16.xpose.msra.mxu0 0
    %1688 = vmatprep.subr.bf16.mxu0 0
    %1689 = vmatpush1.bf16.xpose.msra.mxu0 0
    %1690 = vmatprep.subr.bf16.mxu0 0
    %1691 = vmatpush1.bf16.xpose.msra.mxu0 0
    %1692 = vmatprep.subr.bf16.mxu0 0
    %1693 = vmatpush1.bf16.xpose.msra.mxu0 0
    %1694 = vmatprep.subr.bf16.mxu0 0
    %1695 = vmatpush1.bf16.xpose.msra.mxu0 0
    %1696 = vmatprep.subr.bf16.mxu0 0
    %1697 = vmatpush1.bf16.xpose.msra.mxu0 0
    %1698 = vmatprep.subr.bf16.mxu0 0
    %1699 = vmatpush1.bf16.xpose.msra.mxu0 0
    %1700 = vmatprep.mubr.bf16.mxu0 0
    %1701 = vmatmul.mubr.bf16.gmra.mrb[0].mxu0 %v1663
    %v1702 = vpop.f32.mrb[0].mxu0
    %v1703 = vadd.f32 0.0, %v1702
    %v1704 = vpop.f32.mrb[0].mxu0
    %v1705 = vpop.f32.mrb[0].mxu0
    %v1706 = vpop.f32.mrb[0].mxu0
    %1707 = vdwg.mxu0
    %v1708 = vmul.f32 %v1703, 0.17677669
    %v1709 = vsel %vm551, %v1708, -inf
    %1710 = vmax.xlane.f32.xlu0 %v1709
    %v1711 = vpop.xlane.xlu0 %1710
    %v1712 = vsub.f32 %v1708, %v1711
    %v1713 = vmul.f32 %v1712, 1.442695
    %v1714 = vpow.pop %v1713
    %v1715 = vsel %vm551, %v1714, 0.0
    %1716 = vadd.xlane.f32.xlu0 %v1715
    %v1717 = vpop.xlane.xlu0 %1716
    %v1718 = vrcp.pop %v1717
    %v1719 = vmul.f32 %v1714, %v1718
    %v1720 = vpack.c.bf16 %v1719, %v1719
    %1721 = vrot.lane.b32.xlu0 %v1194, 32
    %v1722 = vpop.permute.xlu0 %1721
    %v1724 = vsel %vm551, %v1720, 0
    %v1727 = vsel %vm567, %v1722, 0
    %1729 = vmatprep.subr.bf16.mxu0 0
    %1730 = vmatpush1.bf16.msra.mxu0 %v1727
    %1731 = vmatprep.subr.bf16.mxu0 0
    %1732 = vmatpush1.bf16.msra.mxu0 0
    %1733 = vmatprep.subr.bf16.mxu0 0
    %1734 = vmatpush1.bf16.msra.mxu0 0
    %1735 = vmatprep.subr.bf16.mxu0 0
    %1736 = vmatpush1.bf16.msra.mxu0 0
    %1737 = vmatprep.subr.bf16.mxu0 0
    %1738 = vmatpush1.bf16.msra.mxu0 0
    %1739 = vmatprep.subr.bf16.mxu0 0
    %1740 = vmatpush1.bf16.msra.mxu0 0
    %1741 = vmatprep.subr.bf16.mxu0 0
    %1742 = vmatpush1.bf16.msra.mxu0 0
    %1743 = vmatprep.subr.bf16.mxu0 0
    %1744 = vmatpush1.bf16.msra.mxu0 0
    %1745 = vmatprep.subr.bf16.mxu0 0
    %1746 = vmatpush1.bf16.msra.mxu0 0
    %1747 = vmatprep.subr.bf16.mxu0 0
    %1748 = vmatpush1.bf16.msra.mxu0 0
    %1749 = vmatprep.subr.bf16.mxu0 0
    %1750 = vmatpush1.bf16.msra.mxu0 0
    %1751 = vmatprep.subr.bf16.mxu0 0
    %1752 = vmatpush1.bf16.msra.mxu0 0
    %1753 = vmatprep.subr.bf16.mxu0 0
    %1754 = vmatpush1.bf16.msra.mxu0 0
    %1755 = vmatprep.subr.bf16.mxu0 0
    %1756 = vmatpush1.bf16.msra.mxu0 0
    %1757 = vmatprep.subr.bf16.mxu0 0
    %1758 = vmatpush1.bf16.msra.mxu0 0
    %1759 = vmatprep.subr.bf16.mxu0 0
    %1760 = vmatpush1.bf16.msra.mxu0 0
    %1761 = vmatprep.mubr.bf16.mxu0 0
    %1762 = vmatmul.mubr.bf16.gmra.mrb[0].mxu0 %v1724
    %v1763 = vpop.f32.mrb[0].mxu0
    %v1764 = vadd.f32 0.0, %v1763
    %v1765 = vpop.f32.mrb[0].mxu0
    %v1766 = vpop.f32.mrb[0].mxu0
    %v1767 = vpop.f32.mrb[0].mxu0
    %1768 = vdwg.mxu0
    %v1769 = vpack.c.bf16 %v1764, %v1764
    %v1771 = vsel %vm503, %v1769, 0
    %1773 = vmatprep.subr.bf16.mxu0 0
    %1774 = vmatpush1.bf16.msra.mxu0 %v1144
    %1775 = vmatprep.subr.bf16.mxu0 0
    %1776 = vmatpush1.bf16.msra.mxu0 %v1145
    %1777 = vmatprep.subr.bf16.mxu0 0
    %1778 = vmatpush1.bf16.msra.mxu0 0
    %1779 = vmatprep.subr.bf16.mxu0 0
    %1780 = vmatpush1.bf16.msra.mxu0 0
    %1781 = vmatprep.subr.bf16.mxu0 0
    %1782 = vmatpush1.bf16.msra.mxu0 0
    %1783 = vmatprep.subr.bf16.mxu0 0
    %1784 = vmatpush1.bf16.msra.mxu0 0
    %1785 = vmatprep.subr.bf16.mxu0 0
    %1786 = vmatpush1.bf16.msra.mxu0 0
    %1787 = vmatprep.subr.bf16.mxu0 0
    %1788 = vmatpush1.bf16.msra.mxu0 0
    %1789 = vmatprep.subr.bf16.mxu0 0
    %1790 = vmatpush1.bf16.msra.mxu0 0
    %1791 = vmatprep.subr.bf16.mxu0 0
    %1792 = vmatpush1.bf16.msra.mxu0 0
    %1793 = vmatprep.subr.bf16.mxu0 0
    %1794 = vmatpush1.bf16.msra.mxu0 0
    %1795 = vmatprep.subr.bf16.mxu0 0
    %1796 = vmatpush1.bf16.msra.mxu0 0
    %1797 = vmatprep.subr.bf16.mxu0 0
    %1798 = vmatpush1.bf16.msra.mxu0 0
    %1799 = vmatprep.subr.bf16.mxu0 0
    %1800 = vmatpush1.bf16.msra.mxu0 0
    %1801 = vmatprep.subr.bf16.mxu0 0
    %1802 = vmatpush1.bf16.msra.mxu0 0
    %1803 = vmatprep.subr.bf16.mxu0 0
    %1804 = vmatpush1.bf16.msra.mxu0 0
    %1805 = vmatprep.mubr.bf16.mxu0 0
    %1806 = vmatmul.mubr.bf16.gmra.mrb[0].mxu0 %v1771
    %v1807 = vpop.f32.mrb[0].mxu0
    %v1808 = vadd.f32 0.0, %v1807
    %v1809 = vpop.f32.mrb[0].mxu0
    %v1810 = vpop.f32.mrb[0].mxu0
    %v1811 = vpop.f32.mrb[0].mxu0
    %1812 = vdwg.mxu0
    %v1813 = vadd.f32 %v1657, %v1808
    %v1814 = vld [vmem:[#allocation8] sm:$0x1]
    %v1816 = vlaneseq
    %v1817 = vshrl.u32 %v1816, 7
    %v1818 = vsub.s32 0, %v1817
    %v1819 = vrot.slane %v1814, %v1818
    %v1821 = vadd.f32 %v1191, %v1819
    %v1822 = vadd.f32 %v1813, %v1819
    %1824 = vrot.lane.b32.xlu0 %v679, 8
    %v1825 = vpop.permute.xlu0 %1824
    %1828 = vrot.lane.b32.xlu0 %v907, 16
    %v1829 = vpop.permute.xlu0 %1828
    %1832 = vrot.lane.b32.xlu0 %v1080, 24
    %v1833 = vpop.permute.xlu0 %1832
    %1836 = vrot.lane.b32.xlu0 %v1252, 32
    %v1837 = vpop.permute.xlu0 %1836
    %1840 = vrot.lane.b32.xlu0 %v1364, 40
    %v1841 = vpop.permute.xlu0 %1840
    %1844 = vrot.lane.b32.xlu0 %v1563, 48
    %v1845 = vpop.permute.xlu0 %1844
    %1848 = vrot.lane.b32.xlu0 %v1719, 56
    %v1849 = vpop.permute.xlu0 %1848
    %v1851 = vsel %vm551, %v562, %v1825
    %vm1852 = vcmask 130048
    %v1853 = vsel %vm1852, %v1851, %v1829
    %vm1854 = vcmask 195584
    %v1855 = vsel %vm1854, %v1853, %v1833
    %v1856 = vsel %vm503, %v1855, %v1837
    %vm1857 = vcmask 326656
    %v1858 = vsel %vm1857, %v1856, %v1841
    %vm1859 = vcmask 392192
    %v1860 = vsel %vm1859, %v1858, %v1845
    %vm1861 = vcmask 457728
    %v1862 = vsel %vm1861, %v1860, %v1849
    %v1863 = vadd.f32 %v236, %v1821
    %v1864 = vadd.f32 %v237, %v1822
    %v1865 = vld [vmem:[#allocation10] sm:$0x1]
    %v1866 = vld [vmem:[%s6] sm:$0x1]
    %1867 = vadd.xlane.f32.xlu0 %v1863
    %v1868 = vpop.xlane.xlu0 %1867
    %1869 = vadd.xlane.f32.xlu0 %v1864
    %v1870 = vpop.xlane.xlu0 %1869
    %v1871 = vrcp.pop 128.0
    %v1872 = vmul.f32 %v1868, %v1871
    %v1873 = vmul.f32 %v1870, %v1871
    %v1874 = vsub.f32 %v1863, %v1872
    %v1875 = vsub.f32 %v1864, %v1873
    %v1876 = vmul.f32 %v1874, %v1874
    %v1877 = vmul.f32 %v1875, %v1875
    %1878 = vadd.xlane.f32.xlu0 %v1876
    %v1879 = vpop.xlane.xlu0 %1878
    %1880 = vadd.xlane.f32.xlu0 %v1877
    %v1881 = vpop.xlane.xlu0 %1880
    %v1882 = vmul.f32 %v1879, %v1871
    %v1883 = vmul.f32 %v1881, %v1871
    %v1884 = vadd.f32 %v1882, 1e-05
    %v1885 = vadd.f32 %v1883, 1e-05
    %v1886 = vrsqrt.pop %v1884
    %v1887 = vrsqrt.pop %v1885
    %v1888 = vmul.f32 %v1874, %v1886
    %v1889 = vmul.f32 %v1875, %v1887
    %v1891 = vlaneseq
    %v1892 = vshrl.u32 %v1891, 7
    %v1893 = vsub.s32 0, %v1892
    %v1894 = vrot.slane %v1865, %v1893
    %v1896 = vmul.f32 %v1888, %v1894
    %v1897 = vmul.f32 %v1889, %v1894
    %v1899 = vlaneseq
    %v1900 = vshrl.u32 %v1899, 7
    %v1901 = vsub.s32 0, %v1900
    %v1902 = vrot.slane %v1866, %v1901
    %v1904 = vadd.f32 %v1896, %v1902
    %v1905 = vadd.f32 %v1897, %v1902
    %v1906 = vpack.c.bf16 %v1905, %v1904
    %v1907 = vld [vmem:[#allocation11] sm:$0xff]
    %v1908 = vld [vmem:[#allocation11 + $0x8] sm:$0xff]
    %v1909 = vld [vmem:[#allocation11 + $0x10] sm:$0xff]
    %v1910 = vld [vmem:[#allocation11 + $0x18] sm:$0xff]
    %v1911 = vld [vmem:[#allocation11 + $0x20] sm:$0xff]
    %v1912 = vld [vmem:[#allocation11 + $0x28] sm:$0xff]
    %v1913 = vld [vmem:[#allocation11 + $0x30] sm:$0xff]
    %v1914 = vld [vmem:[#allocation11 + $0x38] sm:$0xff]
    %v1915 = vld [vmem:[#allocation11 + $0x40] sm:$0xff]
    %v1916 = vld [vmem:[#allocation11 + $0x48] sm:$0xff]
    %v1917 = vld [vmem:[#allocation11 + $0x50] sm:$0xff]
    %v1918 = vld [vmem:[#allocation11 + $0x58] sm:$0xff]
    %v1919 = vld [vmem:[#allocation11 + $0x60] sm:$0xff]
    %v1920 = vld [vmem:[#allocation11 + $0x68] sm:$0xff]
    %v1921 = vld [vmem:[#allocation11 + $0x70] sm:$0xff]
    %v1922 = vld [vmem:[#allocation11 + $0x78] sm:$0xff]
    %v1923 = vld [vmem:[#allocation11 + $0x80] sm:$0xff]
    %v1924 = vld [vmem:[#allocation11 + $0x88] sm:$0xff]
    %v1925 = vld [vmem:[#allocation11 + $0x90] sm:$0xff]
    %v1926 = vld [vmem:[#allocation11 + $0x98] sm:$0xff]
    %v1927 = vld [vmem:[#allocation11 + $0xa0] sm:$0xff]
    %v1928 = vld [vmem:[#allocation11 + $0xa8] sm:$0xff]
    %v1929 = vld [vmem:[#allocation11 + $0xb0] sm:$0xff]
    %v1930 = vld [vmem:[#allocation11 + $0xb8] sm:$0xff]
    %v1931 = vld [vmem:[#allocation11 + $0xc0] sm:$0xff]
    %v1932 = vld [vmem:[#allocation11 + $0xc8] sm:$0xff]
    %v1933 = vld [vmem:[#allocation11 + $0xd0] sm:$0xff]
    %v1934 = vld [vmem:[#allocation11 + $0xd8] sm:$0xff]
    %v1935 = vld [vmem:[#allocation11 + $0xe0] sm:$0xff]
    %v1936 = vld [vmem:[#allocation11 + $0xe8] sm:$0xff]
    %v1937 = vld [vmem:[#allocation11 + $0xf0] sm:$0xff]
    %v1938 = vld [vmem:[#allocation11 + $0xf8] sm:$0xff]
    %v1939 = vld [vmem:[%s8] sm:$0xf]
    %v1941 = vlaneseq
    %v1942 = vshrl.u32 %v1941, 7
    %v1943 = vsub.s32 0, %v1942
    %v1944 = vrot.slane %v1939, %v1943
    %v1945 = vlaneseq
    %v1946 = vshrl.u32 %v1945, 7
    %v1947 = vsub.s32 1, %v1946
    %v1948 = vrot.slane %v1939, %v1947
    %v1949 = vlaneseq
    %v1950 = vshrl.u32 %v1949, 7
    %v1951 = vsub.s32 2, %v1950
    %v1952 = vrot.slane %v1939, %v1951
    %v1953 = vlaneseq
    %v1954 = vshrl.u32 %v1953, 7
    %v1955 = vsub.s32 3, %v1954
    %v1956 = vrot.slane %v1939, %v1955
    %v1993 = vunpack.c.l.b16 %v1907
    %v1994 = vunpack.c.h.b16 %v1907
    %v1995 = vunpack.c.l.b16 %v1908
    %v1996 = vunpack.c.h.b16 %v1908
    %v1997 = vunpack.c.l.b16 %v1909
    %v1998 = vunpack.c.h.b16 %v1909
    %v1999 = vunpack.c.l.b16 %v1910
    %v2000 = vunpack.c.h.b16 %v1910
    %v2001 = vunpack.c.l.b16 %v1911
    %v2002 = vunpack.c.h.b16 %v1911
    %v2003 = vunpack.c.l.b16 %v1912
    %v2004 = vunpack.c.h.b16 %v1912
    %v2005 = vunpack.c.l.b16 %v1913
    %v2006 = vunpack.c.h.b16 %v1913
    %v2007 = vunpack.c.l.b16 %v1914
    %v2008 = vunpack.c.h.b16 %v1914
    %v2009 = vunpack.c.l.b16 %v1915
    %v2010 = vunpack.c.h.b16 %v1915
    %v2011 = vunpack.c.l.b16 %v1916
    %v2012 = vunpack.c.h.b16 %v1916
    %v2013 = vunpack.c.l.b16 %v1917
    %v2014 = vunpack.c.h.b16 %v1917
    %v2015 = vunpack.c.l.b16 %v1918
    %v2016 = vunpack.c.h.b16 %v1918
    %v2017 = vunpack.c.l.b16 %v1919
    %v2018 = vunpack.c.h.b16 %v1919
    %v2019 = vunpack.c.l.b16 %v1920
    %v2020 = vunpack.c.h.b16 %v1920
    %v2021 = vunpack.c.l.b16 %v1921
    %v2022 = vunpack.c.h.b16 %v1921
    %v2023 = vunpack.c.l.b16 %v1922
    %v2024 = vunpack.c.h.b16 %v1922
    %v2025 = vunpack.c.l.b16 %v1923
    %v2026 = vunpack.c.h.b16 %v1923
    %v2027 = vunpack.c.l.b16 %v1924
    %v2028 = vunpack.c.h.b16 %v1924
    %v2029 = vunpack.c.l.b16 %v1925
    %v2030 = vunpack.c.h.b16 %v1925
    %v2031 = vunpack.c.l.b16 %v1926
    %v2032 = vunpack.c.h.b16 %v1926
    %v2033 = vunpack.c.l.b16 %v1927
    %v2034 = vunpack.c.h.b16 %v1927
    %v2035 = vunpack.c.l.b16 %v1928
    %v2036 = vunpack.c.h.b16 %v1928
    %v2037 = vunpack.c.l.b16 %v1929
    %v2038 = vunpack.c.h.b16 %v1929
    %v2039 = vunpack.c.l.b16 %v1930
    %v2040 = vunpack.c.h.b16 %v1930
    %v2041 = vunpack.c.l.b16 %v1931
    %v2042 = vunpack.c.h.b16 %v1931
    %v2043 = vunpack.c.l.b16 %v1932
    %v2044 = vunpack.c.h.b16 %v1932
    %v2045 = vunpack.c.l.b16 %v1933
    %v2046 = vunpack.c.h.b16 %v1933
    %v2047 = vunpack.c.l.b16 %v1934
    %v2048 = vunpack.c.h.b16 %v1934
    %v2049 = vunpack.c.l.b16 %v1935
    %v2050 = vunpack.c.h.b16 %v1935
    %v2051 = vunpack.c.l.b16 %v1936
    %v2052 = vunpack.c.h.b16 %v1936
    %v2053 = vunpack.c.l.b16 %v1937
    %v2054 = vunpack.c.h.b16 %v1937
    %v2055 = vunpack.c.l.b16 %v1938
    %v2056 = vunpack.c.h.b16 %v1938
    %v2057 = vpack.c.b16 %v1997, %v1993
    %v2058 = vpack.c.b16 %v1998, %v1994
    %v2059 = vpack.c.b16 %v1999, %v1995
    %v2060 = vpack.c.b16 %v2000, %v1996
    %v2061 = vpack.c.b16 %v2005, %v2001
    %v2062 = vpack.c.b16 %v2006, %v2002
    %v2063 = vpack.c.b16 %v2007, %v2003
    %v2064 = vpack.c.b16 %v2008, %v2004
    %v2065 = vpack.c.b16 %v2013, %v2009
    %v2066 = vpack.c.b16 %v2014, %v2010
    %v2067 = vpack.c.b16 %v2015, %v2011
    %v2068 = vpack.c.b16 %v2016, %v2012
    %v2069 = vpack.c.b16 %v2021, %v2017
    %v2070 = vpack.c.b16 %v2022, %v2018
    %v2071 = vpack.c.b16 %v2023, %v2019
    %v2072 = vpack.c.b16 %v2024, %v2020
    %v2073 = vpack.c.b16 %v2029, %v2025
    %v2074 = vpack.c.b16 %v2030, %v2026
    %v2075 = vpack.c.b16 %v2031, %v2027
    %v2076 = vpack.c.b16 %v2032, %v2028
    %v2077 = vpack.c.b16 %v2037, %v2033
    %v2078 = vpack.c.b16 %v2038, %v2034
    %v2079 = vpack.c.b16 %v2039, %v2035
    %v2080 = vpack.c.b16 %v2040, %v2036
    %v2081 = vpack.c.b16 %v2045, %v2041
    %v2082 = vpack.c.b16 %v2046, %v2042
    %v2083 = vpack.c.b16 %v2047, %v2043
    %v2084 = vpack.c.b16 %v2048, %v2044
    %v2085 = vpack.c.b16 %v2053, %v2049
    %v2086 = vpack.c.b16 %v2054, %v2050
    %v2087 = vpack.c.b16 %v2055, %v2051
    %v2088 = vpack.c.b16 %v2056, %v2052
    %2121 = vmatprep.subr.bf16.mxu0 %v2058
    %2122 = vmatpush1.bf16.msra.mxu0 %v2057
    %2123 = vmatprep.subr.bf16.mxu0 %v2062
    %2124 = vmatpush1.bf16.msra.mxu0 %v2061
    %2125 = vmatprep.subr.bf16.mxu0 %v2066
    %2126 = vmatpush1.bf16.msra.mxu0 %v2065
    %2127 = vmatprep.subr.bf16.mxu0 %v2070
    %2128 = vmatpush1.bf16.msra.mxu0 %v2069
    %2129 = vmatprep.subr.bf16.mxu0 %v2074
    %2130 = vmatpush1.bf16.msra.mxu0 %v2073
    %2131 = vmatprep.subr.bf16.mxu0 %v2078
    %2132 = vmatpush1.bf16.msra.mxu0 %v2077
    %2133 = vmatprep.subr.bf16.mxu0 %v2082
    %2134 = vmatpush1.bf16.msra.mxu0 %v2081
    %2135 = vmatprep.subr.bf16.mxu0 %v2086
    %2136 = vmatpush1.bf16.msra.mxu0 %v2085
    %2137 = vmatprep.subr.bf16.mxu0 0
    %2138 = vmatpush1.bf16.msra.mxu0 0
    %2139 = vmatprep.subr.bf16.mxu0 0
    %2140 = vmatpush1.bf16.msra.mxu0 0
    %2141 = vmatprep.subr.bf16.mxu0 0
    %2142 = vmatpush1.bf16.msra.mxu0 0
    %2143 = vmatprep.subr.bf16.mxu0 0
    %2144 = vmatpush1.bf16.msra.mxu0 0
    %2145 = vmatprep.subr.bf16.mxu0 0
    %2146 = vmatpush1.bf16.msra.mxu0 0
    %2147 = vmatprep.subr.bf16.mxu0 0
    %2148 = vmatpush1.bf16.msra.mxu0 0
    %2149 = vmatprep.subr.bf16.mxu0 0
    %2150 = vmatpush1.bf16.msra.mxu0 0
    %2151 = vmatprep.subr.bf16.mxu0 0
    %2152 = vmatpush1.bf16.msra.mxu0 0
    %2153 = vmatprep.mubr.bf16.mxu0 0
    %2154 = vmatmul.mubr.bf16.gmra.mrb[0].mxu0 %v1906
    %v2155 = vpop.f32.mrb[0].mxu0
    %v2156 = vadd.f32 %v1944, %v2155
    %v2157 = vpop.f32.mrb[0].mxu0
    %v2158 = vadd.f32 %v1948, %v2157
    %v2159 = vpop.f32.mrb[0].mxu0
    %v2160 = vadd.f32 %v1944, %v2159
    %v2161 = vpop.f32.mrb[0].mxu0
    %v2162 = vadd.f32 %v1948, %v2161
    %2163 = vdwg.mxu0
    %2164 = vmatprep.subr.bf16.mxu0 %v2060
    %2165 = vmatpush1.bf16.msra.mxu0 %v2059
    %2166 = vmatprep.subr.bf16.mxu0 %v2064
    %2167 = vmatpush1.bf16.msra.mxu0 %v2063
    %2168 = vmatprep.subr.bf16.mxu0 %v2068
    %2169 = vmatpush1.bf16.msra.mxu0 %v2067
    %2170 = vmatprep.subr.bf16.mxu0 %v2072
    %2171 = vmatpush1.bf16.msra.mxu0 %v2071
    %2172 = vmatprep.subr.bf16.mxu0 %v2076
    %2173 = vmatpush1.bf16.msra.mxu0 %v2075
    %2174 = vmatprep.subr.bf16.mxu0 %v2080
    %2175 = vmatpush1.bf16.msra.mxu0 %v2079
    %2176 = vmatprep.subr.bf16.mxu0 %v2084
    %2177 = vmatpush1.bf16.msra.mxu0 %v2083
    %2178 = vmatprep.subr.bf16.mxu0 %v2088
    %2179 = vmatpush1.bf16.msra.mxu0 %v2087
    %2180 = vmatprep.subr.bf16.mxu0 0
    %2181 = vmatpush1.bf16.msra.mxu0 0
    %2182 = vmatprep.subr.bf16.mxu0 0
    %2183 = vmatpush1.bf16.msra.mxu0 0
    %2184 = vmatprep.subr.bf16.mxu0 0
    %2185 = vmatpush1.bf16.msra.mxu0 0
    %2186 = vmatprep.subr.bf16.mxu0 0
    %2187 = vmatpush1.bf16.msra.mxu0 0
    %2188 = vmatprep.subr.bf16.mxu0 0
    %2189 = vmatpush1.bf16.msra.mxu0 0
    %2190 = vmatprep.subr.bf16.mxu0 0
    %2191 = vmatpush1.bf16.msra.mxu0 0
    %2192 = vmatprep.subr.bf16.mxu0 0
    %2193 = vmatpush1.bf16.msra.mxu0 0
    %2194 = vmatprep.subr.bf16.mxu0 0
    %2195 = vmatpush1.bf16.msra.mxu0 0
    %2196 = vmatprep.mubr.bf16.mxu0 0
    %2197 = vmatmul.mubr.bf16.gmra.mrb[0].mxu0 %v1906
    %v2198 = vpop.f32.mrb[0].mxu0
    %v2199 = vadd.f32 %v1952, %v2198
    %v2200 = vpop.f32.mrb[0].mxu0
    %v2201 = vadd.f32 %v1956, %v2200
    %v2202 = vpop.f32.mrb[0].mxu0
    %v2203 = vadd.f32 %v1952, %v2202
    %v2204 = vpop.f32.mrb[0].mxu0
    %v2205 = vadd.f32 %v1956, %v2204
    %2206 = vdwg.mxu0
    %v2207 = vmax.f32 %v2156, 0.0
    %v2208 = vmax.f32 %v2158, 0.0
    %v2209 = vmax.f32 %v2199, 0.0
    %v2210 = vmax.f32 %v2201, 0.0
    %v2211 = vmax.f32 %v2160, 0.0
    %v2212 = vmax.f32 %v2162, 0.0
    %v2213 = vmax.f32 %v2203, 0.0
    %v2214 = vmax.f32 %v2205, 0.0
    %v2215 = vpack.c.bf16 %v2211, %v2207
    %v2216 = vpack.c.bf16 %v2212, %v2208
    %v2217 = vpack.c.bf16 %v2213, %v2209
    %v2218 = vpack.c.bf16 %v2214, %v2210
    %v2219 = vld [vmem:[#allocation13] sm:$0xf]
    %v2220 = vld [vmem:[#allocation13 + $0x4] sm:$0xf]
    %v2221 = vld [vmem:[#allocation13 + $0x8] sm:$0xf]
    %v2222 = vld [vmem:[#allocation13 + $0xc] sm:$0xf]
    %v2223 = vld [vmem:[#allocation13 + $0x10] sm:$0xf]
    %v2224 = vld [vmem:[#allocation13 + $0x14] sm:$0xf]
    %v2225 = vld [vmem:[#allocation13 + $0x18] sm:$0xf]
    %v2226 = vld [vmem:[#allocation13 + $0x1c] sm:$0xf]
    %v2227 = vld [vmem:[#allocation13 + $0x20] sm:$0xf]
    %v2228 = vld [vmem:[#allocation13 + $0x24] sm:$0xf]
    %v2229 = vld [vmem:[#allocation13 + $0x28] sm:$0xf]
    %v2230 = vld [vmem:[#allocation13 + $0x2c] sm:$0xf]
    %v2231 = vld [vmem:[#allocation13 + $0x30] sm:$0xf]
    %v2232 = vld [vmem:[#allocation13 + $0x34] sm:$0xf]
    %v2233 = vld [vmem:[#allocation13 + $0x38] sm:$0xf]
    %v2234 = vld [vmem:[#allocation13 + $0x3c] sm:$0xf]
    %v2235 = vld [vmem:[#allocation13 + $0x40] sm:$0xf]
    %v2236 = vld [vmem:[#allocation13 + $0x44] sm:$0xf]
    %v2237 = vld [vmem:[#allocation13 + $0x48] sm:$0xf]
    %v2238 = vld [vmem:[#allocation13 + $0x4c] sm:$0xf]
    %v2239 = vld [vmem:[#allocation13 + $0x50] sm:$0xf]
    %v2240 = vld [vmem:[#allocation13 + $0x54] sm:$0xf]
    %v2241 = vld [vmem:[#allocation13 + $0x58] sm:$0xf]
    %v2242 = vld [vmem:[#allocation13 + $0x5c] sm:$0xf]
    %v2243 = vld [vmem:[#allocation13 + $0x60] sm:$0xf]
    %v2244 = vld [vmem:[#allocation13 + $0x64] sm:$0xf]
    %v2245 = vld [vmem:[#allocation13 + $0x68] sm:$0xf]
    %v2246 = vld [vmem:[#allocation13 + $0x6c] sm:$0xf]
    %v2247 = vld [vmem:[#allocation13 + $0x70] sm:$0xf]
    %v2248 = vld [vmem:[#allocation13 + $0x74] sm:$0xf]
    %v2249 = vld [vmem:[#allocation13 + $0x78] sm:$0xf]
    %v2250 = vld [vmem:[#allocation13 + $0x7c] sm:$0xf]
    %v2251 = vld [vmem:[#allocation13 + $0x80] sm:$0xf]
    %v2252 = vld [vmem:[#allocation13 + $0x84] sm:$0xf]
    %v2253 = vld [vmem:[#allocation13 + $0x88] sm:$0xf]
    %v2254 = vld [vmem:[#allocation13 + $0x8c] sm:$0xf]
    %v2255 = vld [vmem:[#allocation13 + $0x90] sm:$0xf]
    %v2256 = vld [vmem:[#allocation13 + $0x94] sm:$0xf]
    %v2257 = vld [vmem:[#allocation13 + $0x98] sm:$0xf]
    %v2258 = vld [vmem:[#allocation13 + $0x9c] sm:$0xf]
    %v2259 = vld [vmem:[#allocation13 + $0xa0] sm:$0xf]
    %v2260 = vld [vmem:[#allocation13 + $0xa4] sm:$0xf]
    %v2261 = vld [vmem:[#allocation13 + $0xa8] sm:$0xf]
    %v2262 = vld [vmem:[#allocation13 + $0xac] sm:$0xf]
    %v2263 = vld [vmem:[#allocation13 + $0xb0] sm:$0xf]
    %v2264 = vld [vmem:[#allocation13 + $0xb4] sm:$0xf]
    %v2265 = vld [vmem:[#allocation13 + $0xb8] sm:$0xf]
    %v2266 = vld [vmem:[#allocation13 + $0xbc] sm:$0xf]
    %v2267 = vld [vmem:[#allocation13 + $0xc0] sm:$0xf]
    %v2268 = vld [vmem:[#allocation13 + $0xc4] sm:$0xf]
    %v2269 = vld [vmem:[#allocation13 + $0xc8] sm:$0xf]
    %v2270 = vld [vmem:[#allocation13 + $0xcc] sm:$0xf]
    %v2271 = vld [vmem:[#allocation13 + $0xd0] sm:$0xf]
    %v2272 = vld [vmem:[#allocation13 + $0xd4] sm:$0xf]
    %v2273 = vld [vmem:[#allocation13 + $0xd8] sm:$0xf]
    %v2274 = vld [vmem:[#allocation13 + $0xdc] sm:$0xf]
    %v2275 = vld [vmem:[#allocation13 + $0xe0] sm:$0xf]
    %v2276 = vld [vmem:[#allocation13 + $0xe4] sm:$0xf]
    %v2277 = vld [vmem:[#allocation13 + $0xe8] sm:$0xf]
    %v2278 = vld [vmem:[#allocation13 + $0xec] sm:$0xf]
    %v2279 = vld [vmem:[#allocation13 + $0xf0] sm:$0xf]
    %v2280 = vld [vmem:[#allocation13 + $0xf4] sm:$0xf]
    %v2281 = vld [vmem:[#allocation13 + $0xf8] sm:$0xf]
    %v2282 = vld [vmem:[#allocation13 + $0xfc] sm:$0xf]
    %v2283 = vld [vmem:[%s10] sm:$0x1]
    %v2285 = vlaneseq
    %v2286 = vshrl.u32 %v2285, 7
    %v2287 = vsub.s32 0, %v2286
    %v2288 = vrot.slane %v2283, %v2287
    %v2354 = vunpack.c.l.b16 %v2219
    %v2355 = vunpack.c.l.b16 %v2220
    %v2356 = vunpack.c.l.b16 %v2221
    %v2357 = vunpack.c.l.b16 %v2222
    %v2358 = vunpack.c.l.b16 %v2223
    %v2359 = vunpack.c.l.b16 %v2224
    %v2360 = vunpack.c.l.b16 %v2225
    %v2361 = vunpack.c.l.b16 %v2226
    %v2362 = vunpack.c.l.b16 %v2227
    %v2363 = vunpack.c.l.b16 %v2228
    %v2364 = vunpack.c.l.b16 %v2229
    %v2365 = vunpack.c.l.b16 %v2230
    %v2366 = vunpack.c.l.b16 %v2231
    %v2367 = vunpack.c.l.b16 %v2232
    %v2368 = vunpack.c.l.b16 %v2233
    %v2369 = vunpack.c.l.b16 %v2234
    %v2370 = vunpack.c.l.b16 %v2235
    %v2371 = vunpack.c.l.b16 %v2236
    %v2372 = vunpack.c.l.b16 %v2237
    %v2373 = vunpack.c.l.b16 %v2238
    %v2374 = vunpack.c.l.b16 %v2239
    %v2375 = vunpack.c.l.b16 %v2240
    %v2376 = vunpack.c.l.b16 %v2241
    %v2377 = vunpack.c.l.b16 %v2242
    %v2378 = vunpack.c.l.b16 %v2243
    %v2379 = vunpack.c.l.b16 %v2244
    %v2380 = vunpack.c.l.b16 %v2245
    %v2381 = vunpack.c.l.b16 %v2246
    %v2382 = vunpack.c.l.b16 %v2247
    %v2383 = vunpack.c.l.b16 %v2248
    %v2384 = vunpack.c.l.b16 %v2249
    %v2385 = vunpack.c.l.b16 %v2250
    %v2386 = vunpack.c.l.b16 %v2251
    %v2387 = vunpack.c.l.b16 %v2252
    %v2388 = vunpack.c.l.b16 %v2253
    %v2389 = vunpack.c.l.b16 %v2254
    %v2390 = vunpack.c.l.b16 %v2255
    %v2391 = vunpack.c.l.b16 %v2256
    %v2392 = vunpack.c.l.b16 %v2257
    %v2393 = vunpack.c.l.b16 %v2258
    %v2394 = vunpack.c.l.b16 %v2259
    %v2395 = vunpack.c.l.b16 %v2260
    %v2396 = vunpack.c.l.b16 %v2261
    %v2397 = vunpack.c.l.b16 %v2262
    %v2398 = vunpack.c.l.b16 %v2263
    %v2399 = vunpack.c.l.b16 %v2264
    %v2400 = vunpack.c.l.b16 %v2265
    %v2401 = vunpack.c.l.b16 %v2266
    %v2402 = vunpack.c.l.b16 %v2267
    %v2403 = vunpack.c.l.b16 %v2268
    %v2404 = vunpack.c.l.b16 %v2269
    %v2405 = vunpack.c.l.b16 %v2270
    %v2406 = vunpack.c.l.b16 %v2271
    %v2407 = vunpack.c.l.b16 %v2272
    %v2408 = vunpack.c.l.b16 %v2273
    %v2409 = vunpack.c.l.b16 %v2274
    %v2410 = vunpack.c.l.b16 %v2275
    %v2411 = vunpack.c.l.b16 %v2276
    %v2412 = vunpack.c.l.b16 %v2277
    %v2413 = vunpack.c.l.b16 %v2278
    %v2414 = vunpack.c.l.b16 %v2279
    %v2415 = vunpack.c.l.b16 %v2280
    %v2416 = vunpack.c.l.b16 %v2281
    %v2417 = vunpack.c.l.b16 %v2282
    %v2418 = vpack.c.b16 %v2355, %v2354
    %v2419 = vpack.c.b16 %v2357, %v2356
    %v2420 = vpack.c.b16 %v2359, %v2358
    %v2421 = vpack.c.b16 %v2361, %v2360
    %v2422 = vpack.c.b16 %v2363, %v2362
    %v2423 = vpack.c.b16 %v2365, %v2364
    %v2424 = vpack.c.b16 %v2367, %v2366
    %v2425 = vpack.c.b16 %v2369, %v2368
    %v2426 = vpack.c.b16 %v2371, %v2370
    %v2427 = vpack.c.b16 %v2373, %v2372
    %v2428 = vpack.c.b16 %v2375, %v2374
    %v2429 = vpack.c.b16 %v2377, %v2376
    %v2430 = vpack.c.b16 %v2379, %v2378
    %v2431 = vpack.c.b16 %v2381, %v2380
    %v2432 = vpack.c.b16 %v2383, %v2382
    %v2433 = vpack.c.b16 %v2385, %v2384
    %v2434 = vpack.c.b16 %v2387, %v2386
    %v2435 = vpack.c.b16 %v2389, %v2388
    %v2436 = vpack.c.b16 %v2391, %v2390
    %v2437 = vpack.c.b16 %v2393, %v2392
    %v2438 = vpack.c.b16 %v2395, %v2394
    %v2439 = vpack.c.b16 %v2397, %v2396
    %v2440 = vpack.c.b16 %v2399, %v2398
    %v2441 = vpack.c.b16 %v2401, %v2400
    %v2442 = vpack.c.b16 %v2403, %v2402
    %v2443 = vpack.c.b16 %v2405, %v2404
    %v2444 = vpack.c.b16 %v2407, %v2406
    %v2445 = vpack.c.b16 %v2409, %v2408
    %v2446 = vpack.c.b16 %v2411, %v2410
    %v2447 = vpack.c.b16 %v2413, %v2412
    %v2448 = vpack.c.b16 %v2415, %v2414
    %v2449 = vpack.c.b16 %v2417, %v2416
    %2482 = vmatprep.subr.bf16.mxu0 0
    %2483 = vmatpush1.bf16.msra.mxu0 %v2418
    %2484 = vmatprep.subr.bf16.mxu0 0
    %2485 = vmatpush1.bf16.msra.mxu0 %v2419
    %2486 = vmatprep.subr.bf16.mxu0 0
    %2487 = vmatpush1.bf16.msra.mxu0 %v2420
    %2488 = vmatprep.subr.bf16.mxu0 0
    %2489 = vmatpush1.bf16.msra.mxu0 %v2421
    %2490 = vmatprep.subr.bf16.mxu0 0
    %2491 = vmatpush1.bf16.msra.mxu0 %v2422
    %2492 = vmatprep.subr.bf16.mxu0 0
    %2493 = vmatpush1.bf16.msra.mxu0 %v2423
    %2494 = vmatprep.subr.bf16.mxu0 0
    %2495 = vmatpush1.bf16.msra.mxu0 %v2424
    %2496 = vmatprep.subr.bf16.mxu0 0
    %2497 = vmatpush1.bf16.msra.mxu0 %v2425
    %2498 = vmatprep.subr.bf16.mxu0 0
    %2499 = vmatpush1.bf16.msra.mxu0 %v2426
    %2500 = vmatprep.subr.bf16.mxu0 0
    %2501 = vmatpush1.bf16.msra.mxu0 %v2427
    %2502 = vmatprep.subr.bf16.mxu0 0
    %2503 = vmatpush1.bf16.msra.mxu0 %v2428
    %2504 = vmatprep.subr.bf16.mxu0 0
    %2505 = vmatpush1.bf16.msra.mxu0 %v2429
    %2506 = vmatprep.subr.bf16.mxu0 0
    %2507 = vmatpush1.bf16.msra.mxu0 %v2430
    %2508 = vmatprep.subr.bf16.mxu0 0
    %2509 = vmatpush1.bf16.msra.mxu0 %v2431
    %2510 = vmatprep.subr.bf16.mxu0 0
    %2511 = vmatpush1.bf16.msra.mxu0 %v2432
    %2512 = vmatprep.subr.bf16.mxu0 0
    %2513 = vmatpush1.bf16.msra.mxu0 %v2433
    %2514 = vmatprep.mubr.bf16.mxu0 %v2216
    %2515 = vmatmul.mubr.bf16.gmra.mrb[0].mxu0 %v2215
    %v2516 = vpop.f32.mrb[0].mxu0
    %v2517 = vadd.f32 %v2288, %v2516
    %v2518 = vpop.f32.mrb[0].mxu0
    %v2519 = vpop.f32.mrb[0].mxu0
    %v2520 = vadd.f32 %v2288, %v2519
    %v2521 = vpop.f32.mrb[0].mxu0
    %2522 = vdwg.mxu0
    %2523 = vmatprep.subr.bf16.mxu0 0
    %2524 = vmatpush1.bf16.msra.mxu0 %v2434
    %2525 = vmatprep.subr.bf16.mxu0 0
    %2526 = vmatpush1.bf16.msra.mxu0 %v2435
    %2527 = vmatprep.subr.bf16.mxu0 0
    %2528 = vmatpush1.bf16.msra.mxu0 %v2436
    %2529 = vmatprep.subr.bf16.mxu0 0
    %2530 = vmatpush1.bf16.msra.mxu0 %v2437
    %2531 = vmatprep.subr.bf16.mxu0 0
    %2532 = vmatpush1.bf16.msra.mxu0 %v2438
    %2533 = vmatprep.subr.bf16.mxu0 0
    %2534 = vmatpush1.bf16.msra.mxu0 %v2439
    %2535 = vmatprep.subr.bf16.mxu0 0
    %2536 = vmatpush1.bf16.msra.mxu0 %v2440
    %2537 = vmatprep.subr.bf16.mxu0 0
    %2538 = vmatpush1.bf16.msra.mxu0 %v2441
    %2539 = vmatprep.subr.bf16.mxu0 0
    %2540 = vmatpush1.bf16.msra.mxu0 %v2442
    %2541 = vmatprep.subr.bf16.mxu0 0
    %2542 = vmatpush1.bf16.msra.mxu0 %v2443
    %2543 = vmatprep.subr.bf16.mxu0 0
    %2544 = vmatpush1.bf16.msra.mxu0 %v2444
    %2545 = vmatprep.subr.bf16.mxu0 0
    %2546 = vmatpush1.bf16.msra.mxu0 %v2445
    %2547 = vmatprep.subr.bf16.mxu0 0
    %2548 = vmatpush1.bf16.msra.mxu0 %v2446
    %2549 = vmatprep.subr.bf16.mxu0 0
    %2550 = vmatpush1.bf16.msra.mxu0 %v2447
    %2551 = vmatprep.subr.bf16.mxu0 0
    %2552 = vmatpush1.bf16.msra.mxu0 %v2448
    %2553 = vmatprep.subr.bf16.mxu0 0
    %2554 = vmatpush1.bf16.msra.mxu0 %v2449
    %2555 = vmatprep.mubr.bf16.mxu0 %v2218
    %2556 = vmatmul.mubr.bf16.gmra.mrb[0].mxu0 %v2217
    %v2557 = vpop.f32.mrb[0].mxu0
    %v2558 = vadd.f32 %v2517, %v2557
    %v2559 = vpop.f32.mrb[0].mxu0
    %v2560 = vpop.f32.mrb[0].mxu0
    %v2561 = vadd.f32 %v2520, %v2560
    %v2562 = vpop.f32.mrb[0].mxu0
    %2563 = vdwg.mxu0
    %v2564 = vadd.f32 %v1904, %v2558
    %v2565 = vadd.f32 %v1905, %v2561
    %v2566 = vld [vmem:[%s11] sm:$0x1]
    %v2567 = vld [vmem:[%s12] sm:$0x1]
    %2568 = vadd.xlane.f32.xlu0 %v2564
    %v2569 = vpop.xlane.xlu0 %2568
    %2570 = vadd.xlane.f32.xlu0 %v2565
    %v2571 = vpop.xlane.xlu0 %2570
    %v2572 = vmul.f32 %v2569, %v1871
    %v2573 = vmul.f32 %v2571, %v1871
    %v2574 = vsub.f32 %v2564, %v2572
    %v2575 = vsub.f32 %v2565, %v2573
    %v2576 = vmul.f32 %v2574, %v2574
    %v2577 = vmul.f32 %v2575, %v2575
    %2578 = vadd.xlane.f32.xlu0 %v2576
    %v2579 = vpop.xlane.xlu0 %2578
    %2580 = vadd.xlane.f32.xlu0 %v2577
    %v2581 = vpop.xlane.xlu0 %2580
    %v2582 = vmul.f32 %v2579, %v1871
    %v2583 = vmul.f32 %v2581, %v1871
    %v2584 = vadd.f32 %v2582, 1e-05
    %v2585 = vadd.f32 %v2583, 1e-05
    %v2586 = vrsqrt.pop %v2584
    %v2587 = vrsqrt.pop %v2585
    %v2588 = vmul.f32 %v2574, %v2586
    %v2589 = vmul.f32 %v2575, %v2587
    %v2591 = vlaneseq
    %v2592 = vshrl.u32 %v2591, 7
    %v2593 = vsub.s32 0, %v2592
    %v2594 = vrot.slane %v2566, %v2593
    %v2596 = vmul.f32 %v2588, %v2594
    %v2597 = vmul.f32 %v2589, %v2594
    %v2599 = vlaneseq
    %v2600 = vshrl.u32 %v2599, 7
    %v2601 = vsub.s32 0, %v2600
    %v2602 = vrot.slane %v2567, %v2601
    %v2604 = vadd.f32 %v2596, %v2602
    %v2605 = vadd.f32 %v2597, %v2602
    %v2606 = vpack.c.bf16 %v2605, %v2604
    %v2607 = vld [vmem:[#allocation14] sm:$0xff]
    %v2608 = vld [vmem:[#allocation14 + $0x8] sm:$0xf]
    %v2609 = vld [vmem:[#allocation14 + $0xc] sm:$0xff]
    %v2610 = vld [vmem:[#allocation14 + $0x14] sm:$0xf]
    %v2611 = vld [vmem:[#allocation14 + $0x18] sm:$0xff]
    %v2612 = vld [vmem:[#allocation14 + $0x20] sm:$0xf]
    %v2613 = vld [vmem:[#allocation14 + $0x24] sm:$0xff]
    %v2614 = vld [vmem:[#allocation14 + $0x2c] sm:$0xf]
    %v2615 = vld [vmem:[#allocation14 + $0x30] sm:$0xff]
    %v2616 = vld [vmem:[#allocation14 + $0x38] sm:$0xf]
    %v2617 = vld [vmem:[#allocation14 + $0x3c] sm:$0xff]
    %v2618 = vld [vmem:[#allocation14 + $0x44] sm:$0xf]
    %v2619 = vld [vmem:[#allocation14 + $0x48] sm:$0xff]
    %v2620 = vld [vmem:[#allocation14 + $0x50] sm:$0xf]
    %v2621 = vld [vmem:[#allocation14 + $0x54] sm:$0xff]
    %v2622 = vld [vmem:[#allocation14 + $0x5c] sm:$0xf]
    %v2623 = vld [vmem:[#allocation14 + $0x60] sm:$0xff]
    %v2624 = vld [vmem:[#allocation14 + $0x68] sm:$0xf]
    %v2625 = vld [vmem:[#allocation14 + $0x6c] sm:$0xff]
    %v2626 = vld [vmem:[#allocation14 + $0x74] sm:$0xf]
    %v2627 = vld [vmem:[#allocation14 + $0x78] sm:$0xff]
    %v2628 = vld [vmem:[#allocation14 + $0x80] sm:$0xf]
    %v2629 = vld [vmem:[#allocation14 + $0x84] sm:$0xff]
    %v2630 = vld [vmem:[#allocation14 + $0x8c] sm:$0xf]
    %v2631 = vld [vmem:[#allocation14 + $0x90] sm:$0xff]
    %v2632 = vld [vmem:[#allocation14 + $0x98] sm:$0xf]
    %v2633 = vld [vmem:[#allocation14 + $0x9c] sm:$0xff]
    %v2634 = vld [vmem:[#allocation14 + $0xa4] sm:$0xf]
    %v2635 = vld [vmem:[#allocation14 + $0xa8] sm:$0xff]
    %v2636 = vld [vmem:[#allocation14 + $0xb0] sm:$0xf]
    %v2637 = vld [vmem:[#allocation14 + $0xb4] sm:$0xff]
    %v2638 = vld [vmem:[#allocation14 + $0xbc] sm:$0xf]
    %v2639 = vld [vmem:[%s14] sm:$0x7]
    %v2641 = vlaneseq
    %v2642 = vshrl.u32 %v2641, 7
    %v2643 = vsub.s32 0, %v2642
    %v2644 = vrot.slane %v2639, %v2643
    %v2645 = vlaneseq
    %v2646 = vshrl.u32 %v2645, 7
    %v2647 = vsub.s32 1, %v2646
    %v2648 = vrot.slane %v2639, %v2647
    %v2649 = vlaneseq
    %v2650 = vshrl.u32 %v2649, 7
    %v2651 = vsub.s32 2, %v2650
    %v2652 = vrot.slane %v2639, %v2651
    %v2688 = vunpack.c.l.b16 %v2607
    %v2689 = vunpack.c.h.b16 %v2607
    %v2690 = vunpack.c.l.b16 %v2608
    %v2691 = vunpack.c.l.b16 %v2609
    %v2692 = vunpack.c.h.b16 %v2609
    %v2693 = vunpack.c.l.b16 %v2610
    %v2694 = vunpack.c.l.b16 %v2611
    %v2695 = vunpack.c.h.b16 %v2611
    %v2696 = vunpack.c.l.b16 %v2612
    %v2697 = vunpack.c.l.b16 %v2613
    %v2698 = vunpack.c.h.b16 %v2613
    %v2699 = vunpack.c.l.b16 %v2614
    %v2700 = vunpack.c.l.b16 %v2615
    %v2701 = vunpack.c.h.b16 %v2615
    %v2702 = vunpack.c.l.b16 %v2616
    %v2703 = vunpack.c.l.b16 %v2617
    %v2704 = vunpack.c.h.b16 %v2617
    %v2705 = vunpack.c.l.b16 %v2618
    %v2706 = vunpack.c.l.b16 %v2619
    %v2707 = vunpack.c.h.b16 %v2619
    %v2708 = vunpack.c.l.b16 %v2620
    %v2709 = vunpack.c.l.b16 %v2621
    %v2710 = vunpack.c.h.b16 %v2621
    %v2711 = vunpack.c.l.b16 %v2622
    %v2712 = vunpack.c.l.b16 %v2623
    %v2713 = vunpack.c.h.b16 %v2623
    %v2714 = vunpack.c.l.b16 %v2624
    %v2715 = vunpack.c.l.b16 %v2625
    %v2716 = vunpack.c.h.b16 %v2625
    %v2717 = vunpack.c.l.b16 %v2626
    %v2718 = vunpack.c.l.b16 %v2627
    %v2719 = vunpack.c.h.b16 %v2627
    %v2720 = vunpack.c.l.b16 %v2628
    %v2721 = vunpack.c.l.b16 %v2629
    %v2722 = vunpack.c.h.b16 %v2629
    %v2723 = vunpack.c.l.b16 %v2630
    %v2724 = vunpack.c.l.b16 %v2631
    %v2725 = vunpack.c.h.b16 %v2631
    %v2726 = vunpack.c.l.b16 %v2632
    %v2727 = vunpack.c.l.b16 %v2633
    %v2728 = vunpack.c.h.b16 %v2633
    %v2729 = vunpack.c.l.b16 %v2634
    %v2730 = vunpack.c.l.b16 %v2635
    %v2731 = vunpack.c.h.b16 %v2635
    %v2732 = vunpack.c.l.b16 %v2636
    %v2733 = vunpack.c.l.b16 %v2637
    %v2734 = vunpack.c.h.b16 %v2637
    %v2735 = vunpack.c.l.b16 %v2638
    %v2736 = vpack.c.b16 %v2691, %v2688
    %v2737 = vpack.c.b16 %v2692, %v2689
    %v2738 = vpack.c.b16 %v2693, %v2690
    %v2739 = vpack.c.b16 %v2697, %v2694
    %v2740 = vpack.c.b16 %v2698, %v2695
    %v2741 = vpack.c.b16 %v2699, %v2696
    %v2742 = vpack.c.b16 %v2703, %v2700
    %v2743 = vpack.c.b16 %v2704, %v2701
    %v2744 = vpack.c.b16 %v2705, %v2702
    %v2745 = vpack.c.b16 %v2709, %v2706
    %v2746 = vpack.c.b16 %v2710, %v2707
    %v2747 = vpack.c.b16 %v2711, %v2708
    %v2748 = vpack.c.b16 %v2715, %v2712
    %v2749 = vpack.c.b16 %v2716, %v2713
    %v2750 = vpack.c.b16 %v2717, %v2714
    %v2751 = vpack.c.b16 %v2721, %v2718
    %v2752 = vpack.c.b16 %v2722, %v2719
    %v2753 = vpack.c.b16 %v2723, %v2720
    %v2754 = vpack.c.b16 %v2727, %v2724
    %v2755 = vpack.c.b16 %v2728, %v2725
    %v2756 = vpack.c.b16 %v2729, %v2726
    %v2757 = vpack.c.b16 %v2733, %v2730
    %v2758 = vpack.c.b16 %v2734, %v2731
    %v2759 = vpack.c.b16 %v2735, %v2732
    %2784 = vmatprep.subr.bf16.mxu0 %v2737
    %2785 = vmatpush1.bf16.msra.mxu0 %v2736
    %2786 = vmatprep.subr.bf16.mxu0 %v2740
    %2787 = vmatpush1.bf16.msra.mxu0 %v2739
    %2788 = vmatprep.subr.bf16.mxu0 %v2743
    %2789 = vmatpush1.bf16.msra.mxu0 %v2742
    %2790 = vmatprep.subr.bf16.mxu0 %v2746
    %2791 = vmatpush1.bf16.msra.mxu0 %v2745
    %2792 = vmatprep.subr.bf16.mxu0 %v2749
    %2793 = vmatpush1.bf16.msra.mxu0 %v2748
    %2794 = vmatprep.subr.bf16.mxu0 %v2752
    %2795 = vmatpush1.bf16.msra.mxu0 %v2751
    %2796 = vmatprep.subr.bf16.mxu0 %v2755
    %2797 = vmatpush1.bf16.msra.mxu0 %v2754
    %2798 = vmatprep.subr.bf16.mxu0 %v2758
    %2799 = vmatpush1.bf16.msra.mxu0 %v2757
    %2800 = vmatprep.subr.bf16.mxu0 0
    %2801 = vmatpush1.bf16.msra.mxu0 0
    %2802 = vmatprep.subr.bf16.mxu0 0
    %2803 = vmatpush1.bf16.msra.mxu0 0
    %2804 = vmatprep.subr.bf16.mxu0 0
    %2805 = vmatpush1.bf16.msra.mxu0 0
    %2806 = vmatprep.subr.bf16.mxu0 0
    %2807 = vmatpush1.bf16.msra.mxu0 0
    %2808 = vmatprep.subr.bf16.mxu0 0
    %2809 = vmatpush1.bf16.msra.mxu0 0
    %2810 = vmatprep.subr.bf16.mxu0 0
    %2811 = vmatpush1.bf16.msra.mxu0 0
    %2812 = vmatprep.subr.bf16.mxu0 0
    %2813 = vmatpush1.bf16.msra.mxu0 0
    %2814 = vmatprep.subr.bf16.mxu0 0
    %2815 = vmatpush1.bf16.msra.mxu0 0
    %2816 = vmatprep.mubr.bf16.mxu0 0
    %2817 = vmatmul.mubr.bf16.gmra.mrb[0].mxu0 %v2606
    %v2818 = vpop.f32.mrb[0].mxu0
    %v2819 = vadd.f32 %v2644, %v2818
    %v2820 = vpop.f32.mrb[0].mxu0
    %v2821 = vadd.f32 %v2648, %v2820
    %v2822 = vpop.f32.mrb[0].mxu0
    %v2823 = vadd.f32 %v2644, %v2822
    %v2824 = vpop.f32.mrb[0].mxu0
    %v2825 = vadd.f32 %v2648, %v2824
    %2826 = vdwg.mxu0
    %2827 = vmatprep.subr.bf16.mxu0 0
    %2828 = vmatpush1.bf16.msra.mxu0 %v2738
    %2829 = vmatprep.subr.bf16.mxu0 0
    %2830 = vmatpush1.bf16.msra.mxu0 %v2741
    %2831 = vmatprep.subr.bf16.mxu0 0
    %2832 = vmatpush1.bf16.msra.mxu0 %v2744
    %2833 = vmatprep.subr.bf16.mxu0 0
    %2834 = vmatpush1.bf16.msra.mxu0 %v2747
    %2835 = vmatprep.subr.bf16.mxu0 0
    %2836 = vmatpush1.bf16.msra.mxu0 %v2750
    %2837 = vmatprep.subr.bf16.mxu0 0
    %2838 = vmatpush1.bf16.msra.mxu0 %v2753
    %2839 = vmatprep.subr.bf16.mxu0 0
    %2840 = vmatpush1.bf16.msra.mxu0 %v2756
    %2841 = vmatprep.subr.bf16.mxu0 0
    %2842 = vmatpush1.bf16.msra.mxu0 %v2759
    %2843 = vmatprep.subr.bf16.mxu0 0
    %2844 = vmatpush1.bf16.msra.mxu0 0
    %2845 = vmatprep.subr.bf16.mxu0 0
    %2846 = vmatpush1.bf16.msra.mxu0 0
    %2847 = vmatprep.subr.bf16.mxu0 0
    %2848 = vmatpush1.bf16.msra.mxu0 0
    %2849 = vmatprep.subr.bf16.mxu0 0
    %2850 = vmatpush1.bf16.msra.mxu0 0
    %2851 = vmatprep.subr.bf16.mxu0 0
    %2852 = vmatpush1.bf16.msra.mxu0 0
    %2853 = vmatprep.subr.bf16.mxu0 0
    %2854 = vmatpush1.bf16.msra.mxu0 0
    %2855 = vmatprep.subr.bf16.mxu0 0
    %2856 = vmatpush1.bf16.msra.mxu0 0
    %2857 = vmatprep.subr.bf16.mxu0 0
    %2858 = vmatpush1.bf16.msra.mxu0 0
    %2859 = vmatprep.mubr.bf16.mxu0 0
    %2860 = vmatmul.mubr.bf16.gmra.mrb[0].mxu0 %v2606
    %v2861 = vpop.f32.mrb[0].mxu0
    %v2862 = vadd.f32 %v2652, %v2861
    %v2863 = vpop.f32.mrb[0].mxu0
    %v2864 = vpop.f32.mrb[0].mxu0
    %v2865 = vadd.f32 %v2652, %v2864
    %v2866 = vpop.f32.mrb[0].mxu0
    %2867 = vdwg.mxu0
    %v2868 = vpack.c.bf16 %v2819, %v2819
    %v2869 = vpack.c.bf16 %v2821, %v2821
    %v2870 = vpack.c.bf16 %v2862, %v2862
    %v2872 = vsel %vm503, %v2868, 0
    %v2875 = vsel %vm503, %v2869, 0
    %2877 = vmatprep.subr.bf16.mxu0 0
    %2878 = vmatpush1.bf16.xpose.msra.mxu0 %v2875
    %2879 = vmatprep.subr.bf16.mxu0 0
    %2880 = vmatpush1.bf16.xpose.msra.mxu0 0
    %2881 = vmatprep.subr.bf16.mxu0 0
    %2882 = vmatpush1.bf16.xpose.msra.mxu0 0
    %2883 = vmatprep.subr.bf16.mxu0 0
    %2884 = vmatpush1.bf16.xpose.msra.mxu0 0
    %2885 = vmatprep.subr.bf16.mxu0 0
    %2886 = vmatpush1.bf16.xpose.msra.mxu0 0
    %2887 = vmatprep.subr.bf16.mxu0 0
    %2888 = vmatpush1.bf16.xpose.msra.mxu0 0
    %2889 = vmatprep.subr.bf16.mxu0 0
    %2890 = vmatpush1.bf16.xpose.msra.mxu0 0
    %2891 = vmatprep.subr.bf16.mxu0 0
    %2892 = vmatpush1.bf16.xpose.msra.mxu0 0
    %2893 = vmatprep.subr.bf16.mxu0 0
    %2894 = vmatpush1.bf16.xpose.msra.mxu0 0
    %2895 = vmatprep.subr.bf16.mxu0 0
    %2896 = vmatpush1.bf16.xpose.msra.mxu0 0
    %2897 = vmatprep.subr.bf16.mxu0 0
    %2898 = vmatpush1.bf16.xpose.msra.mxu0 0
    %2899 = vmatprep.subr.bf16.mxu0 0
    %2900 = vmatpush1.bf16.xpose.msra.mxu0 0
    %2901 = vmatprep.subr.bf16.mxu0 0
    %2902 = vmatpush1.bf16.xpose.msra.mxu0 0
    %2903 = vmatprep.subr.bf16.mxu0 0
    %2904 = vmatpush1.bf16.xpose.msra.mxu0 0
    %2905 = vmatprep.subr.bf16.mxu0 0
    %2906 = vmatpush1.bf16.xpose.msra.mxu0 0
    %2907 = vmatprep.subr.bf16.mxu0 0
    %2908 = vmatpush1.bf16.xpose.msra.mxu0 0
    %2909 = vmatprep.mubr.bf16.mxu0 0
    %2910 = vmatmul.mubr.bf16.gmra.mrb[0].mxu0 %v2872
    %v2911 = vpop.f32.mrb[0].mxu0
    %v2912 = vadd.f32 0.0, %v2911
    %v2913 = vpop.f32.mrb[0].mxu0
    %v2914 = vpop.f32.mrb[0].mxu0
    %v2915 = vpop.f32.mrb[0].mxu0
    %2916 = vdwg.mxu0
    %v2917 = vmul.f32 %v2912, 0.17677669
    %v2918 = vsel %vm551, %v2917, -inf
    %2919 = vmax.xlane.f32.xlu0 %v2918
    %v2920 = vpop.xlane.xlu0 %2919
    %v2921 = vsub.f32 %v2917, %v2920
    %v2922 = vmul.f32 %v2921, 1.442695
    %v2923 = vpow.pop %v2922
    %v2924 = vsel %vm551, %v2923, 0.0
    %2925 = vadd.xlane.f32.xlu0 %v2924
    %v2926 = vpop.xlane.xlu0 %2925
    %v2927 = vrcp.pop %v2926
    %v2928 = vmul.f32 %v2923, %v2927
    %v2929 = vpack.c.bf16 %v2928, %v2928
    %v2931 = vsel %vm551, %v2929, 0
    %v2934 = vsel %vm567, %v2870, 0
    %2936 = vmatprep.subr.bf16.mxu0 0
    %2937 = vmatpush1.bf16.msra.mxu0 %v2934
    %2938 = vmatprep.subr.bf16.mxu0 0
    %2939 = vmatpush1.bf16.msra.mxu0 0
    %2940 = vmatprep.subr.bf16.mxu0 0
    %2941 = vmatpush1.bf16.msra.mxu0 0
    %2942 = vmatprep.subr.bf16.mxu0 0
    %2943 = vmatpush1.bf16.msra.mxu0 0
    %2944 = vmatprep.subr.bf16.mxu0 0
    %2945 = vmatpush1.bf16.msra.mxu0 0
    %2946 = vmatprep.subr.bf16.mxu0 0
    %2947 = vmatpush1.bf16.msra.mxu0 0
    %2948 = vmatprep.subr.bf16.mxu0 0
    %2949 = vmatpush1.bf16.msra.mxu0 0
    %2950 = vmatprep.subr.bf16.mxu0 0
    %2951 = vmatpush1.bf16.msra.mxu0 0
    %2952 = vmatprep.subr.bf16.mxu0 0
    %2953 = vmatpush1.bf16.msra.mxu0 0
    %2954 = vmatprep.subr.bf16.mxu0 0
    %2955 = vmatpush1.bf16.msra.mxu0 0
    %2956 = vmatprep.subr.bf16.mxu0 0
    %2957 = vmatpush1.bf16.msra.mxu0 0
    %2958 = vmatprep.subr.bf16.mxu0 0
    %2959 = vmatpush1.bf16.msra.mxu0 0
    %2960 = vmatprep.subr.bf16.mxu0 0
    %2961 = vmatpush1.bf16.msra.mxu0 0
    %2962 = vmatprep.subr.bf16.mxu0 0
    %2963 = vmatpush1.bf16.msra.mxu0 0
    %2964 = vmatprep.subr.bf16.mxu0 0
    %2965 = vmatpush1.bf16.msra.mxu0 0
    %2966 = vmatprep.subr.bf16.mxu0 0
    %2967 = vmatpush1.bf16.msra.mxu0 0
    %2968 = vmatprep.mubr.bf16.mxu0 0
    %2969 = vmatmul.mubr.bf16.gmra.mrb[0].mxu0 %v2931
    %v2970 = vpop.f32.mrb[0].mxu0
    %v2971 = vadd.f32 0.0, %v2970
    %v2972 = vpop.f32.mrb[0].mxu0
    %v2973 = vpop.f32.mrb[0].mxu0
    %v2974 = vpop.f32.mrb[0].mxu0
    %2975 = vdwg.mxu0
    %v2976 = vpack.c.bf16 %v2971, %v2971
    %v2977 = vld [vmem:[#allocation16] sm:$0xf]
    %v2978 = vld [vmem:[#allocation16 + $0x4] sm:$0xf]
    %v2979 = vld [vmem:[#allocation16 + $0x8] sm:$0xf]
    %v2980 = vld [vmem:[#allocation16 + $0xc] sm:$0xf]
    %2982 = vrot.lane.b32.xlu0 %v2868, 96
    %v2983 = vpop.permute.xlu0 %2982
    %2985 = vrot.lane.b32.xlu0 %v2869, 96
    %v2986 = vpop.permute.xlu0 %2985
    %v2988 = vsel %vm503, %v2983, 0
    %v2991 = vsel %vm503, %v2986, 0
    %2993 = vmatprep.subr.bf16.mxu0 0
    %2994 = vmatpush1.bf16.xpose.msra.mxu0 %v2991
    %2995 = vmatprep.subr.bf16.mxu0 0
    %2996 = vmatpush1.bf16.xpose.msra.mxu0 0
    %2997 = vmatprep.subr.bf16.mxu0 0
    %2998 = vmatpush1.bf16.xpose.msra.mxu0 0
    %2999 = vmatprep.subr.bf16.mxu0 0
    %3000 = vmatpush1.bf16.xpose.msra.mxu0 0
    %3001 = vmatprep.subr.bf16.mxu0 0
    %3002 = vmatpush1.bf16.xpose.msra.mxu0 0
    %3003 = vmatprep.subr.bf16.mxu0 0
    %3004 = vmatpush1.bf16.xpose.msra.mxu0 0
    %3005 = vmatprep.subr.bf16.mxu0 0
    %3006 = vmatpush1.bf16.xpose.msra.mxu0 0
    %3007 = vmatprep.subr.bf16.mxu0 0
    %3008 = vmatpush1.bf16.xpose.msra.mxu0 0
    %3009 = vmatprep.subr.bf16.mxu0 0
    %3010 = vmatpush1.bf16.xpose.msra.mxu0 0
    %3011 = vmatprep.subr.bf16.mxu0 0
    %3012 = vmatpush1.bf16.xpose.msra.mxu0 0
    %3013 = vmatprep.subr.bf16.mxu0 0
    %3014 = vmatpush1.bf16.xpose.msra.mxu0 0
    %3015 = vmatprep.subr.bf16.mxu0 0
    %3016 = vmatpush1.bf16.xpose.msra.mxu0 0
    %3017 = vmatprep.subr.bf16.mxu0 0
    %3018 = vmatpush1.bf16.xpose.msra.mxu0 0
    %3019 = vmatprep.subr.bf16.mxu0 0
    %3020 = vmatpush1.bf16.xpose.msra.mxu0 0
    %3021 = vmatprep.subr.bf16.mxu0 0
    %3022 = vmatpush1.bf16.xpose.msra.mxu0 0
    %3023 = vmatprep.subr.bf16.mxu0 0
    %3024 = vmatpush1.bf16.xpose.msra.mxu0 0
    %3025 = vmatprep.mubr.bf16.mxu0 0
    %3026 = vmatmul.mubr.bf16.gmra.mrb[0].mxu0 %v2988
    %v3027 = vpop.f32.mrb[0].mxu0
    %v3028 = vadd.f32 0.0, %v3027
    %v3029 = vpop.f32.mrb[0].mxu0
    %v3030 = vpop.f32.mrb[0].mxu0
    %v3031 = vpop.f32.mrb[0].mxu0
    %3032 = vdwg.mxu0
    %v3033 = vmul.f32 %v3028, 0.17677669
    %v3034 = vsel %vm551, %v3033, -inf
    %3035 = vmax.xlane.f32.xlu0 %v3034
    %v3036 = vpop.xlane.xlu0 %3035
    %v3037 = vsub.f32 %v3033, %v3036
    %v3038 = vmul.f32 %v3037, 1.442695
    %v3039 = vpow.pop %v3038
    %v3040 = vsel %vm551, %v3039, 0.0
    %3041 = vadd.xlane.f32.xlu0 %v3040
    %v3042 = vpop.xlane.xlu0 %3041
    %v3043 = vrcp.pop %v3042
    %v3044 = vmul.f32 %v3039, %v3043
    %v3045 = vpack.c.bf16 %v3044, %v3044
    %3047 = vrot.lane.b32.xlu0 %v2870, 96
    %v3048 = vpop.permute.xlu0 %3047
    %v3050 = vsel %vm551, %v3045, 0
    %v3053 = vsel %vm567, %v3048, 0
    %3055 = vmatprep.subr.bf16.mxu0 0
    %3056 = vmatpush1.bf16.msra.mxu0 %v3053
    %3057 = vmatprep.subr.bf16.mxu0 0
    %3058 = vmatpush1.bf16.msra.mxu0 0
    %3059 = vmatprep.subr.bf16.mxu0 0
    %3060 = vmatpush1.bf16.msra.mxu0 0
    %3061 = vmatprep.subr.bf16.mxu0 0
    %3062 = vmatpush1.bf16.msra.mxu0 0
    %3063 = vmatprep.subr.bf16.mxu0 0
    %3064 = vmatpush1.bf16.msra.mxu0 0
    %3065 = vmatprep.subr.bf16.mxu0 0
    %3066 = vmatpush1.bf16.msra.mxu0 0
    %3067 = vmatprep.subr.bf16.mxu0 0
    %3068 = vmatpush1.bf16.msra.mxu0 0
    %3069 = vmatprep.subr.bf16.mxu0 0
    %3070 = vmatpush1.bf16.msra.mxu0 0
    %3071 = vmatprep.subr.bf16.mxu0 0
    %3072 = vmatpush1.bf16.msra.mxu0 0
    %3073 = vmatprep.subr.bf16.mxu0 0
    %3074 = vmatpush1.bf16.msra.mxu0 0
    %3075 = vmatprep.subr.bf16.mxu0 0
    %3076 = vmatpush1.bf16.msra.mxu0 0
    %3077 = vmatprep.subr.bf16.mxu0 0
    %3078 = vmatpush1.bf16.msra.mxu0 0
    %3079 = vmatprep.subr.bf16.mxu0 0
    %3080 = vmatpush1.bf16.msra.mxu0 0
    %3081 = vmatprep.subr.bf16.mxu0 0
    %3082 = vmatpush1.bf16.msra.mxu0 0
    %3083 = vmatprep.subr.bf16.mxu0 0
    %3084 = vmatpush1.bf16.msra.mxu0 0
    %3085 = vmatprep.subr.bf16.mxu0 0
    %3086 = vmatpush1.bf16.msra.mxu0 0
    %3087 = vmatprep.mubr.bf16.mxu0 0
    %3088 = vmatmul.mubr.bf16.gmra.mrb[0].mxu0 %v3050
    %v3089 = vpop.f32.mrb[0].mxu0
    %v3090 = vadd.f32 0.0, %v3089
    %v3091 = vpop.f32.mrb[0].mxu0
    %v3092 = vpop.f32.mrb[0].mxu0
    %v3093 = vpop.f32.mrb[0].mxu0
    %3094 = vdwg.mxu0
    %v3095 = vpack.c.bf16 %v3090, %v3090
    %s3096 = scalar_lea.vmem [#allocation16], 16
    %v3097 = vld [vmem:[%s3096] sm:$0xf]
    %v3098 = vld [vmem:[%s3096 + $0x4] sm:$0xf]
    %v3099 = vld [vmem:[%s3096 + $0x8] sm:$0xf]
    %v3100 = vld [vmem:[%s3096 + $0xc] sm:$0xf]
    %v3105 = vunpack.c.l.b16 %v3097
    %v3106 = vunpack.c.l.b16 %v3098
    %v3107 = vunpack.c.l.b16 %v3099
    %v3108 = vunpack.c.l.b16 %v3100
    %v3109 = vpack.c.b16 %v3106, %v3105
    %v3110 = vpack.c.b16 %v3108, %v3107
    %v3114 = vsel %vm503, %v3095, 0
    %3116 = vmatprep.subr.bf16.mxu0 0
    %3117 = vmatpush1.bf16.msra.mxu0 %v3109
    %3118 = vmatprep.subr.bf16.mxu0 0
    %3119 = vmatpush1.bf16.msra.mxu0 %v3110
    %3120 = vmatprep.subr.bf16.mxu0 0
    %3121 = vmatpush1.bf16.msra.mxu0 0
    %3122 = vmatprep.subr.bf16.mxu0 0
    %3123 = vmatpush1.bf16.msra.mxu0 0
    %3124 = vmatprep.subr.bf16.mxu0 0
    %3125 = vmatpush1.bf16.msra.mxu0 0
    %3126 = vmatprep.subr.bf16.mxu0 0
    %3127 = vmatpush1.bf16.msra.mxu0 0
    %3128 = vmatprep.subr.bf16.mxu0 0
    %3129 = vmatpush1.bf16.msra.mxu0 0
    %3130 = vmatprep.subr.bf16.mxu0 0
    %3131 = vmatpush1.bf16.msra.mxu0 0
    %3132 = vmatprep.subr.bf16.mxu0 0
    %3133 = vmatpush1.bf16.msra.mxu0 0
    %3134 = vmatprep.subr.bf16.mxu0 0
    %3135 = vmatpush1.bf16.msra.mxu0 0
    %3136 = vmatprep.subr.bf16.mxu0 0
    %3137 = vmatpush1.bf16.msra.mxu0 0
    %3138 = vmatprep.subr.bf16.mxu0 0
    %3139 = vmatpush1.bf16.msra.mxu0 0
    %3140 = vmatprep.subr.bf16.mxu0 0
    %3141 = vmatpush1.bf16.msra.mxu0 0
    %3142 = vmatprep.subr.bf16.mxu0 0
    %3143 = vmatpush1.bf16.msra.mxu0 0
    %3144 = vmatprep.subr.bf16.mxu0 0
    %3145 = vmatpush1.bf16.msra.mxu0 0
    %3146 = vmatprep.subr.bf16.mxu0 0
    %3147 = vmatpush1.bf16.msra.mxu0 0
    %3148 = vmatprep.mubr.bf16.mxu0 0
    %3149 = vmatmul.mubr.bf16.gmra.mrb[0].mxu0 %v3114
    %v3150 = vpop.f32.mrb[0].mxu0
    %v3151 = vadd.f32 0.0, %v3150
    %v3152 = vpop.f32.mrb[0].mxu0
    %v3153 = vpop.f32.mrb[0].mxu0
    %v3154 = vpop.f32.mrb[0].mxu0
    %3155 = vdwg.mxu0
    %v3160 = vunpack.c.l.b16 %v2977
    %v3161 = vunpack.c.l.b16 %v2978
    %v3162 = vunpack.c.l.b16 %v2979
    %v3163 = vunpack.c.l.b16 %v2980
    %v3164 = vpack.c.b16 %v3161, %v3160
    %v3165 = vpack.c.b16 %v3163, %v3162
    %v3169 = vsel %vm503, %v2976, 0
    %3171 = vmatprep.subr.bf16.mxu0 0
    %3172 = vmatpush1.bf16.msra.mxu0 %v3164
    %3173 = vmatprep.subr.bf16.mxu0 0
    %3174 = vmatpush1.bf16.msra.mxu0 %v3165
    %3175 = vmatprep.subr.bf16.mxu0 0
    %3176 = vmatpush1.bf16.msra.mxu0 0
    %3177 = vmatprep.subr.bf16.mxu0 0
    %3178 = vmatpush1.bf16.msra.mxu0 0
    %3179 = vmatprep.subr.bf16.mxu0 0
    %3180 = vmatpush1.bf16.msra.mxu0 0
    %3181 = vmatprep.subr.bf16.mxu0 0
    %3182 = vmatpush1.bf16.msra.mxu0 0
    %3183 = vmatprep.subr.bf16.mxu0 0
    %3184 = vmatpush1.bf16.msra.mxu0 0
    %3185 = vmatprep.subr.bf16.mxu0 0
    %3186 = vmatpush1.bf16.msra.mxu0 0
    %3187 = vmatprep.subr.bf16.mxu0 0
    %3188 = vmatpush1.bf16.msra.mxu0 0
    %3189 = vmatprep.subr.bf16.mxu0 0
    %3190 = vmatpush1.bf16.msra.mxu0 0
    %3191 = vmatprep.subr.bf16.mxu0 0
    %3192 = vmatpush1.bf16.msra.mxu0 0
    %3193 = vmatprep.subr.bf16.mxu0 0
    %3194 = vmatpush1.bf16.msra.mxu0 0
    %3195 = vmatprep.subr.bf16.mxu0 0
    %3196 = vmatpush1.bf16.msra.mxu0 0
    %3197 = vmatprep.subr.bf16.mxu0 0
    %3198 = vmatpush1.bf16.msra.mxu0 0
    %3199 = vmatprep.subr.bf16.mxu0 0
    %3200 = vmatpush1.bf16.msra.mxu0 0
    %3201 = vmatprep.subr.bf16.mxu0 0
    %3202 = vmatpush1.bf16.msra.mxu0 0
    %3203 = vmatprep.mubr.bf16.mxu0 0
    %3204 = vmatmul.mubr.bf16.gmra.mrb[0].mxu0 %v3169
    %v3205 = vpop.f32.mrb[0].mxu0
    %v3206 = vadd.f32 %v3151, %v3205
    %v3207 = vpop.f32.mrb[0].mxu0
    %v3208 = vpop.f32.mrb[0].mxu0
    %v3209 = vpop.f32.mrb[0].mxu0
    %3210 = vdwg.mxu0
    %3211 = vrot.lane.b32.xlu0 %v2868, 64
    %v3212 = vpop.permute.xlu0 %3211
    %3213 = vrot.lane.b32.xlu0 %v2869, 64
    %v3214 = vpop.permute.xlu0 %3213
    %v3216 = vsel %vm503, %v3212, 0
    %v3219 = vsel %vm503, %v3214, 0
    %3221 = vmatprep.subr.bf16.mxu0 0
    %3222 = vmatpush1.bf16.xpose.msra.mxu0 %v3219
    %3223 = vmatprep.subr.bf16.mxu0 0
    %3224 = vmatpush1.bf16.xpose.msra.mxu0 0
    %3225 = vmatprep.subr.bf16.mxu0 0
    %3226 = vmatpush1.bf16.xpose.msra.mxu0 0
    %3227 = vmatprep.subr.bf16.mxu0 0
    %3228 = vmatpush1.bf16.xpose.msra.mxu0 0
    %3229 = vmatprep.subr.bf16.mxu0 0
    %3230 = vmatpush1.bf16.xpose.msra.mxu0 0
    %3231 = vmatprep.subr.bf16.mxu0 0
    %3232 = vmatpush1.bf16.xpose.msra.mxu0 0
    %3233 = vmatprep.subr.bf16.mxu0 0
    %3234 = vmatpush1.bf16.xpose.msra.mxu0 0
    %3235 = vmatprep.subr.bf16.mxu0 0
    %3236 = vmatpush1.bf16.xpose.msra.mxu0 0
    %3237 = vmatprep.subr.bf16.mxu0 0
    %3238 = vmatpush1.bf16.xpose.msra.mxu0 0
    %3239 = vmatprep.subr.bf16.mxu0 0
    %3240 = vmatpush1.bf16.xpose.msra.mxu0 0
    %3241 = vmatprep.subr.bf16.mxu0 0
    %3242 = vmatpush1.bf16.xpose.msra.mxu0 0
    %3243 = vmatprep.subr.bf16.mxu0 0
    %3244 = vmatpush1.bf16.xpose.msra.mxu0 0
    %3245 = vmatprep.subr.bf16.mxu0 0
    %3246 = vmatpush1.bf16.xpose.msra.mxu0 0
    %3247 = vmatprep.subr.bf16.mxu0 0
    %3248 = vmatpush1.bf16.xpose.msra.mxu0 0
    %3249 = vmatprep.subr.bf16.mxu0 0
    %3250 = vmatpush1.bf16.xpose.msra.mxu0 0
    %3251 = vmatprep.subr.bf16.mxu0 0
    %3252 = vmatpush1.bf16.xpose.msra.mxu0 0
    %3253 = vmatprep.mubr.bf16.mxu0 0
    %3254 = vmatmul.mubr.bf16.gmra.mrb[0].mxu0 %v3216
    %v3255 = vpop.f32.mrb[0].mxu0
    %v3256 = vadd.f32 0.0, %v3255
    %v3257 = vpop.f32.mrb[0].mxu0
    %v3258 = vpop.f32.mrb[0].mxu0
    %v3259 = vpop.f32.mrb[0].mxu0
    %3260 = vdwg.mxu0
    %v3261 = vmul.f32 %v3256, 0.17677669
    %v3262 = vsel %vm551, %v3261, -inf
    %3263 = vmax.xlane.f32.xlu0 %v3262
    %v3264 = vpop.xlane.xlu0 %3263
    %v3265 = vsub.f32 %v3261, %v3264
    %v3266 = vmul.f32 %v3265, 1.442695
    %v3267 = vpow.pop %v3266
    %v3268 = vsel %vm551, %v3267, 0.0
    %3269 = vadd.xlane.f32.xlu0 %v3268
    %v3270 = vpop.xlane.xlu0 %3269
    %v3271 = vrcp.pop %v3270
    %v3272 = vmul.f32 %v3267, %v3271
    %v3273 = vpack.c.bf16 %v3272, %v3272
    %3274 = vrot.lane.b32.xlu0 %v2870, 64
    %v3275 = vpop.permute.xlu0 %3274
    %v3277 = vsel %vm551, %v3273, 0
    %v3280 = vsel %vm567, %v3275, 0
    %3282 = vmatprep.subr.bf16.mxu0 0
    %3283 = vmatpush1.bf16.msra.mxu0 %v3280
    %3284 = vmatprep.subr.bf16.mxu0 0
    %3285 = vmatpush1.bf16.msra.mxu0 0
    %3286 = vmatprep.subr.bf16.mxu0 0
    %3287 = vmatpush1.bf16.msra.mxu0 0
    %3288 = vmatprep.subr.bf16.mxu0 0
    %3289 = vmatpush1.bf16.msra.mxu0 0
    %3290 = vmatprep.subr.bf16.mxu0 0
    %3291 = vmatpush1.bf16.msra.mxu0 0
    %3292 = vmatprep.subr.bf16.mxu0 0
    %3293 = vmatpush1.bf16.msra.mxu0 0
    %3294 = vmatprep.subr.bf16.mxu0 0
    %3295 = vmatpush1.bf16.msra.mxu0 0
    %3296 = vmatprep.subr.bf16.mxu0 0
    %3297 = vmatpush1.bf16.msra.mxu0 0
    %3298 = vmatprep.subr.bf16.mxu0 0
    %3299 = vmatpush1.bf16.msra.mxu0 0
    %3300 = vmatprep.subr.bf16.mxu0 0
    %3301 = vmatpush1.bf16.msra.mxu0 0
    %3302 = vmatprep.subr.bf16.mxu0 0
    %3303 = vmatpush1.bf16.msra.mxu0 0
    %3304 = vmatprep.subr.bf16.mxu0 0
    %3305 = vmatpush1.bf16.msra.mxu0 0
    %3306 = vmatprep.subr.bf16.mxu0 0
    %3307 = vmatpush1.bf16.msra.mxu0 0
    %3308 = vmatprep.subr.bf16.mxu0 0
    %3309 = vmatpush1.bf16.msra.mxu0 0
    %3310 = vmatprep.subr.bf16.mxu0 0
    %3311 = vmatpush1.bf16.msra.mxu0 0
    %3312 = vmatprep.subr.bf16.mxu0 0
    %3313 = vmatpush1.bf16.msra.mxu0 0
    %3314 = vmatprep.mubr.bf16.mxu0 0
    %3315 = vmatmul.mubr.bf16.gmra.mrb[0].mxu0 %v3277
    %v3316 = vpop.f32.mrb[0].mxu0
    %v3317 = vadd.f32 0.0, %v3316
    %v3318 = vpop.f32.mrb[0].mxu0
    %v3319 = vpop.f32.mrb[0].mxu0
    %v3320 = vpop.f32.mrb[0].mxu0
    %3321 = vdwg.mxu0
    %v3322 = vpack.c.bf16 %v3317, %v3317
    %s3323 = scalar_lea.vmem [#allocation16], 32
    %v3324 = vld [vmem:[%s3323] sm:$0xf]
    %v3325 = vld [vmem:[%s3323 + $0x4] sm:$0xf]
    %v3326 = vld [vmem:[%s3323 + $0x8] sm:$0xf]
    %v3327 = vld [vmem:[%s3323 + $0xc] sm:$0xf]
    %v3332 = vunpack.c.l.b16 %v3324
    %v3333 = vunpack.c.l.b16 %v3325
    %v3334 = vunpack.c.l.b16 %v3326
    %v3335 = vunpack.c.l.b16 %v3327
    %v3336 = vpack.c.b16 %v3333, %v3332
    %v3337 = vpack.c.b16 %v3335, %v3334
    %v3341 = vsel %vm503, %v3322, 0
    %3343 = vmatprep.subr.bf16.mxu0 0
    %3344 = vmatpush1.bf16.msra.mxu0 %v3336
    %3345 = vmatprep.subr.bf16.mxu0 0
    %3346 = vmatpush1.bf16.msra.mxu0 %v3337
    %3347 = vmatprep.subr.bf16.mxu0 0
    %3348 = vmatpush1.bf16.msra.mxu0 0
    %3349 = vmatprep.subr.bf16.mxu0 0
    %3350 = vmatpush1.bf16.msra.mxu0 0
    %3351 = vmatprep.subr.bf16.mxu0 0
    %3352 = vmatpush1.bf16.msra.mxu0 0
    %3353 = vmatprep.subr.bf16.mxu0 0
    %3354 = vmatpush1.bf16.msra.mxu0 0
    %3355 = vmatprep.subr.bf16.mxu0 0
    %3356 = vmatpush1.bf16.msra.mxu0 0
    %3357 = vmatprep.subr.bf16.mxu0 0
    %3358 = vmatpush1.bf16.msra.mxu0 0
    %3359 = vmatprep.subr.bf16.mxu0 0
    %3360 = vmatpush1.bf16.msra.mxu0 0
    %3361 = vmatprep.subr.bf16.mxu0 0
    %3362 = vmatpush1.bf16.msra.mxu0 0
    %3363 = vmatprep.subr.bf16.mxu0 0
    %3364 = vmatpush1.bf16.msra.mxu0 0
    %3365 = vmatprep.subr.bf16.mxu0 0
    %3366 = vmatpush1.bf16.msra.mxu0 0
    %3367 = vmatprep.subr.bf16.mxu0 0
    %3368 = vmatpush1.bf16.msra.mxu0 0
    %3369 = vmatprep.subr.bf16.mxu0 0
    %3370 = vmatpush1.bf16.msra.mxu0 0
    %3371 = vmatprep.subr.bf16.mxu0 0
    %3372 = vmatpush1.bf16.msra.mxu0 0
    %3373 = vmatprep.subr.bf16.mxu0 0
    %3374 = vmatpush1.bf16.msra.mxu0 0
    %3375 = vmatprep.mubr.bf16.mxu0 0
    %3376 = vmatmul.mubr.bf16.gmra.mrb[0].mxu0 %v3341
    %v3377 = vpop.f32.mrb[0].mxu0
    %v3378 = vadd.f32 0.0, %v3377
    %v3379 = vpop.f32.mrb[0].mxu0
    %v3380 = vpop.f32.mrb[0].mxu0
    %v3381 = vpop.f32.mrb[0].mxu0
    %3382 = vdwg.mxu0
    %v3383 = vadd.f32 %v3206, %v3378
    %3384 = vrot.lane.b32.xlu0 %v2868, 32
    %v3385 = vpop.permute.xlu0 %3384
    %3386 = vrot.lane.b32.xlu0 %v2869, 32
    %v3387 = vpop.permute.xlu0 %3386
    %v3389 = vsel %vm503, %v3385, 0
    %v3392 = vsel %vm503, %v3387, 0
    %3394 = vmatprep.subr.bf16.mxu0 0
    %3395 = vmatpush1.bf16.xpose.msra.mxu0 %v3392
    %3396 = vmatprep.subr.bf16.mxu0 0
    %3397 = vmatpush1.bf16.xpose.msra.mxu0 0
    %3398 = vmatprep.subr.bf16.mxu0 0
    %3399 = vmatpush1.bf16.xpose.msra.mxu0 0
    %3400 = vmatprep.subr.bf16.mxu0 0
    %3401 = vmatpush1.bf16.xpose.msra.mxu0 0
    %3402 = vmatprep.subr.bf16.mxu0 0
    %3403 = vmatpush1.bf16.xpose.msra.mxu0 0
    %3404 = vmatprep.subr.bf16.mxu0 0
    %3405 = vmatpush1.bf16.xpose.msra.mxu0 0
    %3406 = vmatprep.subr.bf16.mxu0 0
    %3407 = vmatpush1.bf16.xpose.msra.mxu0 0
    %3408 = vmatprep.subr.bf16.mxu0 0
    %3409 = vmatpush1.bf16.xpose.msra.mxu0 0
    %3410 = vmatprep.subr.bf16.mxu0 0
    %3411 = vmatpush1.bf16.xpose.msra.mxu0 0
    %3412 = vmatprep.subr.bf16.mxu0 0
    %3413 = vmatpush1.bf16.xpose.msra.mxu0 0
    %3414 = vmatprep.subr.bf16.mxu0 0
    %3415 = vmatpush1.bf16.xpose.msra.mxu0 0
    %3416 = vmatprep.subr.bf16.mxu0 0
    %3417 = vmatpush1.bf16.xpose.msra.mxu0 0
    %3418 = vmatprep.subr.bf16.mxu0 0
    %3419 = vmatpush1.bf16.xpose.msra.mxu0 0
    %3420 = vmatprep.subr.bf16.mxu0 0
    %3421 = vmatpush1.bf16.xpose.msra.mxu0 0
    %3422 = vmatprep.subr.bf16.mxu0 0
    %3423 = vmatpush1.bf16.xpose.msra.mxu0 0
    %3424 = vmatprep.subr.bf16.mxu0 0
    %3425 = vmatpush1.bf16.xpose.msra.mxu0 0
    %3426 = vmatprep.mubr.bf16.mxu0 0
    %3427 = vmatmul.mubr.bf16.gmra.mrb[0].mxu0 %v3389
    %v3428 = vpop.f32.mrb[0].mxu0
    %v3429 = vadd.f32 0.0, %v3428
    %v3430 = vpop.f32.mrb[0].mxu0
    %v3431 = vpop.f32.mrb[0].mxu0
    %v3432 = vpop.f32.mrb[0].mxu0
    %3433 = vdwg.mxu0
    %v3434 = vmul.f32 %v3429, 0.17677669
    %v3435 = vsel %vm551, %v3434, -inf
    %3436 = vmax.xlane.f32.xlu0 %v3435
    %v3437 = vpop.xlane.xlu0 %3436
    %v3438 = vsub.f32 %v3434, %v3437
    %v3439 = vmul.f32 %v3438, 1.442695
    %v3440 = vpow.pop %v3439
    %v3441 = vsel %vm551, %v3440, 0.0
    %3442 = vadd.xlane.f32.xlu0 %v3441
    %v3443 = vpop.xlane.xlu0 %3442
    %v3444 = vrcp.pop %v3443
    %v3445 = vmul.f32 %v3440, %v3444
    %v3446 = vpack.c.bf16 %v3445, %v3445
    %3447 = vrot.lane.b32.xlu0 %v2870, 32
    %v3448 = vpop.permute.xlu0 %3447
    %v3450 = vsel %vm551, %v3446, 0
    %v3453 = vsel %vm567, %v3448, 0
    %3455 = vmatprep.subr.bf16.mxu0 0
    %3456 = vmatpush1.bf16.msra.mxu0 %v3453
    %3457 = vmatprep.subr.bf16.mxu0 0
    %3458 = vmatpush1.bf16.msra.mxu0 0
    %3459 = vmatprep.subr.bf16.mxu0 0
    %3460 = vmatpush1.bf16.msra.mxu0 0
    %3461 = vmatprep.subr.bf16.mxu0 0
    %3462 = vmatpush1.bf16.msra.mxu0 0
    %3463 = vmatprep.subr.bf16.mxu0 0
    %3464 = vmatpush1.bf16.msra.mxu0 0
    %3465 = vmatprep.subr.bf16.mxu0 0
    %3466 = vmatpush1.bf16.msra.mxu0 0
    %3467 = vmatprep.subr.bf16.mxu0 0
    %3468 = vmatpush1.bf16.msra.mxu0 0
    %3469 = vmatprep.subr.bf16.mxu0 0
    %3470 = vmatpush1.bf16.msra.mxu0 0
    %3471 = vmatprep.subr.bf16.mxu0 0
    %3472 = vmatpush1.bf16.msra.mxu0 0
    %3473 = vmatprep.subr.bf16.mxu0 0
    %3474 = vmatpush1.bf16.msra.mxu0 0
    %3475 = vmatprep.subr.bf16.mxu0 0
    %3476 = vmatpush1.bf16.msra.mxu0 0
    %3477 = vmatprep.subr.bf16.mxu0 0
    %3478 = vmatpush1.bf16.msra.mxu0 0
    %3479 = vmatprep.subr.bf16.mxu0 0
    %3480 = vmatpush1.bf16.msra.mxu0 0
    %3481 = vmatprep.subr.bf16.mxu0 0
    %3482 = vmatpush1.bf16.msra.mxu0 0
    %3483 = vmatprep.subr.bf16.mxu0 0
    %3484 = vmatpush1.bf16.msra.mxu0 0
    %3485 = vmatprep.subr.bf16.mxu0 0
    %3486 = vmatpush1.bf16.msra.mxu0 0
    %3487 = vmatprep.mubr.bf16.mxu0 0
    %3488 = vmatmul.mubr.bf16.gmra.mrb[0].mxu0 %v3450
    %v3489 = vpop.f32.mrb[0].mxu0
    %v3490 = vadd.f32 0.0, %v3489
    %v3491 = vpop.f32.mrb[0].mxu0
    %v3492 = vpop.f32.mrb[0].mxu0
    %v3493 = vpop.f32.mrb[0].mxu0
    %3494 = vdwg.mxu0
    %v3495 = vpack.c.bf16 %v3490, %v3490
    %s3496 = scalar_lea.vmem [#allocation16], 48
    %v3497 = vld [vmem:[%s3496] sm:$0xf]
    %v3498 = vld [vmem:[%s3496 + $0x4] sm:$0xf]
    %v3499 = vld [vmem:[%s3496 + $0x8] sm:$0xf]
    %v3500 = vld [vmem:[%s3496 + $0xc] sm:$0xf]
    %v3505 = vunpack.c.l.b16 %v3497
    %v3506 = vunpack.c.l.b16 %v3498
    %v3507 = vunpack.c.l.b16 %v3499
    %v3508 = vunpack.c.l.b16 %v3500
    %v3509 = vpack.c.b16 %v3506, %v3505
    %v3510 = vpack.c.b16 %v3508, %v3507
    %v3514 = vsel %vm503, %v3495, 0
    %3516 = vmatprep.subr.bf16.mxu0 0
    %3517 = vmatpush1.bf16.msra.mxu0 %v3509
    %3518 = vmatprep.subr.bf16.mxu0 0
    %3519 = vmatpush1.bf16.msra.mxu0 %v3510
    %3520 = vmatprep.subr.bf16.mxu0 0
    %3521 = vmatpush1.bf16.msra.mxu0 0
    %3522 = vmatprep.subr.bf16.mxu0 0
    %3523 = vmatpush1.bf16.msra.mxu0 0
    %3524 = vmatprep.subr.bf16.mxu0 0
    %3525 = vmatpush1.bf16.msra.mxu0 0
    %3526 = vmatprep.subr.bf16.mxu0 0
    %3527 = vmatpush1.bf16.msra.mxu0 0
    %3528 = vmatprep.subr.bf16.mxu0 0
    %3529 = vmatpush1.bf16.msra.mxu0 0
    %3530 = vmatprep.subr.bf16.mxu0 0
    %3531 = vmatpush1.bf16.msra.mxu0 0
    %3532 = vmatprep.subr.bf16.mxu0 0
    %3533 = vmatpush1.bf16.msra.mxu0 0
    %3534 = vmatprep.subr.bf16.mxu0 0
    %3535 = vmatpush1.bf16.msra.mxu0 0
    %3536 = vmatprep.subr.bf16.mxu0 0
    %3537 = vmatpush1.bf16.msra.mxu0 0
    %3538 = vmatprep.subr.bf16.mxu0 0
    %3539 = vmatpush1.bf16.msra.mxu0 0
    %3540 = vmatprep.subr.bf16.mxu0 0
    %3541 = vmatpush1.bf16.msra.mxu0 0
    %3542 = vmatprep.subr.bf16.mxu0 0
    %3543 = vmatpush1.bf16.msra.mxu0 0
    %3544 = vmatprep.subr.bf16.mxu0 0
    %3545 = vmatpush1.bf16.msra.mxu0 0
    %3546 = vmatprep.subr.bf16.mxu0 0
    %3547 = vmatpush1.bf16.msra.mxu0 0
    %3548 = vmatprep.mubr.bf16.mxu0 0
    %3549 = vmatmul.mubr.bf16.gmra.mrb[0].mxu0 %v3514
    %v3550 = vpop.f32.mrb[0].mxu0
    %v3551 = vadd.f32 0.0, %v3550
    %v3552 = vpop.f32.mrb[0].mxu0
    %v3553 = vpop.f32.mrb[0].mxu0
    %v3554 = vpop.f32.mrb[0].mxu0
    %3555 = vdwg.mxu0
    %v3556 = vadd.f32 %v3383, %v3551
    %v3557 = vpack.c.bf16 %v2823, %v2823
    %v3558 = vpack.c.bf16 %v2825, %v2825
    %v3559 = vpack.c.bf16 %v2865, %v2865
    %v3561 = vsel %vm503, %v3557, 0
    %v3564 = vsel %vm503, %v3558, 0
    %3566 = vmatprep.subr.bf16.mxu0 0
    %3567 = vmatpush1.bf16.xpose.msra.mxu0 %v3564
    %3568 = vmatprep.subr.bf16.mxu0 0
    %3569 = vmatpush1.bf16.xpose.msra.mxu0 0
    %3570 = vmatprep.subr.bf16.mxu0 0
    %3571 = vmatpush1.bf16.xpose.msra.mxu0 0
    %3572 = vmatprep.subr.bf16.mxu0 0
    %3573 = vmatpush1.bf16.xpose.msra.mxu0 0
    %3574 = vmatprep.subr.bf16.mxu0 0
    %3575 = vmatpush1.bf16.xpose.msra.mxu0 0
    %3576 = vmatprep.subr.bf16.mxu0 0
    %3577 = vmatpush1.bf16.xpose.msra.mxu0 0
    %3578 = vmatprep.subr.bf16.mxu0 0
    %3579 = vmatpush1.bf16.xpose.msra.mxu0 0
    %3580 = vmatprep.subr.bf16.mxu0 0
    %3581 = vmatpush1.bf16.xpose.msra.mxu0 0
    %3582 = vmatprep.subr.bf16.mxu0 0
    %3583 = vmatpush1.bf16.xpose.msra.mxu0 0
    %3584 = vmatprep.subr.bf16.mxu0 0
    %3585 = vmatpush1.bf16.xpose.msra.mxu0 0
    %3586 = vmatprep.subr.bf16.mxu0 0
    %3587 = vmatpush1.bf16.xpose.msra.mxu0 0
    %3588 = vmatprep.subr.bf16.mxu0 0
    %3589 = vmatpush1.bf16.xpose.msra.mxu0 0
    %3590 = vmatprep.subr.bf16.mxu0 0
    %3591 = vmatpush1.bf16.xpose.msra.mxu0 0
    %3592 = vmatprep.subr.bf16.mxu0 0
    %3593 = vmatpush1.bf16.xpose.msra.mxu0 0
    %3594 = vmatprep.subr.bf16.mxu0 0
    %3595 = vmatpush1.bf16.xpose.msra.mxu0 0
    %3596 = vmatprep.subr.bf16.mxu0 0
    %3597 = vmatpush1.bf16.xpose.msra.mxu0 0
    %3598 = vmatprep.mubr.bf16.mxu0 0
    %3599 = vmatmul.mubr.bf16.gmra.mrb[0].mxu0 %v3561
    %v3600 = vpop.f32.mrb[0].mxu0
    %v3601 = vadd.f32 0.0, %v3600
    %v3602 = vpop.f32.mrb[0].mxu0
    %v3603 = vpop.f32.mrb[0].mxu0
    %v3604 = vpop.f32.mrb[0].mxu0
    %3605 = vdwg.mxu0
    %v3606 = vmul.f32 %v3601, 0.17677669
    %v3607 = vsel %vm551, %v3606, -inf
    %3608 = vmax.xlane.f32.xlu0 %v3607
    %v3609 = vpop.xlane.xlu0 %3608
    %v3610 = vsub.f32 %v3606, %v3609
    %v3611 = vmul.f32 %v3610, 1.442695
    %v3612 = vpow.pop %v3611
    %v3613 = vsel %vm551, %v3612, 0.0
    %3614 = vadd.xlane.f32.xlu0 %v3613
    %v3615 = vpop.xlane.xlu0 %3614
    %v3616 = vrcp.pop %v3615
    %v3617 = vmul.f32 %v3612, %v3616
    %v3618 = vpack.c.bf16 %v3617, %v3617
    %v3620 = vsel %vm551, %v3618, 0
    %v3623 = vsel %vm567, %v3559, 0
    %3625 = vmatprep.subr.bf16.mxu0 0
    %3626 = vmatpush1.bf16.msra.mxu0 %v3623
    %3627 = vmatprep.subr.bf16.mxu0 0
    %3628 = vmatpush1.bf16.msra.mxu0 0
    %3629 = vmatprep.subr.bf16.mxu0 0
    %3630 = vmatpush1.bf16.msra.mxu0 0
    %3631 = vmatprep.subr.bf16.mxu0 0
    %3632 = vmatpush1.bf16.msra.mxu0 0
    %3633 = vmatprep.subr.bf16.mxu0 0
    %3634 = vmatpush1.bf16.msra.mxu0 0
    %3635 = vmatprep.subr.bf16.mxu0 0
    %3636 = vmatpush1.bf16.msra.mxu0 0
    %3637 = vmatprep.subr.bf16.mxu0 0
    %3638 = vmatpush1.bf16.msra.mxu0 0
    %3639 = vmatprep.subr.bf16.mxu0 0
    %3640 = vmatpush1.bf16.msra.mxu0 0
    %3641 = vmatprep.subr.bf16.mxu0 0
    %3642 = vmatpush1.bf16.msra.mxu0 0
    %3643 = vmatprep.subr.bf16.mxu0 0
    %3644 = vmatpush1.bf16.msra.mxu0 0
    %3645 = vmatprep.subr.bf16.mxu0 0
    %3646 = vmatpush1.bf16.msra.mxu0 0
    %3647 = vmatprep.subr.bf16.mxu0 0
    %3648 = vmatpush1.bf16.msra.mxu0 0
    %3649 = vmatprep.subr.bf16.mxu0 0
    %3650 = vmatpush1.bf16.msra.mxu0 0
    %3651 = vmatprep.subr.bf16.mxu0 0
    %3652 = vmatpush1.bf16.msra.mxu0 0
    %3653 = vmatprep.subr.bf16.mxu0 0
    %3654 = vmatpush1.bf16.msra.mxu0 0
    %3655 = vmatprep.subr.bf16.mxu0 0
    %3656 = vmatpush1.bf16.msra.mxu0 0
    %3657 = vmatprep.mubr.bf16.mxu0 0
    %3658 = vmatmul.mubr.bf16.gmra.mrb[0].mxu0 %v3620
    %v3659 = vpop.f32.mrb[0].mxu0
    %v3660 = vadd.f32 0.0, %v3659
    %v3661 = vpop.f32.mrb[0].mxu0
    %v3662 = vpop.f32.mrb[0].mxu0
    %v3663 = vpop.f32.mrb[0].mxu0
    %3664 = vdwg.mxu0
    %v3665 = vpack.c.bf16 %v3660, %v3660
    %3667 = vrot.lane.b32.xlu0 %v3557, 96
    %v3668 = vpop.permute.xlu0 %3667
    %3670 = vrot.lane.b32.xlu0 %v3558, 96
    %v3671 = vpop.permute.xlu0 %3670
    %v3673 = vsel %vm503, %v3668, 0
    %v3676 = vsel %vm503, %v3671, 0
    %3678 = vmatprep.subr.bf16.mxu0 0
    %3679 = vmatpush1.bf16.xpose.msra.mxu0 %v3676
    %3680 = vmatprep.subr.bf16.mxu0 0
    %3681 = vmatpush1.bf16.xpose.msra.mxu0 0
    %3682 = vmatprep.subr.bf16.mxu0 0
    %3683 = vmatpush1.bf16.xpose.msra.mxu0 0
    %3684 = vmatprep.subr.bf16.mxu0 0
    %3685 = vmatpush1.bf16.xpose.msra.mxu0 0
    %3686 = vmatprep.subr.bf16.mxu0 0
    %3687 = vmatpush1.bf16.xpose.msra.mxu0 0
    %3688 = vmatprep.subr.bf16.mxu0 0
    %3689 = vmatpush1.bf16.xpose.msra.mxu0 0
    %3690 = vmatprep.subr.bf16.mxu0 0
    %3691 = vmatpush1.bf16.xpose.msra.mxu0 0
    %3692 = vmatprep.subr.bf16.mxu0 0
    %3693 = vmatpush1.bf16.xpose.msra.mxu0 0
    %3694 = vmatprep.subr.bf16.mxu0 0
    %3695 = vmatpush1.bf16.xpose.msra.mxu0 0
    %3696 = vmatprep.subr.bf16.mxu0 0
    %3697 = vmatpush1.bf16.xpose.msra.mxu0 0
    %3698 = vmatprep.subr.bf16.mxu0 0
    %3699 = vmatpush1.bf16.xpose.msra.mxu0 0
    %3700 = vmatprep.subr.bf16.mxu0 0
    %3701 = vmatpush1.bf16.xpose.msra.mxu0 0
    %3702 = vmatprep.subr.bf16.mxu0 0
    %3703 = vmatpush1.bf16.xpose.msra.mxu0 0
    %3704 = vmatprep.subr.bf16.mxu0 0
    %3705 = vmatpush1.bf16.xpose.msra.mxu0 0
    %3706 = vmatprep.subr.bf16.mxu0 0
    %3707 = vmatpush1.bf16.xpose.msra.mxu0 0
    %3708 = vmatprep.subr.bf16.mxu0 0
    %3709 = vmatpush1.bf16.xpose.msra.mxu0 0
    %3710 = vmatprep.mubr.bf16.mxu0 0
    %3711 = vmatmul.mubr.bf16.gmra.mrb[0].mxu0 %v3673
    %v3712 = vpop.f32.mrb[0].mxu0
    %v3713 = vadd.f32 0.0, %v3712
    %v3714 = vpop.f32.mrb[0].mxu0
    %v3715 = vpop.f32.mrb[0].mxu0
    %v3716 = vpop.f32.mrb[0].mxu0
    %3717 = vdwg.mxu0
    %v3718 = vmul.f32 %v3713, 0.17677669
    %v3719 = vsel %vm551, %v3718, -inf
    %3720 = vmax.xlane.f32.xlu0 %v3719
    %v3721 = vpop.xlane.xlu0 %3720
    %v3722 = vsub.f32 %v3718, %v3721
    %v3723 = vmul.f32 %v3722, 1.442695
    %v3724 = vpow.pop %v3723
    %v3725 = vsel %vm551, %v3724, 0.0
    %3726 = vadd.xlane.f32.xlu0 %v3725
    %v3727 = vpop.xlane.xlu0 %3726
    %v3728 = vrcp.pop %v3727
    %v3729 = vmul.f32 %v3724, %v3728
    %v3730 = vpack.c.bf16 %v3729, %v3729
    %3732 = vrot.lane.b32.xlu0 %v3559, 96
    %v3733 = vpop.permute.xlu0 %3732
    %v3735 = vsel %vm551, %v3730, 0
    %v3738 = vsel %vm567, %v3733, 0
    %3740 = vmatprep.subr.bf16.mxu0 0
    %3741 = vmatpush1.bf16.msra.mxu0 %v3738
    %3742 = vmatprep.subr.bf16.mxu0 0
    %3743 = vmatpush1.bf16.msra.mxu0 0
    %3744 = vmatprep.subr.bf16.mxu0 0
    %3745 = vmatpush1.bf16.msra.mxu0 0
    %3746 = vmatprep.subr.bf16.mxu0 0
    %3747 = vmatpush1.bf16.msra.mxu0 0
    %3748 = vmatprep.subr.bf16.mxu0 0
    %3749 = vmatpush1.bf16.msra.mxu0 0
    %3750 = vmatprep.subr.bf16.mxu0 0
    %3751 = vmatpush1.bf16.msra.mxu0 0
    %3752 = vmatprep.subr.bf16.mxu0 0
    %3753 = vmatpush1.bf16.msra.mxu0 0
    %3754 = vmatprep.subr.bf16.mxu0 0
    %3755 = vmatpush1.bf16.msra.mxu0 0
    %3756 = vmatprep.subr.bf16.mxu0 0
    %3757 = vmatpush1.bf16.msra.mxu0 0
    %3758 = vmatprep.subr.bf16.mxu0 0
    %3759 = vmatpush1.bf16.msra.mxu0 0
    %3760 = vmatprep.subr.bf16.mxu0 0
    %3761 = vmatpush1.bf16.msra.mxu0 0
    %3762 = vmatprep.subr.bf16.mxu0 0
    %3763 = vmatpush1.bf16.msra.mxu0 0
    %3764 = vmatprep.subr.bf16.mxu0 0
    %3765 = vmatpush1.bf16.msra.mxu0 0
    %3766 = vmatprep.subr.bf16.mxu0 0
    %3767 = vmatpush1.bf16.msra.mxu0 0
    %3768 = vmatprep.subr.bf16.mxu0 0
    %3769 = vmatpush1.bf16.msra.mxu0 0
    %3770 = vmatprep.subr.bf16.mxu0 0
    %3771 = vmatpush1.bf16.msra.mxu0 0
    %3772 = vmatprep.mubr.bf16.mxu0 0
    %3773 = vmatmul.mubr.bf16.gmra.mrb[0].mxu0 %v3735
    %v3774 = vpop.f32.mrb[0].mxu0
    %v3775 = vadd.f32 0.0, %v3774
    %v3776 = vpop.f32.mrb[0].mxu0
    %v3777 = vpop.f32.mrb[0].mxu0
    %v3778 = vpop.f32.mrb[0].mxu0
    %3779 = vdwg.mxu0
    %v3780 = vpack.c.bf16 %v3775, %v3775
    %v3782 = vsel %vm503, %v3780, 0
    %3784 = vmatprep.subr.bf16.mxu0 0
    %3785 = vmatpush1.bf16.msra.mxu0 %v3109
    %3786 = vmatprep.subr.bf16.mxu0 0
    %3787 = vmatpush1.bf16.msra.mxu0 %v3110
    %3788 = vmatprep.subr.bf16.mxu0 0
    %3789 = vmatpush1.bf16.msra.mxu0 0
    %3790 = vmatprep.subr.bf16.mxu0 0
    %3791 = vmatpush1.bf16.msra.mxu0 0
    %3792 = vmatprep.subr.bf16.mxu0 0
    %3793 = vmatpush1.bf16.msra.mxu0 0
    %3794 = vmatprep.subr.bf16.mxu0 0
    %3795 = vmatpush1.bf16.msra.mxu0 0
    %3796 = vmatprep.subr.bf16.mxu0 0
    %3797 = vmatpush1.bf16.msra.mxu0 0
    %3798 = vmatprep.subr.bf16.mxu0 0
    %3799 = vmatpush1.bf16.msra.mxu0 0
    %3800 = vmatprep.subr.bf16.mxu0 0
    %3801 = vmatpush1.bf16.msra.mxu0 0
    %3802 = vmatprep.subr.bf16.mxu0 0
    %3803 = vmatpush1.bf16.msra.mxu0 0
    %3804 = vmatprep.subr.bf16.mxu0 0
    %3805 = vmatpush1.bf16.msra.mxu0 0
    %3806 = vmatprep.subr.bf16.mxu0 0
    %3807 = vmatpush1.bf16.msra.mxu0 0
    %3808 = vmatprep.subr.bf16.mxu0 0
    %3809 = vmatpush1.bf16.msra.mxu0 0
    %3810 = vmatprep.subr.bf16.mxu0 0
    %3811 = vmatpush1.bf16.msra.mxu0 0
    %3812 = vmatprep.subr.bf16.mxu0 0
    %3813 = vmatpush1.bf16.msra.mxu0 0
    %3814 = vmatprep.subr.bf16.mxu0 0
    %3815 = vmatpush1.bf16.msra.mxu0 0
    %3816 = vmatprep.mubr.bf16.mxu0 0
    %3817 = vmatmul.mubr.bf16.gmra.mrb[0].mxu0 %v3782
    %v3818 = vpop.f32.mrb[0].mxu0
    %v3819 = vadd.f32 0.0, %v3818
    %v3820 = vpop.f32.mrb[0].mxu0
    %v3821 = vpop.f32.mrb[0].mxu0
    %v3822 = vpop.f32.mrb[0].mxu0
    %3823 = vdwg.mxu0
    %v3825 = vsel %vm503, %v3665, 0
    %3827 = vmatprep.subr.bf16.mxu0 0
    %3828 = vmatpush1.bf16.msra.mxu0 %v3164
    %3829 = vmatprep.subr.bf16.mxu0 0
    %3830 = vmatpush1.bf16.msra.mxu0 %v3165
    %3831 = vmatprep.subr.bf16.mxu0 0
    %3832 = vmatpush1.bf16.msra.mxu0 0
    %3833 = vmatprep.subr.bf16.mxu0 0
    %3834 = vmatpush1.bf16.msra.mxu0 0
    %3835 = vmatprep.subr.bf16.mxu0 0
    %3836 = vmatpush1.bf16.msra.mxu0 0
    %3837 = vmatprep.subr.bf16.mxu0 0
    %3838 = vmatpush1.bf16.msra.mxu0 0
    %3839 = vmatprep.subr.bf16.mxu0 0
    %3840 = vmatpush1.bf16.msra.mxu0 0
    %3841 = vmatprep.subr.bf16.mxu0 0
    %3842 = vmatpush1.bf16.msra.mxu0 0
    %3843 = vmatprep.subr.bf16.mxu0 0
    %3844 = vmatpush1.bf16.msra.mxu0 0
    %3845 = vmatprep.subr.bf16.mxu0 0
    %3846 = vmatpush1.bf16.msra.mxu0 0
    %3847 = vmatprep.subr.bf16.mxu0 0
    %3848 = vmatpush1.bf16.msra.mxu0 0
    %3849 = vmatprep.subr.bf16.mxu0 0
    %3850 = vmatpush1.bf16.msra.mxu0 0
    %3851 = vmatprep.subr.bf16.mxu0 0
    %3852 = vmatpush1.bf16.msra.mxu0 0
    %3853 = vmatprep.subr.bf16.mxu0 0
    %3854 = vmatpush1.bf16.msra.mxu0 0
    %3855 = vmatprep.subr.bf16.mxu0 0
    %3856 = vmatpush1.bf16.msra.mxu0 0
    %3857 = vmatprep.subr.bf16.mxu0 0
    %3858 = vmatpush1.bf16.msra.mxu0 0
    %3859 = vmatprep.mubr.bf16.mxu0 0
    %3860 = vmatmul.mubr.bf16.gmra.mrb[0].mxu0 %v3825
    %v3861 = vpop.f32.mrb[0].mxu0
    %v3862 = vadd.f32 %v3819, %v3861
    %v3863 = vpop.f32.mrb[0].mxu0
    %v3864 = vpop.f32.mrb[0].mxu0
    %v3865 = vpop.f32.mrb[0].mxu0
    %3866 = vdwg.mxu0
    %3867 = vrot.lane.b32.xlu0 %v3557, 64
    %v3868 = vpop.permute.xlu0 %3867
    %3869 = vrot.lane.b32.xlu0 %v3558, 64
    %v3870 = vpop.permute.xlu0 %3869
    %v3872 = vsel %vm503, %v3868, 0
    %v3875 = vsel %vm503, %v3870, 0
    %3877 = vmatprep.subr.bf16.mxu0 0
    %3878 = vmatpush1.bf16.xpose.msra.mxu0 %v3875
    %3879 = vmatprep.subr.bf16.mxu0 0
    %3880 = vmatpush1.bf16.xpose.msra.mxu0 0
    %3881 = vmatprep.subr.bf16.mxu0 0
    %3882 = vmatpush1.bf16.xpose.msra.mxu0 0
    %3883 = vmatprep.subr.bf16.mxu0 0
    %3884 = vmatpush1.bf16.xpose.msra.mxu0 0
    %3885 = vmatprep.subr.bf16.mxu0 0
    %3886 = vmatpush1.bf16.xpose.msra.mxu0 0
    %3887 = vmatprep.subr.bf16.mxu0 0
    %3888 = vmatpush1.bf16.xpose.msra.mxu0 0
    %3889 = vmatprep.subr.bf16.mxu0 0
    %3890 = vmatpush1.bf16.xpose.msra.mxu0 0
    %3891 = vmatprep.subr.bf16.mxu0 0
    %3892 = vmatpush1.bf16.xpose.msra.mxu0 0
    %3893 = vmatprep.subr.bf16.mxu0 0
    %3894 = vmatpush1.bf16.xpose.msra.mxu0 0
    %3895 = vmatprep.subr.bf16.mxu0 0
    %3896 = vmatpush1.bf16.xpose.msra.mxu0 0
    %3897 = vmatprep.subr.bf16.mxu0 0
    %3898 = vmatpush1.bf16.xpose.msra.mxu0 0
    %3899 = vmatprep.subr.bf16.mxu0 0
    %3900 = vmatpush1.bf16.xpose.msra.mxu0 0
    %3901 = vmatprep.subr.bf16.mxu0 0
    %3902 = vmatpush1.bf16.xpose.msra.mxu0 0
    %3903 = vmatprep.subr.bf16.mxu0 0
    %3904 = vmatpush1.bf16.xpose.msra.mxu0 0
    %3905 = vmatprep.subr.bf16.mxu0 0
    %3906 = vmatpush1.bf16.xpose.msra.mxu0 0
    %3907 = vmatprep.subr.bf16.mxu0 0
    %3908 = vmatpush1.bf16.xpose.msra.mxu0 0
    %3909 = vmatprep.mubr.bf16.mxu0 0
    %3910 = vmatmul.mubr.bf16.gmra.mrb[0].mxu0 %v3872
    %v3911 = vpop.f32.mrb[0].mxu0
    %v3912 = vadd.f32 0.0, %v3911
    %v3913 = vpop.f32.mrb[0].mxu0
    %v3914 = vpop.f32.mrb[0].mxu0
    %v3915 = vpop.f32.mrb[0].mxu0
    %3916 = vdwg.mxu0
    %v3917 = vmul.f32 %v3912, 0.17677669
    %v3918 = vsel %vm551, %v3917, -inf
    %3919 = vmax.xlane.f32.xlu0 %v3918
    %v3920 = vpop.xlane.xlu0 %3919
    %v3921 = vsub.f32 %v3917, %v3920
    %v3922 = vmul.f32 %v3921, 1.442695
    %v3923 = vpow.pop %v3922
    %v3924 = vsel %vm551, %v3923, 0.0
    %3925 = vadd.xlane.f32.xlu0 %v3924
    %v3926 = vpop.xlane.xlu0 %3925
    %v3927 = vrcp.pop %v3926
    %v3928 = vmul.f32 %v3923, %v3927
    %v3929 = vpack.c.bf16 %v3928, %v3928
    %3930 = vrot.lane.b32.xlu0 %v3559, 64
    %v3931 = vpop.permute.xlu0 %3930
    %v3933 = vsel %vm551, %v3929, 0
    %v3936 = vsel %vm567, %v3931, 0
    %3938 = vmatprep.subr.bf16.mxu0 0
    %3939 = vmatpush1.bf16.msra.mxu0 %v3936
    %3940 = vmatprep.subr.bf16.mxu0 0
    %3941 = vmatpush1.bf16.msra.mxu0 0
    %3942 = vmatprep.subr.bf16.mxu0 0
    %3943 = vmatpush1.bf16.msra.mxu0 0
    %3944 = vmatprep.subr.bf16.mxu0 0
    %3945 = vmatpush1.bf16.msra.mxu0 0
    %3946 = vmatprep.subr.bf16.mxu0 0
    %3947 = vmatpush1.bf16.msra.mxu0 0
    %3948 = vmatprep.subr.bf16.mxu0 0
    %3949 = vmatpush1.bf16.msra.mxu0 0
    %3950 = vmatprep.subr.bf16.mxu0 0
    %3951 = vmatpush1.bf16.msra.mxu0 0
    %3952 = vmatprep.subr.bf16.mxu0 0
    %3953 = vmatpush1.bf16.msra.mxu0 0
    %3954 = vmatprep.subr.bf16.mxu0 0
    %3955 = vmatpush1.bf16.msra.mxu0 0
    %3956 = vmatprep.subr.bf16.mxu0 0
    %3957 = vmatpush1.bf16.msra.mxu0 0
    %3958 = vmatprep.subr.bf16.mxu0 0
    %3959 = vmatpush1.bf16.msra.mxu0 0
    %3960 = vmatprep.subr.bf16.mxu0 0
    %3961 = vmatpush1.bf16.msra.mxu0 0
    %3962 = vmatprep.subr.bf16.mxu0 0
    %3963 = vmatpush1.bf16.msra.mxu0 0
    %3964 = vmatprep.subr.bf16.mxu0 0
    %3965 = vmatpush1.bf16.msra.mxu0 0
    %3966 = vmatprep.subr.bf16.mxu0 0
    %3967 = vmatpush1.bf16.msra.mxu0 0
    %3968 = vmatprep.subr.bf16.mxu0 0
    %3969 = vmatpush1.bf16.msra.mxu0 0
    %3970 = vmatprep.mubr.bf16.mxu0 0
    %3971 = vmatmul.mubr.bf16.gmra.mrb[0].mxu0 %v3933
    %v3972 = vpop.f32.mrb[0].mxu0
    %v3973 = vadd.f32 0.0, %v3972
    %v3974 = vpop.f32.mrb[0].mxu0
    %v3975 = vpop.f32.mrb[0].mxu0
    %v3976 = vpop.f32.mrb[0].mxu0
    %3977 = vdwg.mxu0
    %v3978 = vpack.c.bf16 %v3973, %v3973
    %v3980 = vsel %vm503, %v3978, 0
    %3982 = vmatprep.subr.bf16.mxu0 0
    %3983 = vmatpush1.bf16.msra.mxu0 %v3336
    %3984 = vmatprep.subr.bf16.mxu0 0
    %3985 = vmatpush1.bf16.msra.mxu0 %v3337
    %3986 = vmatprep.subr.bf16.mxu0 0
    %3987 = vmatpush1.bf16.msra.mxu0 0
    %3988 = vmatprep.subr.bf16.mxu0 0
    %3989 = vmatpush1.bf16.msra.mxu0 0
    %3990 = vmatprep.subr.bf16.mxu0 0
    %3991 = vmatpush1.bf16.msra.mxu0 0
    %3992 = vmatprep.subr.bf16.mxu0 0
    %3993 = vmatpush1.bf16.msra.mxu0 0
    %3994 = vmatprep.subr.bf16.mxu0 0
    %3995 = vmatpush1.bf16.msra.mxu0 0
    %3996 = vmatprep.subr.bf16.mxu0 0
    %3997 = vmatpush1.bf16.msra.mxu0 0
    %3998 = vmatprep.subr.bf16.mxu0 0
    %3999 = vmatpush1.bf16.msra.mxu0 0
    %4000 = vmatprep.subr.bf16.mxu0 0
    %4001 = vmatpush1.bf16.msra.mxu0 0
    %4002 = vmatprep.subr.bf16.mxu0 0
    %4003 = vmatpush1.bf16.msra.mxu0 0
    %4004 = vmatprep.subr.bf16.mxu0 0
    %4005 = vmatpush1.bf16.msra.mxu0 0
    %4006 = vmatprep.subr.bf16.mxu0 0
    %4007 = vmatpush1.bf16.msra.mxu0 0
    %4008 = vmatprep.subr.bf16.mxu0 0
    %4009 = vmatpush1.bf16.msra.mxu0 0
    %4010 = vmatprep.subr.bf16.mxu0 0
    %4011 = vmatpush1.bf16.msra.mxu0 0
    %4012 = vmatprep.subr.bf16.mxu0 0
    %4013 = vmatpush1.bf16.msra.mxu0 0
    %4014 = vmatprep.mubr.bf16.mxu0 0
    %4015 = vmatmul.mubr.bf16.gmra.mrb[0].mxu0 %v3980
    %v4016 = vpop.f32.mrb[0].mxu0
    %v4017 = vadd.f32 0.0, %v4016
    %v4018 = vpop.f32.mrb[0].mxu0
    %v4019 = vpop.f32.mrb[0].mxu0
    %v4020 = vpop.f32.mrb[0].mxu0
    %4021 = vdwg.mxu0
    %v4022 = vadd.f32 %v3862, %v4017
    %4023 = vrot.lane.b32.xlu0 %v3557, 32
    %v4024 = vpop.permute.xlu0 %4023
    %4025 = vrot.lane.b32.xlu0 %v3558, 32
    %v4026 = vpop.permute.xlu0 %4025
    %v4028 = vsel %vm503, %v4024, 0
    %v4031 = vsel %vm503, %v4026, 0
    %4033 = vmatprep.subr.bf16.mxu0 0
    %4034 = vmatpush1.bf16.xpose.msra.mxu0 %v4031
    %4035 = vmatprep.subr.bf16.mxu0 0
    %4036 = vmatpush1.bf16.xpose.msra.mxu0 0
    %4037 = vmatprep.subr.bf16.mxu0 0
    %4038 = vmatpush1.bf16.xpose.msra.mxu0 0
    %4039 = vmatprep.subr.bf16.mxu0 0
    %4040 = vmatpush1.bf16.xpose.msra.mxu0 0
    %4041 = vmatprep.subr.bf16.mxu0 0
    %4042 = vmatpush1.bf16.xpose.msra.mxu0 0
    %4043 = vmatprep.subr.bf16.mxu0 0
    %4044 = vmatpush1.bf16.xpose.msra.mxu0 0
    %4045 = vmatprep.subr.bf16.mxu0 0
    %4046 = vmatpush1.bf16.xpose.msra.mxu0 0
    %4047 = vmatprep.subr.bf16.mxu0 0
    %4048 = vmatpush1.bf16.xpose.msra.mxu0 0
    %4049 = vmatprep.subr.bf16.mxu0 0
    %4050 = vmatpush1.bf16.xpose.msra.mxu0 0
    %4051 = vmatprep.subr.bf16.mxu0 0
    %4052 = vmatpush1.bf16.xpose.msra.mxu0 0
    %4053 = vmatprep.subr.bf16.mxu0 0
    %4054 = vmatpush1.bf16.xpose.msra.mxu0 0
    %4055 = vmatprep.subr.bf16.mxu0 0
    %4056 = vmatpush1.bf16.xpose.msra.mxu0 0
    %4057 = vmatprep.subr.bf16.mxu0 0
    %4058 = vmatpush1.bf16.xpose.msra.mxu0 0
    %4059 = vmatprep.subr.bf16.mxu0 0
    %4060 = vmatpush1.bf16.xpose.msra.mxu0 0
    %4061 = vmatprep.subr.bf16.mxu0 0
    %4062 = vmatpush1.bf16.xpose.msra.mxu0 0
    %4063 = vmatprep.subr.bf16.mxu0 0
    %4064 = vmatpush1.bf16.xpose.msra.mxu0 0
    %4065 = vmatprep.mubr.bf16.mxu0 0
    %4066 = vmatmul.mubr.bf16.gmra.mrb[0].mxu0 %v4028
    %v4067 = vpop.f32.mrb[0].mxu0
    %v4068 = vadd.f32 0.0, %v4067
    %v4069 = vpop.f32.mrb[0].mxu0
    %v4070 = vpop.f32.mrb[0].mxu0
    %v4071 = vpop.f32.mrb[0].mxu0
    %4072 = vdwg.mxu0
    %v4073 = vmul.f32 %v4068, 0.17677669
    %v4074 = vsel %vm551, %v4073, -inf
    %4075 = vmax.xlane.f32.xlu0 %v4074
    %v4076 = vpop.xlane.xlu0 %4075
    %v4077 = vsub.f32 %v4073, %v4076
    %v4078 = vmul.f32 %v4077, 1.442695
    %v4079 = vpow.pop %v4078
    %v4080 = vsel %vm551, %v4079, 0.0
    %4081 = vadd.xlane.f32.xlu0 %v4080
    %v4082 = vpop.xlane.xlu0 %4081
    %v4083 = vrcp.pop %v4082
    %v4084 = vmul.f32 %v4079, %v4083
    %v4085 = vpack.c.bf16 %v4084, %v4084
    %4086 = vrot.lane.b32.xlu0 %v3559, 32
    %v4087 = vpop.permute.xlu0 %4086
    %v4089 = vsel %vm551, %v4085, 0
    %v4092 = vsel %vm567, %v4087, 0
    %4094 = vmatprep.subr.bf16.mxu0 0
    %4095 = vmatpush1.bf16.msra.mxu0 %v4092
    %4096 = vmatprep.subr.bf16.mxu0 0
    %4097 = vmatpush1.bf16.msra.mxu0 0
    %4098 = vmatprep.subr.bf16.mxu0 0
    %4099 = vmatpush1.bf16.msra.mxu0 0
    %4100 = vmatprep.subr.bf16.mxu0 0
    %4101 = vmatpush1.bf16.msra.mxu0 0
    %4102 = vmatprep.subr.bf16.mxu0 0
    %4103 = vmatpush1.bf16.msra.mxu0 0
    %4104 = vmatprep.subr.bf16.mxu0 0
    %4105 = vmatpush1.bf16.msra.mxu0 0
    %4106 = vmatprep.subr.bf16.mxu0 0
    %4107 = vmatpush1.bf16.msra.mxu0 0
    %4108 = vmatprep.subr.bf16.mxu0 0
    %4109 = vmatpush1.bf16.msra.mxu0 0
    %4110 = vmatprep.subr.bf16.mxu0 0
    %4111 = vmatpush1.bf16.msra.mxu0 0
    %4112 = vmatprep.subr.bf16.mxu0 0
    %4113 = vmatpush1.bf16.msra.mxu0 0
    %4114 = vmatprep.subr.bf16.mxu0 0
    %4115 = vmatpush1.bf16.msra.mxu0 0
    %4116 = vmatprep.subr.bf16.mxu0 0
    %4117 = vmatpush1.bf16.msra.mxu0 0
    %4118 = vmatprep.subr.bf16.mxu0 0
    %4119 = vmatpush1.bf16.msra.mxu0 0
    %4120 = vmatprep.subr.bf16.mxu0 0
    %4121 = vmatpush1.bf16.msra.mxu0 0
    %4122 = vmatprep.subr.bf16.mxu0 0
    %4123 = vmatpush1.bf16.msra.mxu0 0
    %4124 = vmatprep.subr.bf16.mxu0 0
    %4125 = vmatpush1.bf16.msra.mxu0 0
    %4126 = vmatprep.mubr.bf16.mxu0 0
    %4127 = vmatmul.mubr.bf16.gmra.mrb[0].mxu0 %v4089
    %v4128 = vpop.f32.mrb[0].mxu0
    %v4129 = vadd.f32 0.0, %v4128
    %v4130 = vpop.f32.mrb[0].mxu0
    %v4131 = vpop.f32.mrb[0].mxu0
    %v4132 = vpop.f32.mrb[0].mxu0
    %4133 = vdwg.mxu0
    %v4134 = vpack.c.bf16 %v4129, %v4129
    %v4136 = vsel %vm503, %v4134, 0
    %4138 = vmatprep.subr.bf16.mxu0 0
    %4139 = vmatpush1.bf16.msra.mxu0 %v3509
    %4140 = vmatprep.subr.bf16.mxu0 0
    %4141 = vmatpush1.bf16.msra.mxu0 %v3510
    %4142 = vmatprep.subr.bf16.mxu0 0
    %4143 = vmatpush1.bf16.msra.mxu0 0
    %4144 = vmatprep.subr.bf16.mxu0 0
    %4145 = vmatpush1.bf16.msra.mxu0 0
    %4146 = vmatprep.subr.bf16.mxu0 0
    %4147 = vmatpush1.bf16.msra.mxu0 0
    %4148 = vmatprep.subr.bf16.mxu0 0
    %4149 = vmatpush1.bf16.msra.mxu0 0
    %4150 = vmatprep.subr.bf16.mxu0 0
    %4151 = vmatpush1.bf16.msra.mxu0 0
    %4152 = vmatprep.subr.bf16.mxu0 0
    %4153 = vmatpush1.bf16.msra.mxu0 0
    %4154 = vmatprep.subr.bf16.mxu0 0
    %4155 = vmatpush1.bf16.msra.mxu0 0
    %4156 = vmatprep.subr.bf16.mxu0 0
    %4157 = vmatpush1.bf16.msra.mxu0 0
    %4158 = vmatprep.subr.bf16.mxu0 0
    %4159 = vmatpush1.bf16.msra.mxu0 0
    %4160 = vmatprep.subr.bf16.mxu0 0
    %4161 = vmatpush1.bf16.msra.mxu0 0
    %4162 = vmatprep.subr.bf16.mxu0 0
    %4163 = vmatpush1.bf16.msra.mxu0 0
    %4164 = vmatprep.subr.bf16.mxu0 0
    %4165 = vmatpush1.bf16.msra.mxu0 0
    %4166 = vmatprep.subr.bf16.mxu0 0
    %4167 = vmatpush1.bf16.msra.mxu0 0
    %4168 = vmatprep.subr.bf16.mxu0 0
    %4169 = vmatpush1.bf16.msra.mxu0 0
    %4170 = vmatprep.mubr.bf16.mxu0 0
    %4171 = vmatmul.mubr.bf16.gmra.mrb[0].mxu0 %v4136
    %v4172 = vpop.f32.mrb[0].mxu0
    %v4173 = vadd.f32 0.0, %v4172
    %v4174 = vpop.f32.mrb[0].mxu0
    %v4175 = vpop.f32.mrb[0].mxu0
    %v4176 = vpop.f32.mrb[0].mxu0
    %4177 = vdwg.mxu0
    %v4178 = vadd.f32 %v4022, %v4173
    %v4179 = vld [vmem:[%s16] sm:$0x1]
    %v4181 = vlaneseq
    %v4182 = vshrl.u32 %v4181, 7
    %v4183 = vsub.s32 0, %v4182
    %v4184 = vrot.slane %v4179, %v4183
    %v4186 = vadd.f32 %v3556, %v4184
    %v4187 = vadd.f32 %v4178, %v4184
    %4189 = vrot.lane.b32.xlu0 %v3044, 8
    %v4190 = vpop.permute.xlu0 %4189
    %4193 = vrot.lane.b32.xlu0 %v3272, 16
    %v4194 = vpop.permute.xlu0 %4193
    %4197 = vrot.lane.b32.xlu0 %v3445, 24
    %v4198 = vpop.permute.xlu0 %4197
    %4201 = vrot.lane.b32.xlu0 %v3617, 32
    %v4202 = vpop.permute.xlu0 %4201
    %4205 = vrot.lane.b32.xlu0 %v3729, 40
    %v4206 = vpop.permute.xlu0 %4205
    %4209 = vrot.lane.b32.xlu0 %v3928, 48
    %v4210 = vpop.permute.xlu0 %4209
    %4213 = vrot.lane.b32.xlu0 %v4084, 56
    %v4214 = vpop.permute.xlu0 %4213
    %v4216 = vsel %vm551, %v2928, %v4190
    %v4217 = vsel %vm1852, %v4216, %v4194
    %v4218 = vsel %vm1854, %v4217, %v4198
    %v4219 = vsel %vm503, %v4218, %v4202
    %v4220 = vsel %vm1857, %v4219, %v4206
    %v4221 = vsel %vm1859, %v4220, %v4210
    %v4222 = vsel %vm1861, %v4221, %v4214
    %v4223 = vadd.f32 %v2604, %v4186
    %v4224 = vadd.f32 %v2605, %v4187
    %v4225 = vld [vmem:[%s17] sm:$0x1]
    %v4226 = vld [vmem:[%s18] sm:$0x1]
    %4227 = vadd.xlane.f32.xlu0 %v4223
    %v4228 = vpop.xlane.xlu0 %4227
    %4229 = vadd.xlane.f32.xlu0 %v4224
    %v4230 = vpop.xlane.xlu0 %4229
    %v4231 = vmul.f32 %v4228, %v1871
    %v4232 = vmul.f32 %v4230, %v1871
    %v4233 = vsub.f32 %v4223, %v4231
    %v4234 = vsub.f32 %v4224, %v4232
    %v4235 = vmul.f32 %v4233, %v4233
    %v4236 = vmul.f32 %v4234, %v4234
    %4237 = vadd.xlane.f32.xlu0 %v4235
    %v4238 = vpop.xlane.xlu0 %4237
    %4239 = vadd.xlane.f32.xlu0 %v4236
    %v4240 = vpop.xlane.xlu0 %4239
    %v4241 = vmul.f32 %v4238, %v1871
    %v4242 = vmul.f32 %v4240, %v1871
    %v4243 = vadd.f32 %v4241, 1e-05
    %v4244 = vadd.f32 %v4242, 1e-05
    %v4245 = vrsqrt.pop %v4243
    %v4246 = vrsqrt.pop %v4244
    %v4247 = vmul.f32 %v4233, %v4245
    %v4248 = vmul.f32 %v4234, %v4246
    %v4250 = vlaneseq
    %v4251 = vshrl.u32 %v4250, 7
    %v4252 = vsub.s32 0, %v4251
    %v4253 = vrot.slane %v4225, %v4252
    %v4255 = vmul.f32 %v4247, %v4253
    %v4256 = vmul.f32 %v4248, %v4253
    %v4258 = vlaneseq
    %v4259 = vshrl.u32 %v4258, 7
    %v4260 = vsub.s32 0, %v4259
    %v4261 = vrot.slane %v4226, %v4260
    %v4263 = vadd.f32 %v4255, %v4261
    %v4264 = vadd.f32 %v4256, %v4261
    %v4265 = vpack.c.bf16 %v4264, %v4263
    %v4266 = vld [vmem:[#allocation17] sm:$0xff]
    %v4267 = vld [vmem:[#allocation17 + $0x8] sm:$0xff]
    %v4268 = vld [vmem:[#allocation17 + $0x10] sm:$0xff]
    %v4269 = vld [vmem:[#allocation17 + $0x18] sm:$0xff]
    %v4270 = vld [vmem:[#allocation17 + $0x20] sm:$0xff]
    %v4271 = vld [vmem:[#allocation17 + $0x28] sm:$0xff]
    %v4272 = vld [vmem:[#allocation17 + $0x30] sm:$0xff]
    %v4273 = vld [vmem:[#allocation17 + $0x38] sm:$0xff]
    %v4274 = vld [vmem:[#allocation17 + $0x40] sm:$0xff]
    %v4275 = vld [vmem:[#allocation17 + $0x48] sm:$0xff]
    %v4276 = vld [vmem:[#allocation17 + $0x50] sm:$0xff]
    %v4277 = vld [vmem:[#allocation17 + $0x58] sm:$0xff]
    %v4278 = vld [vmem:[#allocation17 + $0x60] sm:$0xff]
    %v4279 = vld [vmem:[#allocation17 + $0x68] sm:$0xff]
    %v4280 = vld [vmem:[#allocation17 + $0x70] sm:$0xff]
    %v4281 = vld [vmem:[#allocation17 + $0x78] sm:$0xff]
    %v4282 = vld [vmem:[#allocation17 + $0x80] sm:$0xff]
    %v4283 = vld [vmem:[#allocation17 + $0x88] sm:$0xff]
    %v4284 = vld [vmem:[#allocation17 + $0x90] sm:$0xff]
    %v4285 = vld [vmem:[#allocation17 + $0x98] sm:$0xff]
    %v4286 = vld [vmem:[#allocation17 + $0xa0] sm:$0xff]
    %v4287 = vld [vmem:[#allocation17 + $0xa8] sm:$0xff]
    %v4288 = vld [vmem:[#allocation17 + $0xb0] sm:$0xff]
    %v4289 = vld [vmem:[#allocation17 + $0xb8] sm:$0xff]
    %v4290 = vld [vmem:[#allocation17 + $0xc0] sm:$0xff]
    %v4291 = vld [vmem:[#allocation17 + $0xc8] sm:$0xff]
    %v4292 = vld [vmem:[#allocation17 + $0xd0] sm:$0xff]
    %v4293 = vld [vmem:[#allocation17 + $0xd8] sm:$0xff]
    %v4294 = vld [vmem:[#allocation17 + $0xe0] sm:$0xff]
    %v4295 = vld [vmem:[#allocation17 + $0xe8] sm:$0xff]
    %v4296 = vld [vmem:[#allocation17 + $0xf0] sm:$0xff]
    %v4297 = vld [vmem:[#allocation17 + $0xf8] sm:$0xff]
    %v4298 = vld [vmem:[%s20] sm:$0xf]
    %v4300 = vlaneseq
    %v4301 = vshrl.u32 %v4300, 7
    %v4302 = vsub.s32 0, %v4301
    %v4303 = vrot.slane %v4298, %v4302
    %v4304 = vlaneseq
    %v4305 = vshrl.u32 %v4304, 7
    %v4306 = vsub.s32 1, %v4305
    %v4307 = vrot.slane %v4298, %v4306
    %v4308 = vlaneseq
    %v4309 = vshrl.u32 %v4308, 7
    %v4310 = vsub.s32 2, %v4309
    %v4311 = vrot.slane %v4298, %v4310
    %v4312 = vlaneseq
    %v4313 = vshrl.u32 %v4312, 7
    %v4314 = vsub.s32 3, %v4313
    %v4315 = vrot.slane %v4298, %v4314
    %v4352 = vunpack.c.l.b16 %v4266
    %v4353 = vunpack.c.h.b16 %v4266
    %v4354 = vunpack.c.l.b16 %v4267
    %v4355 = vunpack.c.h.b16 %v4267
    %v4356 = vunpack.c.l.b16 %v4268
    %v4357 = vunpack.c.h.b16 %v4268
    %v4358 = vunpack.c.l.b16 %v4269
    %v4359 = vunpack.c.h.b16 %v4269
    %v4360 = vunpack.c.l.b16 %v4270
    %v4361 = vunpack.c.h.b16 %v4270
    %v4362 = vunpack.c.l.b16 %v4271
    %v4363 = vunpack.c.h.b16 %v4271
    %v4364 = vunpack.c.l.b16 %v4272
    %v4365 = vunpack.c.h.b16 %v4272
    %v4366 = vunpack.c.l.b16 %v4273
    %v4367 = vunpack.c.h.b16 %v4273
    %v4368 = vunpack.c.l.b16 %v4274
    %v4369 = vunpack.c.h.b16 %v4274
    %v4370 = vunpack.c.l.b16 %v4275
    %v4371 = vunpack.c.h.b16 %v4275
    %v4372 = vunpack.c.l.b16 %v4276
    %v4373 = vunpack.c.h.b16 %v4276
    %v4374 = vunpack.c.l.b16 %v4277
    %v4375 = vunpack.c.h.b16 %v4277
    %v4376 = vunpack.c.l.b16 %v4278
    %v4377 = vunpack.c.h.b16 %v4278
    %v4378 = vunpack.c.l.b16 %v4279
    %v4379 = vunpack.c.h.b16 %v4279
    %v4380 = vunpack.c.l.b16 %v4280
    %v4381 = vunpack.c.h.b16 %v4280
    %v4382 = vunpack.c.l.b16 %v4281
    %v4383 = vunpack.c.h.b16 %v4281
    %v4384 = vunpack.c.l.b16 %v4282
    %v4385 = vunpack.c.h.b16 %v4282
    %v4386 = vunpack.c.l.b16 %v4283
    %v4387 = vunpack.c.h.b16 %v4283
    %v4388 = vunpack.c.l.b16 %v4284
    %v4389 = vunpack.c.h.b16 %v4284
    %v4390 = vunpack.c.l.b16 %v4285
    %v4391 = vunpack.c.h.b16 %v4285
    %v4392 = vunpack.c.l.b16 %v4286
    %v4393 = vunpack.c.h.b16 %v4286
    %v4394 = vunpack.c.l.b16 %v4287
    %v4395 = vunpack.c.h.b16 %v4287
    %v4396 = vunpack.c.l.b16 %v4288
    %v4397 = vunpack.c.h.b16 %v4288
    %v4398 = vunpack.c.l.b16 %v4289
    %v4399 = vunpack.c.h.b16 %v4289
    %v4400 = vunpack.c.l.b16 %v4290
    %v4401 = vunpack.c.h.b16 %v4290
    %v4402 = vunpack.c.l.b16 %v4291
    %v4403 = vunpack.c.h.b16 %v4291
    %v4404 = vunpack.c.l.b16 %v4292
    %v4405 = vunpack.c.h.b16 %v4292
    %v4406 = vunpack.c.l.b16 %v4293
    %v4407 = vunpack.c.h.b16 %v4293
    %v4408 = vunpack.c.l.b16 %v4294
    %v4409 = vunpack.c.h.b16 %v4294
    %v4410 = vunpack.c.l.b16 %v4295
    %v4411 = vunpack.c.h.b16 %v4295
    %v4412 = vunpack.c.l.b16 %v4296
    %v4413 = vunpack.c.h.b16 %v4296
    %v4414 = vunpack.c.l.b16 %v4297
    %v4415 = vunpack.c.h.b16 %v4297
    %v4416 = vpack.c.b16 %v4356, %v4352
    %v4417 = vpack.c.b16 %v4357, %v4353
    %v4418 = vpack.c.b16 %v4358, %v4354
    %v4419 = vpack.c.b16 %v4359, %v4355
    %v4420 = vpack.c.b16 %v4364, %v4360
    %v4421 = vpack.c.b16 %v4365, %v4361
    %v4422 = vpack.c.b16 %v4366, %v4362
    %v4423 = vpack.c.b16 %v4367, %v4363
    %v4424 = vpack.c.b16 %v4372, %v4368
    %v4425 = vpack.c.b16 %v4373, %v4369
    %v4426 = vpack.c.b16 %v4374, %v4370
    %v4427 = vpack.c.b16 %v4375, %v4371
    %v4428 = vpack.c.b16 %v4380, %v4376
    %v4429 = vpack.c.b16 %v4381, %v4377
    %v4430 = vpack.c.b16 %v4382, %v4378
    %v4431 = vpack.c.b16 %v4383, %v4379
    %v4432 = vpack.c.b16 %v4388, %v4384
    %v4433 = vpack.c.b16 %v4389, %v4385
    %v4434 = vpack.c.b16 %v4390, %v4386
    %v4435 = vpack.c.b16 %v4391, %v4387
    %v4436 = vpack.c.b16 %v4396, %v4392
    %v4437 = vpack.c.b16 %v4397, %v4393
    %v4438 = vpack.c.b16 %v4398, %v4394
    %v4439 = vpack.c.b16 %v4399, %v4395
    %v4440 = vpack.c.b16 %v4404, %v4400
    %v4441 = vpack.c.b16 %v4405, %v4401
    %v4442 = vpack.c.b16 %v4406, %v4402
    %v4443 = vpack.c.b16 %v4407, %v4403
    %v4444 = vpack.c.b16 %v4412, %v4408
    %v4445 = vpack.c.b16 %v4413, %v4409
    %v4446 = vpack.c.b16 %v4414, %v4410
    %v4447 = vpack.c.b16 %v4415, %v4411
    %4480 = vmatprep.subr.bf16.mxu0 %v4417
    %4481 = vmatpush1.bf16.msra.mxu0 %v4416
    %4482 = vmatprep.subr.bf16.mxu0 %v4421
    %4483 = vmatpush1.bf16.msra.mxu0 %v4420
    %4484 = vmatprep.subr.bf16.mxu0 %v4425
    %4485 = vmatpush1.bf16.msra.mxu0 %v4424
    %4486 = vmatprep.subr.bf16.mxu0 %v4429
    %4487 = vmatpush1.bf16.msra.mxu0 %v4428
    %4488 = vmatprep.subr.bf16.mxu0 %v4433
    %4489 = vmatpush1.bf16.msra.mxu0 %v4432
    %4490 = vmatprep.subr.bf16.mxu0 %v4437
    %4491 = vmatpush1.bf16.msra.mxu0 %v4436
    %4492 = vmatprep.subr.bf16.mxu0 %v4441
    %4493 = vmatpush1.bf16.msra.mxu0 %v4440
    %4494 = vmatprep.subr.bf16.mxu0 %v4445
    %4495 = vmatpush1.bf16.msra.mxu0 %v4444
    %4496 = vmatprep.subr.bf16.mxu0 0
    %4497 = vmatpush1.bf16.msra.mxu0 0
    %4498 = vmatprep.subr.bf16.mxu0 0
    %4499 = vmatpush1.bf16.msra.mxu0 0
    %4500 = vmatprep.subr.bf16.mxu0 0
    %4501 = vmatpush1.bf16.msra.mxu0 0
    %4502 = vmatprep.subr.bf16.mxu0 0
    %4503 = vmatpush1.bf16.msra.mxu0 0
    %4504 = vmatprep.subr.bf16.mxu0 0
    %4505 = vmatpush1.bf16.msra.mxu0 0
    %4506 = vmatprep.subr.bf16.mxu0 0
    %4507 = vmatpush1.bf16.msra.mxu0 0
    %4508 = vmatprep.subr.bf16.mxu0 0
    %4509 = vmatpush1.bf16.msra.mxu0 0
    %4510 = vmatprep.subr.bf16.mxu0 0
    %4511 = vmatpush1.bf16.msra.mxu0 0
    %4512 = vmatprep.mubr.bf16.mxu0 0
    %4513 = vmatmul.mubr.bf16.gmra.mrb[0].mxu0 %v4265
    %v4514 = vpop.f32.mrb[0].mxu0
    %v4515 = vadd.f32 %v4303, %v4514
    %v4516 = vpop.f32.mrb[0].mxu0
    %v4517 = vadd.f32 %v4307, %v4516
    %v4518 = vpop.f32.mrb[0].mxu0
    %v4519 = vadd.f32 %v4303, %v4518
    %v4520 = vpop.f32.mrb[0].mxu0
    %v4521 = vadd.f32 %v4307, %v4520
    %4522 = vdwg.mxu0
    %4523 = vmatprep.subr.bf16.mxu0 %v4419
    %4524 = vmatpush1.bf16.msra.mxu0 %v4418
    %4525 = vmatprep.subr.bf16.mxu0 %v4423
    %4526 = vmatpush1.bf16.msra.mxu0 %v4422
    %4527 = vmatprep.subr.bf16.mxu0 %v4427
    %4528 = vmatpush1.bf16.msra.mxu0 %v4426
    %4529 = vmatprep.subr.bf16.mxu0 %v4431
    %4530 = vmatpush1.bf16.msra.mxu0 %v4430
    %4531 = vmatprep.subr.bf16.mxu0 %v4435
    %4532 = vmatpush1.bf16.msra.mxu0 %v4434
    %4533 = vmatprep.subr.bf16.mxu0 %v4439
    %4534 = vmatpush1.bf16.msra.mxu0 %v4438
    %4535 = vmatprep.subr.bf16.mxu0 %v4443
    %4536 = vmatpush1.bf16.msra.mxu0 %v4442
    %4537 = vmatprep.subr.bf16.mxu0 %v4447
    %4538 = vmatpush1.bf16.msra.mxu0 %v4446
    %4539 = vmatprep.subr.bf16.mxu0 0
    %4540 = vmatpush1.bf16.msra.mxu0 0
    %4541 = vmatprep.subr.bf16.mxu0 0
    %4542 = vmatpush1.bf16.msra.mxu0 0
    %4543 = vmatprep.subr.bf16.mxu0 0
    %4544 = vmatpush1.bf16.msra.mxu0 0
    %4545 = vmatprep.subr.bf16.mxu0 0
    %4546 = vmatpush1.bf16.msra.mxu0 0
    %4547 = vmatprep.subr.bf16.mxu0 0
    %4548 = vmatpush1.bf16.msra.mxu0 0
    %4549 = vmatprep.subr.bf16.mxu0 0
    %4550 = vmatpush1.bf16.msra.mxu0 0
    %4551 = vmatprep.subr.bf16.mxu0 0
    %4552 = vmatpush1.bf16.msra.mxu0 0
    %4553 = vmatprep.subr.bf16.mxu0 0
    %4554 = vmatpush1.bf16.msra.mxu0 0
    %4555 = vmatprep.mubr.bf16.mxu0 0
    %4556 = vmatmul.mubr.bf16.gmra.mrb[0].mxu0 %v4265
    %v4557 = vpop.f32.mrb[0].mxu0
    %v4558 = vadd.f32 %v4311, %v4557
    %v4559 = vpop.f32.mrb[0].mxu0
    %v4560 = vadd.f32 %v4315, %v4559
    %v4561 = vpop.f32.mrb[0].mxu0
    %v4562 = vadd.f32 %v4311, %v4561
    %v4563 = vpop.f32.mrb[0].mxu0
    %v4564 = vadd.f32 %v4315, %v4563
    %4565 = vdwg.mxu0
    %v4566 = vmax.f32 %v4515, 0.0
    %v4567 = vmax.f32 %v4517, 0.0
    %v4568 = vmax.f32 %v4558, 0.0
    %v4569 = vmax.f32 %v4560, 0.0
    %v4570 = vmax.f32 %v4519, 0.0
    %v4571 = vmax.f32 %v4521, 0.0
    %v4572 = vmax.f32 %v4562, 0.0
    %v4573 = vmax.f32 %v4564, 0.0
    %v4574 = vpack.c.bf16 %v4570, %v4566
    %v4575 = vpack.c.bf16 %v4571, %v4567
    %v4576 = vpack.c.bf16 %v4572, %v4568
    %v4577 = vpack.c.bf16 %v4573, %v4569
    %v4578 = vld [vmem:[#allocation19] sm:$0xf]
    %v4579 = vld [vmem:[#allocation19 + $0x4] sm:$0xf]
    %v4580 = vld [vmem:[#allocation19 + $0x8] sm:$0xf]
    %v4581 = vld [vmem:[#allocation19 + $0xc] sm:$0xf]
    %v4582 = vld [vmem:[#allocation19 + $0x10] sm:$0xf]
    %v4583 = vld [vmem:[#allocation19 + $0x14] sm:$0xf]
    %v4584 = vld [vmem:[#allocation19 + $0x18] sm:$0xf]
    %v4585 = vld [vmem:[#allocation19 + $0x1c] sm:$0xf]
    %v4586 = vld [vmem:[#allocation19 + $0x20] sm:$0xf]
    %v4587 = vld [vmem:[#allocation19 + $0x24] sm:$0xf]
    %v4588 = vld [vmem:[#allocation19 + $0x28] sm:$0xf]
    %v4589 = vld [vmem:[#allocation19 + $0x2c] sm:$0xf]
    %v4590 = vld [vmem:[#allocation19 + $0x30] sm:$0xf]
    %v4591 = vld [vmem:[#allocation19 + $0x34] sm:$0xf]
    %v4592 = vld [vmem:[#allocation19 + $0x38] sm:$0xf]
    %v4593 = vld [vmem:[#allocation19 + $0x3c] sm:$0xf]
    %v4594 = vld [vmem:[#allocation19 + $0x40] sm:$0xf]
    %v4595 = vld [vmem:[#allocation19 + $0x44] sm:$0xf]
    %v4596 = vld [vmem:[#allocation19 + $0x48] sm:$0xf]
    %v4597 = vld [vmem:[#allocation19 + $0x4c] sm:$0xf]
    %v4598 = vld [vmem:[#allocation19 + $0x50] sm:$0xf]
    %v4599 = vld [vmem:[#allocation19 + $0x54] sm:$0xf]
    %v4600 = vld [vmem:[#allocation19 + $0x58] sm:$0xf]
    %v4601 = vld [vmem:[#allocation19 + $0x5c] sm:$0xf]
    %v4602 = vld [vmem:[#allocation19 + $0x60] sm:$0xf]
    %v4603 = vld [vmem:[#allocation19 + $0x64] sm:$0xf]
    %v4604 = vld [vmem:[#allocation19 + $0x68] sm:$0xf]
    %v4605 = vld [vmem:[#allocation19 + $0x6c] sm:$0xf]
    %v4606 = vld [vmem:[#allocation19 + $0x70] sm:$0xf]
    %v4607 = vld [vmem:[#allocation19 + $0x74] sm:$0xf]
    %v4608 = vld [vmem:[#allocation19 + $0x78] sm:$0xf]
    %v4609 = vld [vmem:[#allocation19 + $0x7c] sm:$0xf]
    %v4610 = vld [vmem:[#allocation19 + $0x80] sm:$0xf]
    %v4611 = vld [vmem:[#allocation19 + $0x84] sm:$0xf]
    %v4612 = vld [vmem:[#allocation19 + $0x88] sm:$0xf]
    %v4613 = vld [vmem:[#allocation19 + $0x8c] sm:$0xf]
    %v4614 = vld [vmem:[#allocation19 + $0x90] sm:$0xf]
    %v4615 = vld [vmem:[#allocation19 + $0x94] sm:$0xf]
    %v4616 = vld [vmem:[#allocation19 + $0x98] sm:$0xf]
    %v4617 = vld [vmem:[#allocation19 + $0x9c] sm:$0xf]
    %v4618 = vld [vmem:[#allocation19 + $0xa0] sm:$0xf]
    %v4619 = vld [vmem:[#allocation19 + $0xa4] sm:$0xf]
    %v4620 = vld [vmem:[#allocation19 + $0xa8] sm:$0xf]
    %v4621 = vld [vmem:[#allocation19 + $0xac] sm:$0xf]
    %v4622 = vld [vmem:[#allocation19 + $0xb0] sm:$0xf]
    %v4623 = vld [vmem:[#allocation19 + $0xb4] sm:$0xf]
    %v4624 = vld [vmem:[#allocation19 + $0xb8] sm:$0xf]
    %v4625 = vld [vmem:[#allocation19 + $0xbc] sm:$0xf]
    %v4626 = vld [vmem:[#allocation19 + $0xc0] sm:$0xf]
    %v4627 = vld [vmem:[#allocation19 + $0xc4] sm:$0xf]
    %v4628 = vld [vmem:[#allocation19 + $0xc8] sm:$0xf]
    %v4629 = vld [vmem:[#allocation19 + $0xcc] sm:$0xf]
    %v4630 = vld [vmem:[#allocation19 + $0xd0] sm:$0xf]
    %v4631 = vld [vmem:[#allocation19 + $0xd4] sm:$0xf]
    %v4632 = vld [vmem:[#allocation19 + $0xd8] sm:$0xf]
    %v4633 = vld [vmem:[#allocation19 + $0xdc] sm:$0xf]
    %v4634 = vld [vmem:[#allocation19 + $0xe0] sm:$0xf]
    %v4635 = vld [vmem:[#allocation19 + $0xe4] sm:$0xf]
    %v4636 = vld [vmem:[#allocation19 + $0xe8] sm:$0xf]
    %v4637 = vld [vmem:[#allocation19 + $0xec] sm:$0xf]
    %v4638 = vld [vmem:[#allocation19 + $0xf0] sm:$0xf]
    %v4639 = vld [vmem:[#allocation19 + $0xf4] sm:$0xf]
    %v4640 = vld [vmem:[#allocation19 + $0xf8] sm:$0xf]
    %v4641 = vld [vmem:[#allocation19 + $0xfc] sm:$0xf]
    %v4642 = vld [vmem:[%s22] sm:$0x1]
    %v4644 = vlaneseq
    %v4645 = vshrl.u32 %v4644, 7
    %v4646 = vsub.s32 0, %v4645
    %v4647 = vrot.slane %v4642, %v4646
    %v4713 = vunpack.c.l.b16 %v4578
    %v4714 = vunpack.c.l.b16 %v4579
    %v4715 = vunpack.c.l.b16 %v4580
    %v4716 = vunpack.c.l.b16 %v4581
    %v4717 = vunpack.c.l.b16 %v4582
    %v4718 = vunpack.c.l.b16 %v4583
    %v4719 = vunpack.c.l.b16 %v4584
    %v4720 = vunpack.c.l.b16 %v4585
    %v4721 = vunpack.c.l.b16 %v4586
    %v4722 = vunpack.c.l.b16 %v4587
    %v4723 = vunpack.c.l.b16 %v4588
    %v4724 = vunpack.c.l.b16 %v4589
    %v4725 = vunpack.c.l.b16 %v4590
    %v4726 = vunpack.c.l.b16 %v4591
    %v4727 = vunpack.c.l.b16 %v4592
    %v4728 = vunpack.c.l.b16 %v4593
    %v4729 = vunpack.c.l.b16 %v4594
    %v4730 = vunpack.c.l.b16 %v4595
    %v4731 = vunpack.c.l.b16 %v4596
    %v4732 = vunpack.c.l.b16 %v4597
    %v4733 = vunpack.c.l.b16 %v4598
    %v4734 = vunpack.c.l.b16 %v4599
    %v4735 = vunpack.c.l.b16 %v4600
    %v4736 = vunpack.c.l.b16 %v4601
    %v4737 = vunpack.c.l.b16 %v4602
    %v4738 = vunpack.c.l.b16 %v4603
    %v4739 = vunpack.c.l.b16 %v4604
    %v4740 = vunpack.c.l.b16 %v4605
    %v4741 = vunpack.c.l.b16 %v4606
    %v4742 = vunpack.c.l.b16 %v4607
    %v4743 = vunpack.c.l.b16 %v4608
    %v4744 = vunpack.c.l.b16 %v4609
    %v4745 = vunpack.c.l.b16 %v4610
    %v4746 = vunpack.c.l.b16 %v4611
    %v4747 = vunpack.c.l.b16 %v4612
    %v4748 = vunpack.c.l.b16 %v4613
    %v4749 = vunpack.c.l.b16 %v4614
    %v4750 = vunpack.c.l.b16 %v4615
    %v4751 = vunpack.c.l.b16 %v4616
    %v4752 = vunpack.c.l.b16 %v4617
    %v4753 = vunpack.c.l.b16 %v4618
    %v4754 = vunpack.c.l.b16 %v4619
    %v4755 = vunpack.c.l.b16 %v4620
    %v4756 = vunpack.c.l.b16 %v4621
    %v4757 = vunpack.c.l.b16 %v4622
    %v4758 = vunpack.c.l.b16 %v4623
    %v4759 = vunpack.c.l.b16 %v4624
    %v4760 = vunpack.c.l.b16 %v4625
    %v4761 = vunpack.c.l.b16 %v4626
    %v4762 = vunpack.c.l.b16 %v4627
    %v4763 = vunpack.c.l.b16 %v4628
    %v4764 = vunpack.c.l.b16 %v4629
    %v4765 = vunpack.c.l.b16 %v4630
    %v4766 = vunpack.c.l.b16 %v4631
    %v4767 = vunpack.c.l.b16 %v4632
    %v4768 = vunpack.c.l.b16 %v4633
    %v4769 = vunpack.c.l.b16 %v4634
    %v4770 = vunpack.c.l.b16 %v4635
    %v4771 = vunpack.c.l.b16 %v4636
    %v4772 = vunpack.c.l.b16 %v4637
    %v4773 = vunpack.c.l.b16 %v4638
    %v4774 = vunpack.c.l.b16 %v4639
    %v4775 = vunpack.c.l.b16 %v4640
    %v4776 = vunpack.c.l.b16 %v4641
    %v4777 = vpack.c.b16 %v4714, %v4713
    %v4778 = vpack.c.b16 %v4716, %v4715
    %v4779 = vpack.c.b16 %v4718, %v4717
    %v4780 = vpack.c.b16 %v4720, %v4719
    %v4781 = vpack.c.b16 %v4722, %v4721
    %v4782 = vpack.c.b16 %v4724, %v4723
    %v4783 = vpack.c.b16 %v4726, %v4725
    %v4784 = vpack.c.b16 %v4728, %v4727
    %v4785 = vpack.c.b16 %v4730, %v4729
    %v4786 = vpack.c.b16 %v4732, %v4731
    %v4787 = vpack.c.b16 %v4734, %v4733
    %v4788 = vpack.c.b16 %v4736, %v4735
    %v4789 = vpack.c.b16 %v4738, %v4737
    %v4790 = vpack.c.b16 %v4740, %v4739
    %v4791 = vpack.c.b16 %v4742, %v4741
    %v4792 = vpack.c.b16 %v4744, %v4743
    %v4793 = vpack.c.b16 %v4746, %v4745
    %v4794 = vpack.c.b16 %v4748, %v4747
    %v4795 = vpack.c.b16 %v4750, %v4749
    %v4796 = vpack.c.b16 %v4752, %v4751
    %v4797 = vpack.c.b16 %v4754, %v4753
    %v4798 = vpack.c.b16 %v4756, %v4755
    %v4799 = vpack.c.b16 %v4758, %v4757
    %v4800 = vpack.c.b16 %v4760, %v4759
    %v4801 = vpack.c.b16 %v4762, %v4761
    %v4802 = vpack.c.b16 %v4764, %v4763
    %v4803 = vpack.c.b16 %v4766, %v4765
    %v4804 = vpack.c.b16 %v4768, %v4767
    %v4805 = vpack.c.b16 %v4770, %v4769
    %v4806 = vpack.c.b16 %v4772, %v4771
    %v4807 = vpack.c.b16 %v4774, %v4773
    %v4808 = vpack.c.b16 %v4776, %v4775
    %4841 = vmatprep.subr.bf16.mxu0 0
    %4842 = vmatpush1.bf16.msra.mxu0 %v4777
    %4843 = vmatprep.subr.bf16.mxu0 0
    %4844 = vmatpush1.bf16.msra.mxu0 %v4778
    %4845 = vmatprep.subr.bf16.mxu0 0
    %4846 = vmatpush1.bf16.msra.mxu0 %v4779
    %4847 = vmatprep.subr.bf16.mxu0 0
    %4848 = vmatpush1.bf16.msra.mxu0 %v4780
    %4849 = vmatprep.subr.bf16.mxu0 0
    %4850 = vmatpush1.bf16.msra.mxu0 %v4781
    %4851 = vmatprep.subr.bf16.mxu0 0
    %4852 = vmatpush1.bf16.msra.mxu0 %v4782
    %4853 = vmatprep.subr.bf16.mxu0 0
    %4854 = vmatpush1.bf16.msra.mxu0 %v4783
    %4855 = vmatprep.subr.bf16.mxu0 0
    %4856 = vmatpush1.bf16.msra.mxu0 %v4784
    %4857 = vmatprep.subr.bf16.mxu0 0
    %4858 = vmatpush1.bf16.msra.mxu0 %v4785
    %4859 = vmatprep.subr.bf16.mxu0 0
    %4860 = vmatpush1.bf16.msra.mxu0 %v4786
    %4861 = vmatprep.subr.bf16.mxu0 0
    %4862 = vmatpush1.bf16.msra.mxu0 %v4787
    %4863 = vmatprep.subr.bf16.mxu0 0
    %4864 = vmatpush1.bf16.msra.mxu0 %v4788
    %4865 = vmatprep.subr.bf16.mxu0 0
    %4866 = vmatpush1.bf16.msra.mxu0 %v4789
    %4867 = vmatprep.subr.bf16.mxu0 0
    %4868 = vmatpush1.bf16.msra.mxu0 %v4790
    %4869 = vmatprep.subr.bf16.mxu0 0
    %4870 = vmatpush1.bf16.msra.mxu0 %v4791
    %4871 = vmatprep.subr.bf16.mxu0 0
    %4872 = vmatpush1.bf16.msra.mxu0 %v4792
    %4873 = vmatprep.mubr.bf16.mxu0 %v4575
    %4874 = vmatmul.mubr.bf16.gmra.mrb[0].mxu0 %v4574
    %v4875 = vpop.f32.mrb[0].mxu0
    %v4876 = vadd.f32 %v4647, %v4875
    %v4877 = vpop.f32.mrb[0].mxu0
    %v4878 = vpop.f32.mrb[0].mxu0
    %v4879 = vadd.f32 %v4647, %v4878
    %v4880 = vpop.f32.mrb[0].mxu0
    %4881 = vdwg.mxu0
    %4882 = vmatprep.subr.bf16.mxu0 0
    %4883 = vmatpush1.bf16.msra.mxu0 %v4793
    %4884 = vmatprep.subr.bf16.mxu0 0
    %4885 = vmatpush1.bf16.msra.mxu0 %v4794
    %4886 = vmatprep.subr.bf16.mxu0 0
    %4887 = vmatpush1.bf16.msra.mxu0 %v4795
    %4888 = vmatprep.subr.bf16.mxu0 0
    %4889 = vmatpush1.bf16.msra.mxu0 %v4796
    %4890 = vmatprep.subr.bf16.mxu0 0
    %4891 = vmatpush1.bf16.msra.mxu0 %v4797
    %4892 = vmatprep.subr.bf16.mxu0 0
    %4893 = vmatpush1.bf16.msra.mxu0 %v4798
    %4894 = vmatprep.subr.bf16.mxu0 0
    %4895 = vmatpush1.bf16.msra.mxu0 %v4799
    %4896 = vmatprep.subr.bf16.mxu0 0
    %4897 = vmatpush1.bf16.msra.mxu0 %v4800
    %4898 = vmatprep.subr.bf16.mxu0 0
    %4899 = vmatpush1.bf16.msra.mxu0 %v4801
    %4900 = vmatprep.subr.bf16.mxu0 0
    %4901 = vmatpush1.bf16.msra.mxu0 %v4802
    %4902 = vmatprep.subr.bf16.mxu0 0
    %4903 = vmatpush1.bf16.msra.mxu0 %v4803
    %4904 = vmatprep.subr.bf16.mxu0 0
    %4905 = vmatpush1.bf16.msra.mxu0 %v4804
    %4906 = vmatprep.subr.bf16.mxu0 0
    %4907 = vmatpush1.bf16.msra.mxu0 %v4805
    %4908 = vmatprep.subr.bf16.mxu0 0
    %4909 = vmatpush1.bf16.msra.mxu0 %v4806
    %4910 = vmatprep.subr.bf16.mxu0 0
    %4911 = vmatpush1.bf16.msra.mxu0 %v4807
    %4912 = vmatprep.subr.bf16.mxu0 0
    %4913 = vmatpush1.bf16.msra.mxu0 %v4808
    %4914 = vmatprep.mubr.bf16.mxu0 %v4577
    %4915 = vmatmul.mubr.bf16.gmra.mrb[0].mxu0 %v4576
    %v4916 = vpop.f32.mrb[0].mxu0
    %v4917 = vadd.f32 %v4876, %v4916
    %v4918 = vpop.f32.mrb[0].mxu0
    %v4919 = vpop.f32.mrb[0].mxu0
    %v4920 = vadd.f32 %v4879, %v4919
    %v4921 = vpop.f32.mrb[0].mxu0
    %4922 = vdwg.mxu0
    %v4923 = vadd.f32 %v4263, %v4917
    %v4924 = vadd.f32 %v4264, %v4920
    %v4925 = vld [vmem:[%s23] sm:$0x1]
    %v4926 = vld [vmem:[%s24] sm:$0x1]
    %4927 = vadd.xlane.f32.xlu0 %v4923
    %v4928 = vpop.xlane.xlu0 %4927
    %4929 = vadd.xlane.f32.xlu0 %v4924
    %v4930 = vpop.xlane.xlu0 %4929
    %v4931 = vmul.f32 %v4928, %v1871
    %v4932 = vmul.f32 %v4930, %v1871
    %v4933 = vsub.f32 %v4923, %v4931
    %v4934 = vsub.f32 %v4924, %v4932
    %v4935 = vmul.f32 %v4933, %v4933
    %v4936 = vmul.f32 %v4934, %v4934
    %4937 = vadd.xlane.f32.xlu0 %v4935
    %v4938 = vpop.xlane.xlu0 %4937
    %4939 = vadd.xlane.f32.xlu0 %v4936
    %v4940 = vpop.xlane.xlu0 %4939
    %v4941 = vmul.f32 %v4938, %v1871
    %v4942 = vmul.f32 %v4940, %v1871
    %v4943 = vadd.f32 %v4941, 1e-05
    %v4944 = vadd.f32 %v4942, 1e-05
    %v4945 = vrsqrt.pop %v4943
    %v4946 = vrsqrt.pop %v4944
    %v4947 = vmul.f32 %v4933, %v4945
    %v4948 = vmul.f32 %v4934, %v4946
    %v4950 = vlaneseq
    %v4951 = vshrl.u32 %v4950, 7
    %v4952 = vsub.s32 0, %v4951
    %v4953 = vrot.slane %v4925, %v4952
    %v4955 = vmul.f32 %v4947, %v4953
    %v4956 = vmul.f32 %v4948, %v4953
    %v4958 = vlaneseq
    %v4959 = vshrl.u32 %v4958, 7
    %v4960 = vsub.s32 0, %v4959
    %v4961 = vrot.slane %v4926, %v4960
    %v4963 = vadd.f32 %v4955, %v4961
    %v4964 = vadd.f32 %v4956, %v4961
    %v4965 = vld [vmem:[%s25] sm:$0x3]
    %v4966 = vld [vmem:[%s26] sm:$0x3]
    %v4967 = vadd.f32 %v4963, %v4964
    %4968 = vadd.xlane.f32.xlu0 %v4967
    %v4969 = vpop.xlane.xlu0 %4968
    %v4970 = vrcp.pop 256.0
    %v4971 = vmul.f32 %v4969, %v4970
    %v4972 = vsub.f32 %v4963, %v4971
    %v4973 = vsub.f32 %v4964, %v4971
    %v4974 = vmul.f32 %v4972, %v4972
    %v4975 = vmul.f32 %v4973, %v4973
    %v4976 = vadd.f32 %v4974, %v4975
    %4977 = vadd.xlane.f32.xlu0 %v4976
    %v4978 = vpop.xlane.xlu0 %4977
    %v4979 = vmul.f32 %v4978, %v4970
    %v4980 = vadd.f32 %v4979, 1e-05
    %v4981 = vrsqrt.pop %v4980
    %v4982 = vmul.f32 %v4972, %v4981
    %v4983 = vmul.f32 %v4973, %v4981
    %v4985 = vlaneseq
    %v4986 = vshrl.u32 %v4985, 7
    %v4987 = vsub.s32 0, %v4986
    %v4988 = vrot.slane %v4965, %v4987
    %v4989 = vlaneseq
    %v4990 = vshrl.u32 %v4989, 7
    %v4991 = vsub.s32 1, %v4990
    %v4992 = vrot.slane %v4965, %v4991
    %v4995 = vmul.f32 %v4982, %v4988
    %v4996 = vmul.f32 %v4983, %v4992
    %v4998 = vlaneseq
    %v4999 = vshrl.u32 %v4998, 7
    %v5000 = vsub.s32 0, %v4999
    %v5001 = vrot.slane %v4966, %v5000
    %v5002 = vlaneseq
    %v5003 = vshrl.u32 %v5002, 7
    %v5004 = vsub.s32 1, %v5003
    %v5005 = vrot.slane %v4966, %v5004
    %v5008 = vadd.f32 %v4995, %v5001
    %v5009 = vadd.f32 %v4996, %v5005
    %5010 = vst [vmem:[#allocation20] sm:$0xff] %v5008
    %5011 = vst [vmem:[#allocation20 + $0x8] sm:$0xff] %v5009
    %5013 = vrot.lane.b32.xlu0 %v4222, 64
    %v5014 = vpop.permute.xlu0 %5013
    %vm5016 = vcmask 523264
    %v5017 = vsel %vm5016, %v1862, %v5014
    %5018 = vst [vmem:[#allocation21] sm:$0xff] %v5017
    // Predicated region
    $region154: #{tpu_custom_call.1} parent=1 // pred_check
      _
    $region155: #{tpu_custom_call.1} parent=1 // pred_check_branch
      %5020 = sbr.rel (0) target = $region157
    $region156: #{tpu_custom_call.1} parent=1 // pred_region
      %s5022 = ssub.s32 256, 256
      %5023 = vsyncadd [#allocation4], %s5022
      %s5025 = sshll.u32 [#allocation20], 4
      %s5026 = int_to_ptr.vmem [resolvable:$true] %s5025
      %5028 = dma.vmem_to_hbm [thread:$0]  %s5026, 256, %s27, [#allocation4]
    $region157: #{tpu_custom_call.1} parent=1 // pred_fallthru
      _
    // Predicated region
    $region158: #{tpu_custom_call.1} parent=1 // pred_check
      _
    $region159: #{tpu_custom_call.1} parent=1 // pred_check_branch
      %5030 = sbr.rel (0) target = $region161
    $region160: #{tpu_custom_call.1} parent=1 // pred_region
      %s5032 = ssub.s32 128, 128
      %5033 = vsyncadd [#allocation22], %s5032
      %s5035 = sshll.u32 [#allocation21], 4
      %s5036 = int_to_ptr.vmem [resolvable:$true] %s5035
      %5038 = dma.vmem_to_hbm [thread:$0]  %s5036, 128, %s28, [#allocation22]
    $region161: #{tpu_custom_call.1} parent=1 // pred_fallthru
      _
    // Predicated region
    $region162: #{tpu_custom_call.1} parent=1 // pred_check
      _
    $region163: #{tpu_custom_call.1} parent=1 // pred_check_branch
      %5040 = sbr.rel (0) target = $region165
    $region164: #{tpu_custom_call.1} parent=1 // pred_region
      %5041 = dma.done [#allocation4], 256
    $region165: #{tpu_custom_call.1} parent=1 // pred_fallthru
      _
    // Predicated region
    $region166: #{tpu_custom_call.1} parent=1 // pred_check
      _
    $region167: #{tpu_custom_call.1} parent=1 // pred_check_branch
      %5043 = sbr.rel (0) target = $region169
    $region168: #{tpu_custom_call.1} parent=1 // pred_region
      %5044 = dma.done [#allocation22], 128
    $region169: #{tpu_custom_call.1} parent=1 // pred_fallthru
      _
    %5045 = vsyncpa [#allocation3], 1
    %5046 = vsyncpa [#allocation6], 1
    %5047 = vsyncpa [#allocation9], 1
    %5048 = vsyncpa [#allocation12], 1
    %5049 = vsyncpa [#allocation15], 1
    %5050 = vsyncpa [#allocation18], 1
    %5051 = vsyncpa [#allocation4], 1
    %5052 = vsyncpa [#allocation22], 1

</llo_original>
